<compile_context>
chip_gen: v6e
topology: v6e:2x2x1
jax: 0.10.0
libtpu: 0.0.40
codegen_flags: <defaults>
</compile_context>

<pallas_src>
import functools

import jax
import jax.numpy as jnp
from jax import lax
from jax.experimental import pallas as pl
from jax.experimental.pallas import tpu as pltpu

_EPS = 1e-5      # nn.LayerNorm default
_CHUNK = 8       # recurrence chunk = one sublane tile


@functools.lru_cache(maxsize=None)
def _compiler_params():
    # Per-generation scoped-VMEM budget: generous on 128 MiB parts (v5e/v6e),
    # conservative on v7x (64 MiB physical).
    try:
        cap = int(pltpu.get_tpu_info().vmem_capacity_bytes)
    except Exception:
        cap = 64 * 1024 * 1024
    vmem_limit = int(min(cap * 3 // 4, 100 * 1024 * 1024))
    return pltpu.CompilerParams(
        dimension_semantics=("parallel",),   # batch axis is independent
        vmem_limit_bytes=vmem_limit,
    )


# ----------------------------------------------------------------------------
# Kernel 1: bidirectional Mamba block + residual + norm1 (per-batch grid step)
# ----------------------------------------------------------------------------
def _mamba_bidir_norm1_kernel(x_ref, w_ing_ref, b_ing_ref, w_o_ref, b_o_ref,
                              a_f_ref, a_b_ref, g1_ref, be1_ref,
                              o_ref, oglb_ref,
                              uproj_scr, zcat_scr):
    _, L, D = x_ref.shape
    n_chunks = L // _CHUNK

    x = x_ref[0]                                       # (L, D) f32
    # One fused (L, D) @ (D, 4D) matmul: columns = [u_f | g_f | u_b | g_b].
    uproj_scr[...] = (jnp.dot(x.astype(jnp.bfloat16), w_ing_ref[...],
                              preferred_element_type=jnp.float32)
                      + b_ing_ref[...])

    a_f = a_f_ref[...]                                 # (1, D) decay
    a_b = a_b_ref[...]

    def chunk_body(c, carry):
        h_f, h_b = carry
        cf = pl.multiple_of(c * _CHUNK, _CHUNK)                     # fwd chunk
        cb = pl.multiple_of((n_chunks - 1 - c) * _CHUNK, _CHUNK)    # bwd chunk
        blk_f = uproj_scr[pl.ds(cf, _CHUNK), :]        # (CHUNK, 4D)
        blk_b = uproj_scr[pl.ds(cb, _CHUNK), :]
        u_f = blk_f[:, 0 * D:1 * D]
        g_f = blk_f[:, 1 * D:2 * D]
        u_b = blk_b[:, 2 * D:3 * D]
        g_b = blk_b[:, 3 * D:4 * D]
        g_f = g_f * jax.nn.sigmoid(g_f)                # SiLU, f32 (EUP exp)
        g_b = g_b * jax.nn.sigmoid(g_b)

        rows_f, rows_b = [], []
        for t in range(_CHUNK):                        # unrolled; 2 indep chains
            h_f = a_f * h_f + u_f[t:t + 1, :]
            rows_f.append(h_f * g_f[t:t + 1, :])
            tb = _CHUNK - 1 - t                        # backward dir = reverse order
            h_b = a_b * h_b + u_b[tb:tb + 1, :]
            rows_b.append(h_b * g_b[tb:tb + 1, :])

        # One contiguous, sublane-aligned (CHUNK, D) store per direction.
        zcat_scr[pl.ds(cf, _CHUNK), pl.ds(0, D)] = jnp.concatenate(rows_f, axis=0)
        zcat_scr[pl.ds(cb, _CHUNK), pl.ds(D, D)] = jnp.concatenate(rows_b[::-1],
                                                                   axis=0)
        return h_f, h_b

    h0 = jnp.zeros((1, D), jnp.float32)
    lax.fori_loop(0, n_chunks, chunk_body, (h0, h0))

    # Fused output projection: (L, 2D) @ (2D, D)  with zf‖zb on the K axis.
    new_x = (jnp.dot(zcat_scr[...].astype(jnp.bfloat16), w_o_ref[...],
                     preferred_element_type=jnp.float32) + b_o_ref[...])

    # x = norm1(x + new_x)   (LayerNorm stats in f32)
    z = x + new_x
    mu = jnp.mean(z, axis=-1, keepdims=True)
    var = jnp.mean((z - mu) ** 2, axis=-1, keepdims=True)
    y = (z - mu) * lax.rsqrt(var + _EPS) * g1_ref[...] + be1_ref[...]

    o_ref[...] = y.reshape(1, L, D)
    oglb_ref[...] = y[L - 1:L, :].reshape(1, 1, D)     # global token


def mamba_bidir_norm1(x, p):
    B, L, D = x.shape
    assert L % _CHUNK == 0, "sequence length must be a multiple of 8"
    const = lambda b: (0, 0)
    return pl.pallas_call(
        _mamba_bidir_norm1_kernel,
        grid=(B,),
        in_specs=[
            pl.BlockSpec((1, L, D), lambda b: (b, 0, 0)),   # x
            pl.BlockSpec((D, 4 * D), const),                # fused in/gate W
            pl.BlockSpec((1, 4 * D), const),                # fused in/gate b
            pl.BlockSpec((2 * D, D), const),                # fused out W
            pl.BlockSpec((1, D), const),                    # fused out b
            pl.BlockSpec((1, D), const),                    # decay fwd
            pl.BlockSpec((1, D), const),                    # decay bwd
            pl.BlockSpec((1, D), const),                    # norm1 gamma
            pl.BlockSpec((1, D), const),                    # norm1 beta
        ],
        out_specs=[pl.BlockSpec((1, L, D), lambda b: (b, 0, 0)),
                   pl.BlockSpec((1, 1, D), lambda b: (b, 0, 0))],
        out_shape=[jax.ShapeDtypeStruct((B, L, D), jnp.float32),
                   jax.ShapeDtypeStruct((B, 1, D), jnp.float32)],
        scratch_shapes=[pltpu.VMEM((L, 4 * D), jnp.float32),   # fused proj
                        pltpu.VMEM((L, 2 * D), jnp.float32)],  # zf ‖ zb
        compiler_params=_compiler_params(),
    )(x, p["w_ing"], p["b_ing"], p["w_o"], p["b_o"],
      p["a_f"], p["a_b"], p["g1"], p["be1"])


# ----------------------------------------------------------------------------
# Kernel 2: global-token cross-attention + norm2, in-kernel concat, FFN + norm3
# ----------------------------------------------------------------------------
def _attn_ffn_norm23_kernel(x_ref, xg_ref, cross_ref,
                            wq_ref, bq_ref, wkv_ref, bkv_ref, wo_ref, bo_ref,
                            g2_ref, be2_ref,
                            w1_ref, bb1_ref, w2_ref, bb2_ref, g3_ref, be3_ref,
                            o_ref, xcat_scr):
    _, L, D = x_ref.shape
    _, S, _ = cross_ref.shape

    # ---- cross-attention prologue on this batch's single global token ----
    xg = xg_ref[...].reshape(1, D)                         # (1, D) f32
    q = (jnp.dot(xg.astype(jnp.bfloat16), wq_ref[...],
                 preferred_element_type=jnp.float32) + bq_ref[...])     # (1, D)
    kvp = (jnp.dot(cross_ref[0].astype(jnp.bfloat16), wkv_ref[...],
                   preferred_element_type=jnp.float32) + bkv_ref[...])  # (S, 2D)
    k = kvp[:, :D]
    v = kvp[:, D:]

    scale = 1.0 / jnp.sqrt(jnp.float32(D))
    s = lax.dot_general(q.astype(jnp.bfloat16), k.astype(jnp.bfloat16),
                        (((1,), (1,)), ((), ())),
                        preferred_element_type=jnp.float32) * scale     # (1, S)
    s = s - jnp.max(s, axis=-1, keepdims=True)             # softmax in f32
    pexp = jnp.exp(s)
    pexp = pexp / jnp.sum(pexp, axis=-1, keepdims=True)
    ctx = jnp.dot(pexp.astype(jnp.bfloat16), v.astype(jnp.bfloat16),
                  preferred_element_type=jnp.float32)                   # (1, D)
    attn = (jnp.dot(ctx.astype(jnp.bfloat16), wo_ref[...],
                    preferred_element_type=jnp.float32) + bo_ref[...])

    # x_glb = norm2(x_glb_ori + attn)   (dropout == identity in eval)
    z2 = xg + attn
    mu2 = jnp.mean(z2, axis=-1, keepdims=True)
    var2 = jnp.mean((z2 - mu2) ** 2, axis=-1, keepdims=True)
    x_glb = (z2 - mu2) * lax.rsqrt(var2 + _EPS) * g2_ref[...] + be2_ref[...]

    # ---- torch.cat([x[:, :-1], x_glb]) == single O(D) row store ----
    xcat_scr[...] = x_ref[0]
    xcat_scr[pl.ds(L - 1, 1), :] = x_glb
    x_cat = xcat_scr[...]                                  # (L, D) f32

    # ---- pointwise FFN + residual + norm3 ----
    h = (jnp.dot(x_cat.astype(jnp.bfloat16), w1_ref[...],
                 preferred_element_type=jnp.float32) + bb1_ref[...])
    h = jnp.maximum(h, 0.0)                                # relu activation
    y = (jnp.dot(h.astype(jnp.bfloat16), w2_ref[...],
                 preferred_element_type=jnp.float32) + bb2_ref[...])

    z3 = x_cat + y
    mu3 = jnp.mean(z3, axis=-1, keepdims=True)
    var3 = jnp.mean((z3 - mu3) ** 2, axis=-1, keepdims=True)
    out = (z3 - mu3) * lax.rsqrt(var3 + _EPS) * g3_ref[...] + be3_ref[...]
    o_ref[...] = out.reshape(1, L, D)


def attn_ffn_norm23(x1, x_glb_ori, cross, p):
    B, L, D = x1.shape
    _, S, _ = cross.shape
    F = p["w1"].shape[1]
    const = lambda b: (0, 0)
    return pl.pallas_call(
        _attn_ffn_norm23_kernel,
        grid=(B,),
        in_specs=[
            pl.BlockSpec((1, L, D), lambda b: (b, 0, 0)),   # x1 (post-norm1)
            pl.BlockSpec((1, 1, D), lambda b: (b, 0, 0)),   # global token
            pl.BlockSpec((1, S, D), lambda b: (b, 0, 0)),   # cross
            pl.BlockSpec((D, D), const),      # wq
            pl.BlockSpec((1, D), const),      # bq
            pl.BlockSpec((D, 2 * D), const),  # fused wk‖wv
            pl.BlockSpec((1, 2 * D), const),  # fused bk‖bv
            pl.BlockSpec((D, D), const),      # wo
            pl.BlockSpec((1, D), const),      # bo
            pl.BlockSpec((1, D), const),      # norm2 gamma
            pl.BlockSpec((1, D), const),      # norm2 beta
            pl.BlockSpec((D, F), const),      # conv1 W
            pl.BlockSpec((1, F), const),      # conv1 b
            pl.BlockSpec((F, D), const),      # conv2 W
            pl.BlockSpec((1, D), const),      # conv2 b
            pl.BlockSpec((1, D), const),      # norm3 gamma
            pl.BlockSpec((1, D), const),      # norm3 beta
        ],
        out_specs=pl.BlockSpec((1, L, D), lambda b: (b, 0, 0)),
        out_shape=jax.ShapeDtypeStruct((B, L, D), jnp.float32),
        scratch_shapes=[pltpu.VMEM((L, D), jnp.float32)],   # x_cat
        compiler_params=_compiler_params(),
    )(x1, x_glb_ori, cross,
      p["wq"], p["bq"], p["wkv"], p["bkv"], p["wo"], p["bo"],
      p["g2"], p["be2"],
      p["w1"], p["bb1"], p["w2"], p["bb2"], p["g3"], p["be3"])


# ----------------------------------------------------------------------------
# Forward pass glue (no flips, no HBM concatenates, 2 pallas_calls total)
# ----------------------------------------------------------------------------
def encoder_layer_forward(params, x, cross):
    # x = norm1(x + Mambablock(x) + flip(Mambablocked(flip(x))))  -- fused.
    x1, x_glb_ori = mamba_bidir_norm1(x, params)
    # x_glb = norm2(x_glb_ori + cross_attention(x_glb_ori, cross, cross));
    # x = cat([x1[:, :-1], x_glb]);  return norm3(x + MLP(x))     -- fused.
    return attn_ffn_norm23(x1, x_glb_ori, cross, params)


# ----------------------------------------------------------------------------
# Deterministic parameter init (matmul weights in bf16, fused at init)
# ----------------------------------------------------------------------------
def init_params(key, d_model, d_ff):
    ks = jax.random.split(key, 12)
    s = 1.0 / jnp.sqrt(jnp.float32(d_model))

    def w(k, shape, scale=s):
        return (scale * jax.random.normal(k, shape, jnp.float32)).astype(jnp.bfloat16)

    # Per-direction Mamba stand-in weights.
    w_in_f, w_g_f, w_out_f = (w(ks[0], (d_model, d_model)),
                              w(ks[1], (d_model, d_model)),
                              w(ks[2], (d_model, d_model)))
    w_in_b, w_g_b, w_out_b = (w(ks[3], (d_model, d_model)),
                              w(ks[4], (d_model, d_model)),
                              w(ks[5], (d_model, d_model)))

    return dict(
        # Fused input/gate projection: [W_in_f | W_g_f | W_in_b | W_g_b].
        w_ing=jnp.concatenate([w_in_f, w_g_f, w_in_b, w_g_b], axis=1),
        b_ing=jnp.zeros((1, 4 * d_model), jnp.float32),
        # Fused output projection: [W_out_f ; W_out_b]  (zf ‖ zb on K axis).
        w_o=jnp.concatenate([w_out_f, w_out_b], axis=0),
        b_o=jnp.zeros((1, d_model), jnp.float32),
        a_f=jnp.linspace(0.5, 0.95, d_model, dtype=jnp.float32)[None, :],
        a_b=jnp.linspace(0.55, 0.9, d_model, dtype=jnp.float32)[None, :],
        # Cross-attention: q, fused k‖v, output.
        wq=w(ks[6], (d_model, d_model)), bq=jnp.zeros((1, d_model), jnp.float32),
        wkv=jnp.concatenate([w(ks[7], (d_model, d_model)),
                             w(ks[8], (d_model, d_model))], axis=1),
        bkv=jnp.zeros((1, 2 * d_model), jnp.float32),
        wo=w(ks[9], (d_model, d_model)), bo=jnp.zeros((1, d_model), jnp.float32),
        # conv1: (d_ff, d_model, 1) -> W1 (d_model, d_ff); conv2 analogously.
        w1=w(ks[10], (d_model, d_ff)), bb1=jnp.zeros((1, d_ff), jnp.float32),
        w2=w(ks[11], (d_ff, d_model), scale=1.0 / jnp.sqrt(jnp.float32(d_ff))),
        bb2=jnp.zeros((1, d_model), jnp.float32),
        # LayerNorms.
        g1=jnp.ones((1, d_model), jnp.float32), be1=jnp.zeros((1, d_model), jnp.float32),
        g2=jnp.ones((1, d_model), jnp.float32), be2=jnp.zeros((1, d_model), jnp.float32),
        g3=jnp.ones((1, d_model), jnp.float32), be3=jnp.zeros((1, d_model), jnp.float32),
    )


# ----------------------------------------------------------------------------
if __name__ == "__main__":
    # Small but lane-dense shapes: D a multiple of 128 keeps every output /
    # matmul tile unmasked on the 128-lane vregs and MXU columns.
    B, L_x, L_cross, D = 2, 8, 8, 128
    d_ff = 4 * D

    key = jax.random.PRNGKey(0)
    kx, kc, kp = jax.random.split(key, 3)
    x = jax.random.normal(kx, (B, L_x, D), jnp.float32)
    cross = jax.random.normal(kc, (B, L_cross, D), jnp.float32)
    params = init_params(kp, D, d_ff)

    fwd = jax.jit(functools.partial(encoder_layer_forward, params))
    out = fwd(x, cross)
    jax.block_until_ready(out)

    assert out.shape == (B, L_x, D), out.shape
    assert bool(jnp.all(jnp.isfinite(out)))
    print("KERNEL_OK")
</pallas_src>

<mosaic_0001>
module attributes {stable_mosaic.version = 11 : i64} {
  func.func @_mamba_bidir_norm1_kernel(%arg0: i32, %arg1: memref<1x8x128xf32, #tpu.memory_space<vmem>>, %arg2: memref<128x512xbf16, #tpu.memory_space<vmem>>, %arg3: memref<1x512xf32, #tpu.memory_space<vmem>>, %arg4: memref<256x128xbf16, #tpu.memory_space<vmem>>, %arg5: memref<1x128xf32, #tpu.memory_space<vmem>>, %arg6: memref<1x128xf32, #tpu.memory_space<vmem>>, %arg7: memref<1x128xf32, #tpu.memory_space<vmem>>, %arg8: memref<1x128xf32, #tpu.memory_space<vmem>>, %arg9: memref<1x128xf32, #tpu.memory_space<vmem>>, %arg10: memref<1x8x128xf32, #tpu.memory_space<vmem>>, %arg11: memref<1x1x128xf32, #tpu.memory_space<vmem>>, %arg12: memref<8x512xf32, #tpu.memory_space<vmem>>, %arg13: memref<8x256xf32, #tpu.memory_space<vmem>>) attributes {dimension_semantics = [#tpu.dimension_semantics<parallel>], iteration_bounds = array<i64: 2>, scalar_prefetch = 0 : i64, scratch_operands = 2 : i64, tpu.core_type = #tpu.core_type<tc>, window_params = [{transform_indices = @transform_0, window_bounds = array<i64: 1, 8, 128>}, {pipeline_mode = #tpu.pipeline_mode<synchronous>, transform_indices = @transform_1, window_bounds = array<i64: 128, 512>}, {pipeline_mode = #tpu.pipeline_mode<synchronous>, transform_indices = @transform_2, window_bounds = array<i64: 1, 512>}, {pipeline_mode = #tpu.pipeline_mode<synchronous>, transform_indices = @transform_3, window_bounds = array<i64: 256, 128>}, {pipeline_mode = #tpu.pipeline_mode<synchronous>, transform_indices = @transform_4, window_bounds = array<i64: 1, 128>}, {pipeline_mode = #tpu.pipeline_mode<synchronous>, transform_indices = @transform_5, window_bounds = array<i64: 1, 128>}, {pipeline_mode = #tpu.pipeline_mode<synchronous>, transform_indices = @transform_6, window_bounds = array<i64: 1, 128>}, {pipeline_mode = #tpu.pipeline_mode<synchronous>, transform_indices = @transform_7, window_bounds = array<i64: 1, 128>}, {pipeline_mode = #tpu.pipeline_mode<synchronous>, transform_indices = @transform_8, window_bounds = array<i64: 1, 128>}, {transform_indices = @transform_9, window_bounds = array<i64: 1, 8, 128>}, {transform_indices = @transform_10, window_bounds = array<i64: 1, 1, 128>}]} {
    %c0 = arith.constant 0 : index
    %c0_0 = arith.constant 0 : index
    %c0_1 = arith.constant 0 : index
    %0 = vector.load %arg1[%c0, %c0_0, %c0_1] : memref<1x8x128xf32, #tpu.memory_space<vmem>>, vector<1x8x128xf32>
    %1 = vector.shape_cast %0 : vector<1x8x128xf32> to vector<8x128xf32>
    %2 = arith.truncf %1 : vector<8x128xf32> to vector<8x128xbf16>
    %c0_2 = arith.constant 0 : index
    %c0_3 = arith.constant 0 : index
    %3 = vector.load %arg2[%c0_2, %c0_3] : memref<128x512xbf16, #tpu.memory_space<vmem>>, vector<128x512xbf16>
    %cst = arith.constant dense<0.000000e+00> : vector<8x512xf32>
    %4 = tpu.matmul %2, %3, %cst {dimension_numbers = #tpu.dot_dimension_numbers<[1], [0], [0], [1], [0, 0, 1, 1], [], []>} : vector<8x128xbf16>, vector<128x512xbf16>, vector<8x512xf32> -> vector<8x512xf32>
    %c0_4 = arith.constant 0 : index
    %c0_5 = arith.constant 0 : index
    %5 = vector.load %arg3[%c0_4, %c0_5] : memref<1x512xf32, #tpu.memory_space<vmem>>, vector<1x512xf32>
    %6 = vector.broadcast %5 : vector<1x512xf32> to vector<8x512xf32>
    %7 = arith.addf %4, %6 : vector<8x512xf32>
    %c0_6 = arith.constant 0 : index
    %c0_7 = arith.constant 0 : index
    %8 = vector.load %arg12[%c0_6, %c0_7] : memref<8x512xf32, #tpu.memory_space<vmem>>, vector<8x512xf32>
    tpu.vector_store %arg12[%c0_6, %c0_7], %7 {strides = array<i32>} : memref<8x512xf32, #tpu.memory_space<vmem>>, vector<8x512xf32>,
    %c0_8 = arith.constant 0 : index
    %c0_9 = arith.constant 0 : index
    %9 = vector.load %arg6[%c0_8, %c0_9] : memref<1x128xf32, #tpu.memory_space<vmem>>, vector<1x128xf32>
    %c0_10 = arith.constant 0 : index
    %c0_11 = arith.constant 0 : index
    %10 = vector.load %arg7[%c0_10, %c0_11] : memref<1x128xf32, #tpu.memory_space<vmem>>, vector<1x128xf32>
    %cst_12 = arith.constant 0.000000e+00 : f32
    %11 = vector.broadcast %cst_12 : f32 to vector<1x128xf32>
    %c0_i32 = arith.constant 0 : i32
    %c8_i32 = arith.constant 8 : i32
    %12 = arith.muli %c0_i32, %c8_i32 : i32
    %13 = tpu.assume_multiple %12, 8 : i32
    %c0_i32_13 = arith.constant 0 : i32
    %14 = arith.subi %c0_i32_13, %c0_i32 : i32
    %c8_i32_14 = arith.constant 8 : i32
    %15 = arith.muli %14, %c8_i32_14 : i32
    %16 = tpu.assume_multiple %15, 8 : i32
    %17 = arith.index_cast %13 : i32 to index
    %c0_15 = arith.constant 0 : index
    %18 = vector.load %arg12[%17, %c0_15] : memref<8x512xf32, #tpu.memory_space<vmem>>, vector<8x512xf32>
    %19 = arith.index_cast %16 : i32 to index
    %c0_16 = arith.constant 0 : index
    %20 = vector.load %arg12[%19, %c0_16] : memref<8x512xf32, #tpu.memory_space<vmem>>, vector<8x512xf32>
    %21 = vector.extract_strided_slice %18 {offsets = [0, 0], sizes = [8, 128], strides = [1, 1]} : vector<8x512xf32> to vector<8x128xf32>
    %22 = vector.extract_strided_slice %18 {offsets = [0, 128], sizes = [8, 128], strides = [1, 1]} : vector<8x512xf32> to vector<8x128xf32>
    %23 = vector.extract_strided_slice %20 {offsets = [0, 256], sizes = [8, 128], strides = [1, 1]} : vector<8x512xf32> to vector<8x128xf32>
    %24 = vector.extract_strided_slice %20 {offsets = [0, 384], sizes = [8, 128], strides = [1, 1]} : vector<8x512xf32> to vector<8x128xf32>
    %25 = arith.negf %22 : vector<8x128xf32>
    %26 = math.exp %25 : vector<8x128xf32>
    %cst_17 = arith.constant 1.000000e+00 : f32
    %27 = vector.broadcast %cst_17 : f32 to vector<8x128xf32>
    %28 = arith.addf %27, %26 : vector<8x128xf32>
    %29 = arith.divf %27, %28 : vector<8x128xf32>
    %30 = arith.mulf %22, %29 : vector<8x128xf32>
    %31 = arith.negf %24 : vector<8x128xf32>
    %32 = math.exp %31 : vector<8x128xf32>
    %cst_18 = arith.constant 1.000000e+00 : f32
    %33 = vector.broadcast %cst_18 : f32 to vector<8x128xf32>
    %34 = arith.addf %33, %32 : vector<8x128xf32>
    %35 = arith.divf %33, %34 : vector<8x128xf32>
    %36 = arith.mulf %24, %35 : vector<8x128xf32>
    %37 = arith.mulf %9, %11 : vector<1x128xf32>
    %38 = vector.extract_strided_slice %21 {offsets = [0, 0], sizes = [1, 128], strides = [1, 1]} : vector<8x128xf32> to vector<1x128xf32>
    %39 = arith.addf %37, %38 : vector<1x128xf32>
    %40 = vector.extract_strided_slice %30 {offsets = [0, 0], sizes = [1, 128], strides = [1, 1]} : vector<8x128xf32> to vector<1x128xf32>
    %41 = arith.mulf %39, %40 : vector<1x128xf32>
    %42 = arith.mulf %10, %11 : vector<1x128xf32>
    %43 = vector.extract_strided_slice %23 {offsets = [7, 0], sizes = [1, 128], strides = [1, 1]} : vector<8x128xf32> to vector<1x128xf32>
    %44 = arith.addf %42, %43 : vector<1x128xf32>
    %45 = vector.extract_strided_slice %36 {offsets = [7, 0], sizes = [1, 128], strides = [1, 1]} : vector<8x128xf32> to vector<1x128xf32>
    %46 = arith.mulf %44, %45 : vector<1x128xf32>
    %47 = arith.mulf %9, %39 : vector<1x128xf32>
    %48 = vector.extract_strided_slice %21 {offsets = [1, 0], sizes = [1, 128], strides = [1, 1]} : vector<8x128xf32> to vector<1x128xf32>
    %49 = arith.addf %47, %48 : vector<1x128xf32>
    %50 = vector.extract_strided_slice %30 {offsets = [1, 0], sizes = [1, 128], strides = [1, 1]} : vector<8x128xf32> to vector<1x128xf32>
    %51 = arith.mulf %49, %50 : vector<1x128xf32>
    %52 = arith.mulf %10, %44 : vector<1x128xf32>
    %53 = vector.extract_strided_slice %23 {offsets = [6, 0], sizes = [1, 128], strides = [1, 1]} : vector<8x128xf32> to vector<1x128xf32>
    %54 = arith.addf %52, %53 : vector<1x128xf32>
    %55 = vector.extract_strided_slice %36 {offsets = [6, 0], sizes = [1, 128], strides = [1, 1]} : vector<8x128xf32> to vector<1x128xf32>
    %56 = arith.mulf %54, %55 : vector<1x128xf32>
    %57 = arith.mulf %9, %49 : vector<1x128xf32>
    %58 = vector.extract_strided_slice %21 {offsets = [2, 0], sizes = [1, 128], strides = [1, 1]} : vector<8x128xf32> to vector<1x128xf32>
    %59 = arith.addf %57, %58 : vector<1x128xf32>
    %60 = vector.extract_strided_slice %30 {offsets = [2, 0], sizes = [1, 128], strides = [1, 1]} : vector<8x128xf32> to vector<1x128xf32>
    %61 = arith.mulf %59, %60 : vector<1x128xf32>
    %62 = arith.mulf %10, %54 : vector<1x128xf32>
    %63 = vector.extract_strided_slice %23 {offsets = [5, 0], sizes = [1, 128], strides = [1, 1]} : vector<8x128xf32> to vector<1x128xf32>
    %64 = arith.addf %62, %63 : vector<1x128xf32>
    %65 = vector.extract_strided_slice %36 {offsets = [5, 0], sizes = [1, 128], strides = [1, 1]} : vector<8x128xf32> to vector<1x128xf32>
    %66 = arith.mulf %64, %65 : vector<1x128xf32>
    %67 = arith.mulf %9, %59 : vector<1x128xf32>
    %68 = vector.extract_strided_slice %21 {offsets = [3, 0], sizes = [1, 128], strides = [1, 1]} : vector<8x128xf32> to vector<1x128xf32>
    %69 = arith.addf %67, %68 : vector<1x128xf32>
    %70 = vector.extract_strided_slice %30 {offsets = [3, 0], sizes = [1, 128], strides = [1, 1]} : vector<8x128xf32> to vector<1x128xf32>
    %71 = arith.mulf %69, %70 : vector<1x128xf32>
    %72 = arith.mulf %10, %64 : vector<1x128xf32>
    %73 = vector.extract_strided_slice %23 {offsets = [4, 0], sizes = [1, 128], strides = [1, 1]} : vector<8x128xf32> to vector<1x128xf32>
    %74 = arith.addf %72, %73 : vector<1x128xf32>
    %75 = vector.extract_strided_slice %36 {offsets = [4, 0], sizes = [1, 128], strides = [1, 1]} : vector<8x128xf32> to vector<1x128xf32>
    %76 = arith.mulf %74, %75 : vector<1x128xf32>
    %77 = arith.mulf %9, %69 : vector<1x128xf32>
    %78 = vector.extract_strided_slice %21 {offsets = [4, 0], sizes = [1, 128], strides = [1, 1]} : vector<8x128xf32> to vector<1x128xf32>
    %79 = arith.addf %77, %78 : vector<1x128xf32>
    %80 = vector.extract_strided_slice %30 {offsets = [4, 0], sizes = [1, 128], strides = [1, 1]} : vector<8x128xf32> to vector<1x128xf32>
    %81 = arith.mulf %79, %80 : vector<1x128xf32>
    %82 = arith.mulf %10, %74 : vector<1x128xf32>
    %83 = vector.extract_strided_slice %23 {offsets = [3, 0], sizes = [1, 128], strides = [1, 1]} : vector<8x128xf32> to vector<1x128xf32>
    %84 = arith.addf %82, %83 : vector<1x128xf32>
    %85 = vector.extract_strided_slice %36 {offsets = [3, 0], sizes = [1, 128], strides = [1, 1]} : vector<8x128xf32> to vector<1x128xf32>
    %86 = arith.mulf %84, %85 : vector<1x128xf32>
    %87 = arith.mulf %9, %79 : vector<1x128xf32>
    %88 = vector.extract_strided_slice %21 {offsets = [5, 0], sizes = [1, 128], strides = [1, 1]} : vector<8x128xf32> to vector<1x128xf32>
    %89 = arith.addf %87, %88 : vector<1x128xf32>
    %90 = vector.extract_strided_slice %30 {offsets = [5, 0], sizes = [1, 128], strides = [1, 1]} : vector<8x128xf32> to vector<1x128xf32>
    %91 = arith.mulf %89, %90 : vector<1x128xf32>
    %92 = arith.mulf %10, %84 : vector<1x128xf32>
    %93 = vector.extract_strided_slice %23 {offsets = [2, 0], sizes = [1, 128], strides = [1, 1]} : vector<8x128xf32> to vector<1x128xf32>
    %94 = arith.addf %92, %93 : vector<1x128xf32>
    %95 = vector.extract_strided_slice %36 {offsets = [2, 0], sizes = [1, 128], strides = [1, 1]} : vector<8x128xf32> to vector<1x128xf32>
    %96 = arith.mulf %94, %95 : vector<1x128xf32>
    %97 = arith.mulf %9, %89 : vector<1x128xf32>
    %98 = vector.extract_strided_slice %21 {offsets = [6, 0], sizes = [1, 128], strides = [1, 1]} : vector<8x128xf32> to vector<1x128xf32>
    %99 = arith.addf %97, %98 : vector<1x128xf32>
    %100 = vector.extract_strided_slice %30 {offsets = [6, 0], sizes = [1, 128], strides = [1, 1]} : vector<8x128xf32> to vector<1x128xf32>
    %101 = arith.mulf %99, %100 : vector<1x128xf32>
    %102 = arith.mulf %10, %94 : vector<1x128xf32>
    %103 = vector.extract_strided_slice %23 {offsets = [1, 0], sizes = [1, 128], strides = [1, 1]} : vector<8x128xf32> to vector<1x128xf32>
    %104 = arith.addf %102, %103 : vector<1x128xf32>
    %105 = vector.extract_strided_slice %36 {offsets = [1, 0], sizes = [1, 128], strides = [1, 1]} : vector<8x128xf32> to vector<1x128xf32>
    %106 = arith.mulf %104, %105 : vector<1x128xf32>
    %107 = arith.mulf %9, %99 : vector<1x128xf32>
    %108 = vector.extract_strided_slice %21 {offsets = [7, 0], sizes = [1, 128], strides = [1, 1]} : vector<8x128xf32> to vector<1x128xf32>
    %109 = arith.addf %107, %108 : vector<1x128xf32>
    %110 = vector.extract_strided_slice %30 {offsets = [7, 0], sizes = [1, 128], strides = [1, 1]} : vector<8x128xf32> to vector<1x128xf32>
    %111 = arith.mulf %109, %110 : vector<1x128xf32>
    %112 = arith.mulf %10, %104 : vector<1x128xf32>
    %113 = vector.extract_strided_slice %23 {offsets = [0, 0], sizes = [1, 128], strides = [1, 1]} : vector<8x128xf32> to vector<1x128xf32>
    %114 = arith.addf %112, %113 : vector<1x128xf32>
    %115 = vector.extract_strided_slice %36 {offsets = [0, 0], sizes = [1, 128], strides = [1, 1]} : vector<8x128xf32> to vector<1x128xf32>
    %116 = arith.mulf %114, %115 : vector<1x128xf32>
    %117 = tpu.concatenate %41, %51, %61, %71, %81, %91, %101, %111 in 0 : vector<1x128xf32>, vector<1x128xf32>, vector<1x128xf32>, vector<1x128xf32>, vector<1x128xf32>, vector<1x128xf32>, vector<1x128xf32>, vector<1x128xf32> -> vector<8x128xf32>
    %118 = arith.index_cast %13 : i32 to index
    %c0_19 = arith.constant 0 : index
    %119 = vector.load %arg13[%118, %c0_19] : memref<8x256xf32, #tpu.memory_space<vmem>>, vector<8x128xf32>
    tpu.vector_store %arg13[%118, %c0_19], %117 {strides = array<i32>} : memref<8x256xf32, #tpu.memory_space<vmem>>, vector<8x128xf32>,
    %120 = tpu.concatenate %116, %106, %96, %86, %76, %66, %56, %46 in 0 : vector<1x128xf32>, vector<1x128xf32>, vector<1x128xf32>, vector<1x128xf32>, vector<1x128xf32>, vector<1x128xf32>, vector<1x128xf32>, vector<1x128xf32> -> vector<8x128xf32>
    %121 = arith.index_cast %16 : i32 to index
    %c128 = arith.constant 128 : index
    %122 = vector.load %arg13[%121, %c128] : memref<8x256xf32, #tpu.memory_space<vmem>>, vector<8x128xf32>
    tpu.vector_store %arg13[%121, %c128], %120 {strides = array<i32>} : memref<8x256xf32, #tpu.memory_space<vmem>>, vector<8x128xf32>,
    %c1_i32 = arith.constant 1 : i32
    %c0_20 = arith.constant 0 : index
    %c0_21 = arith.constant 0 : index
    %123 = vector.load %arg13[%c0_20, %c0_21] : memref<8x256xf32, #tpu.memory_space<vmem>>, vector<8x256xf32>
    %124 = arith.truncf %123 : vector<8x256xf32> to vector<8x256xbf16>
    %c0_22 = arith.constant 0 : index
    %c0_23 = arith.constant 0 : index
    %125 = vector.load %arg4[%c0_22, %c0_23] : memref<256x128xbf16, #tpu.memory_space<vmem>>, vector<256x128xbf16>
    %cst_24 = arith.constant dense<0.000000e+00> : vector<8x128xf32>
    %126 = tpu.matmul %124, %125, %cst_24 {dimension_numbers = #tpu.dot_dimension_numbers<[1], [0], [0], [1], [0, 0, 1, 1], [], []>} : vector<8x256xbf16>, vector<256x128xbf16>, vector<8x128xf32> -> vector<8x128xf32>
    %c0_25 = arith.constant 0 : index
    %c0_26 = arith.constant 0 : index
    %127 = vector.load %arg5[%c0_25, %c0_26] : memref<1x128xf32, #tpu.memory_space<vmem>>, vector<1x128xf32>
    %128 = vector.broadcast %127 : vector<1x128xf32> to vector<8x128xf32>
    %129 = arith.addf %126, %128 : vector<8x128xf32>
    %130 = arith.addf %1, %129 : vector<8x128xf32>
    %cst_27 = arith.constant dense<0.000000e+00> : vector<8xf32>
    %131 = vector.multi_reduction <add>, %130, %cst_27 [1] : vector<8x128xf32> to vector<8xf32>
    %132 = vector.shape_cast %131 : vector<8xf32> to vector<8x1xf32>
    %cst_28 = arith.constant 1.280000e+02 : f32
    %133 = vector.broadcast %cst_28 : f32 to vector<8x1xf32>
    %134 = arith.divf %132, %133 : vector<8x1xf32>
    %135 = vector.broadcast %134 : vector<8x1xf32> to vector<8x128xf32>
    %136 = arith.subf %130, %135 : vector<8x128xf32>
    %137 = arith.mulf %136, %136 : vector<8x128xf32>
    %cst_29 = arith.constant dense<0.000000e+00> : vector<8xf32>
    %138 = vector.multi_reduction <add>, %137, %cst_29 [1] : vector<8x128xf32> to vector<8xf32>
    %139 = vector.shape_cast %138 : vector<8xf32> to vector<8x1xf32>
    %cst_30 = arith.constant 1.280000e+02 : f32
    %140 = vector.broadcast %cst_30 : f32 to vector<8x1xf32>
    %141 = arith.divf %139, %140 : vector<8x1xf32>
    %142 = vector.broadcast %134 : vector<8x1xf32> to vector<8x128xf32>
    %143 = arith.subf %130, %142 : vector<8x128xf32>
    %cst_31 = arith.constant 9.99999974E-6 : f32
    %144 = vector.broadcast %cst_31 : f32 to vector<8x1xf32>
    %145 = arith.addf %141, %144 : vector<8x1xf32>
    %146 = math.rsqrt %145 : vector<8x1xf32>
    %147 = vector.broadcast %146 : vector<8x1xf32> to vector<8x128xf32>
    %148 = arith.mulf %143, %147 : vector<8x128xf32>
    %c0_32 = arith.constant 0 : index
    %c0_33 = arith.constant 0 : index
    %149 = vector.load %arg8[%c0_32, %c0_33] : memref<1x128xf32, #tpu.memory_space<vmem>>, vector<1x128xf32>
    %150 = vector.broadcast %149 : vector<1x128xf32> to vector<8x128xf32>
    %151 = arith.mulf %148, %150 : vector<8x128xf32>
    %c0_34 = arith.constant 0 : index
    %c0_35 = arith.constant 0 : index
    %152 = vector.load %arg9[%c0_34, %c0_35] : memref<1x128xf32, #tpu.memory_space<vmem>>, vector<1x128xf32>
    %153 = vector.broadcast %152 : vector<1x128xf32> to vector<8x128xf32>
    %154 = arith.addf %151, %153 : vector<8x128xf32>
    %155 = vector.shape_cast %154 : vector<8x128xf32> to vector<1x8x128xf32>
    %c0_36 = arith.constant 0 : index
    %c0_37 = arith.constant 0 : index
    %c0_38 = arith.constant 0 : index
    %156 = vector.load %arg10[%c0_36, %c0_37, %c0_38] : memref<1x8x128xf32, #tpu.memory_space<vmem>>, vector<1x8x128xf32>
    tpu.vector_store %arg10[%c0_36, %c0_37, %c0_38], %155 {strides = array<i32>} : memref<1x8x128xf32, #tpu.memory_space<vmem>>, vector<1x8x128xf32>,
    %157 = vector.extract_strided_slice %154 {offsets = [7, 0], sizes = [1, 128], strides = [1, 1]} : vector<8x128xf32> to vector<1x128xf32>
    %158 = vector.shape_cast %157 : vector<1x128xf32> to vector<1x1x128xf32>
    %c0_39 = arith.constant 0 : index
    %c0_40 = arith.constant 0 : index
    %c0_41 = arith.constant 0 : index
    %159 = vector.load %arg11[%c0_39, %c0_40, %c0_41] : memref<1x1x128xf32, #tpu.memory_space<vmem>>, vector<1x1x128xf32>
    tpu.vector_store %arg11[%c0_39, %c0_40, %c0_41], %158 {strides = array<i32>} : memref<1x1x128xf32, #tpu.memory_space<vmem>>, vector<1x1x128xf32>,
    return
  }
  func.func @transform_0(%arg0: i32) -> (i32, i32, i32) {
    %c0_i32 = arith.constant 0 : i32
    %c0_i32_0 = arith.constant 0 : i32
    %c0_i32_1 = arith.constant 0 : i32
    return %arg0, %c0_i32, %c0_i32_0 : i32, i32, i32
  }
  func.func @transform_1(%arg0: i32) -> (i32, i32) {
    %c0_i32 = arith.constant 0 : i32
    %c0_i32_0 = arith.constant 0 : i32
    %c0_i32_1 = arith.constant 0 : i32
    return %c0_i32, %c0_i32_0 : i32, i32
  }
  func.func @transform_2(%arg0: i32) -> (i32, i32) {
    %c0_i32 = arith.constant 0 : i32
    %c0_i32_0 = arith.constant 0 : i32
    %c0_i32_1 = arith.constant 0 : i32
    return %c0_i32, %c0_i32_0 : i32, i32
  }
  func.func @transform_3(%arg0: i32) -> (i32, i32) {
    %c0_i32 = arith.constant 0 : i32
    %c0_i32_0 = arith.constant 0 : i32
    %c0_i32_1 = arith.constant 0 : i32
    return %c0_i32, %c0_i32_0 : i32, i32
  }
  func.func @transform_4(%arg0: i32) -> (i32, i32) {
    %c0_i32 = arith.constant 0 : i32
    %c0_i32_0 = arith.constant 0 : i32
    %c0_i32_1 = arith.constant 0 : i32
    return %c0_i32, %c0_i32_0 : i32, i32
  }
  func.func @transform_5(%arg0: i32) -> (i32, i32) {
    %c0_i32 = arith.constant 0 : i32
    %c0_i32_0 = arith.constant 0 : i32
    %c0_i32_1 = arith.constant 0 : i32
    return %c0_i32, %c0_i32_0 : i32, i32
  }
  func.func @transform_6(%arg0: i32) -> (i32, i32) {
    %c0_i32 = arith.constant 0 : i32
    %c0_i32_0 = arith.constant 0 : i32
    %c0_i32_1 = arith.constant 0 : i32
    return %c0_i32, %c0_i32_0 : i32, i32
  }
  func.func @transform_7(%arg0: i32) -> (i32, i32) {
    %c0_i32 = arith.constant 0 : i32
    %c0_i32_0 = arith.constant 0 : i32
    %c0_i32_1 = arith.constant 0 : i32
    return %c0_i32, %c0_i32_0 : i32, i32
  }
  func.func @transform_8(%arg0: i32) -> (i32, i32) {
    %c0_i32 = arith.constant 0 : i32
    %c0_i32_0 = arith.constant 0 : i32
    %c0_i32_1 = arith.constant 0 : i32
    return %c0_i32, %c0_i32_0 : i32, i32
  }
  func.func @transform_9(%arg0: i32) -> (i32, i32, i32) {
    %c0_i32 = arith.constant 0 : i32
    %c0_i32_0 = arith.constant 0 : i32
    %c0_i32_1 = arith.constant 0 : i32
    return %arg0, %c0_i32, %c0_i32_0 : i32, i32, i32
  }
  func.func @transform_10(%arg0: i32) -> (i32, i32, i32) {
    %c0_i32 = arith.constant 0 : i32
    %c0_i32_0 = arith.constant 0 : i32
    %c0_i32_1 = arith.constant 0 : i32
    return %arg0, %c0_i32, %c0_i32_0 : i32, i32, i32
  }
}

module attributes {stable_mosaic.version = 11 : i64} {
  func.func @_attn_ffn_norm23_kernel(%arg0: i32, %arg1: memref<1x8x128xf32, #tpu.memory_space<vmem>>, %arg2: memref<1x1x128xf32, #tpu.memory_space<vmem>>, %arg3: memref<1x8x128xf32, #tpu.memory_space<vmem>>, %arg4: memref<128x128xbf16, #tpu.memory_space<vmem>>, %arg5: memref<1x128xf32, #tpu.memory_space<vmem>>, %arg6: memref<128x256xbf16, #tpu.memory_space<vmem>>, %arg7: memref<1x256xf32, #tpu.memory_space<vmem>>, %arg8: memref<128x128xbf16, #tpu.memory_space<vmem>>, %arg9: memref<1x128xf32, #tpu.memory_space<vmem>>, %arg10: memref<1x128xf32, #tpu.memory_space<vmem>>, %arg11: memref<1x128xf32, #tpu.memory_space<vmem>>, %arg12: memref<128x512xbf16, #tpu.memory_space<vmem>>, %arg13: memref<1x512xf32, #tpu.memory_space<vmem>>, %arg14: memref<512x128xbf16, #tpu.memory_space<vmem>>, %arg15: memref<1x128xf32, #tpu.memory_space<vmem>>, %arg16: memref<1x128xf32, #tpu.memory_space<vmem>>, %arg17: memref<1x128xf32, #tpu.memory_space<vmem>>, %arg18: memref<1x8x128xf32, #tpu.memory_space<vmem>>, %arg19: memref<8x128xf32, #tpu.memory_space<vmem>>) attributes {dimension_semantics = [#tpu.dimension_semantics<parallel>], iteration_bounds = array<i64: 2>, scalar_prefetch = 0 : i64, scratch_operands = 1 : i64, tpu.core_type = #tpu.core_type<tc>, window_params = [{transform_indices = @transform_0, window_bounds = array<i64: 1, 8, 128>}, {transform_indices = @transform_1, window_bounds = array<i64: 1, 1, 128>}, {transform_indices = @transform_2, window_bounds = array<i64: 1, 8, 128>}, {pipeline_mode = #tpu.pipeline_mode<synchronous>, transform_indices = @transform_3, window_bounds = array<i64: 128, 128>}, {pipeline_mode = #tpu.pipeline_mode<synchronous>, transform_indices = @transform_4, window_bounds = array<i64: 1, 128>}, {pipeline_mode = #tpu.pipeline_mode<synchronous>, transform_indices = @transform_5, window_bounds = array<i64: 128, 256>}, {pipeline_mode = #tpu.pipeline_mode<synchronous>, transform_indices = @transform_6, window_bounds = array<i64: 1, 256>}, {pipeline_mode = #tpu.pipeline_mode<synchronous>, transform_indices = @transform_7, window_bounds = array<i64: 128, 128>}, {pipeline_mode = #tpu.pipeline_mode<synchronous>, transform_indices = @transform_8, window_bounds = array<i64: 1, 128>}, {pipeline_mode = #tpu.pipeline_mode<synchronous>, transform_indices = @transform_9, window_bounds = array<i64: 1, 128>}, {pipeline_mode = #tpu.pipeline_mode<synchronous>, transform_indices = @transform_10, window_bounds = array<i64: 1, 128>}, {pipeline_mode = #tpu.pipeline_mode<synchronous>, transform_indices = @transform_11, window_bounds = array<i64: 128, 512>}, {pipeline_mode = #tpu.pipeline_mode<synchronous>, transform_indices = @transform_12, window_bounds = array<i64: 1, 512>}, {pipeline_mode = #tpu.pipeline_mode<synchronous>, transform_indices = @transform_13, window_bounds = array<i64: 512, 128>}, {pipeline_mode = #tpu.pipeline_mode<synchronous>, transform_indices = @transform_14, window_bounds = array<i64: 1, 128>}, {pipeline_mode = #tpu.pipeline_mode<synchronous>, transform_indices = @transform_15, window_bounds = array<i64: 1, 128>}, {pipeline_mode = #tpu.pipeline_mode<synchronous>, transform_indices = @transform_16, window_bounds = array<i64: 1, 128>}, {transform_indices = @transform_17, window_bounds = array<i64: 1, 8, 128>}]} {
    %c0 = arith.constant 0 : index
    %c0_0 = arith.constant 0 : index
    %c0_1 = arith.constant 0 : index
    %0 = vector.load %arg2[%c0, %c0_0, %c0_1] : memref<1x1x128xf32, #tpu.memory_space<vmem>>, vector<1x1x128xf32>
    %1 = vector.shape_cast %0 : vector<1x1x128xf32> to vector<1x128xf32>
    %2 = arith.truncf %1 : vector<1x128xf32> to vector<1x128xbf16>
    %c0_2 = arith.constant 0 : index
    %c0_3 = arith.constant 0 : index
    %3 = vector.load %arg4[%c0_2, %c0_3] : memref<128x128xbf16, #tpu.memory_space<vmem>>, vector<128x128xbf16>
    %cst = arith.constant dense<0.000000e+00> : vector<1x128xf32>
    %4 = tpu.matmul %2, %3, %cst {dimension_numbers = #tpu.dot_dimension_numbers<[1], [0], [0], [1], [0, 0, 1, 1], [], []>} : vector<1x128xbf16>, vector<128x128xbf16>, vector<1x128xf32> -> vector<1x128xf32>
    %c0_4 = arith.constant 0 : index
    %c0_5 = arith.constant 0 : index
    %5 = vector.load %arg5[%c0_4, %c0_5] : memref<1x128xf32, #tpu.memory_space<vmem>>, vector<1x128xf32>
    %6 = arith.addf %4, %5 : vector<1x128xf32>
    %c0_6 = arith.constant 0 : index
    %c0_7 = arith.constant 0 : index
    %c0_8 = arith.constant 0 : index
    %7 = vector.load %arg3[%c0_6, %c0_7, %c0_8] : memref<1x8x128xf32, #tpu.memory_space<vmem>>, vector<1x8x128xf32>
    %8 = vector.shape_cast %7 : vector<1x8x128xf32> to vector<8x128xf32>
    %9 = arith.truncf %8 : vector<8x128xf32> to vector<8x128xbf16>
    %c0_9 = arith.constant 0 : index
    %c0_10 = arith.constant 0 : index
    %10 = vector.load %arg6[%c0_9, %c0_10] : memref<128x256xbf16, #tpu.memory_space<vmem>>, vector<128x256xbf16>
    %cst_11 = arith.constant dense<0.000000e+00> : vector<8x256xf32>
    %11 = tpu.matmul %9, %10, %cst_11 {dimension_numbers = #tpu.dot_dimension_numbers<[1], [0], [0], [1], [0, 0, 1, 1], [], []>} : vector<8x128xbf16>, vector<128x256xbf16>, vector<8x256xf32> -> vector<8x256xf32>
    %c0_12 = arith.constant 0 : index
    %c0_13 = arith.constant 0 : index
    %12 = vector.load %arg7[%c0_12, %c0_13] : memref<1x256xf32, #tpu.memory_space<vmem>>, vector<1x256xf32>
    %13 = vector.broadcast %12 : vector<1x256xf32> to vector<8x256xf32>
    %14 = arith.addf %11, %13 : vector<8x256xf32>
    %15 = vector.extract_strided_slice %14 {offsets = [0, 0], sizes = [8, 128], strides = [1, 1]} : vector<8x256xf32> to vector<8x128xf32>
    %16 = vector.extract_strided_slice %14 {offsets = [0, 128], sizes = [8, 128], strides = [1, 1]} : vector<8x256xf32> to vector<8x128xf32>
    %cst_14 = arith.constant 1.280000e+02 : f32
    %17 = math.sqrt %cst_14 : f32
    %cst_15 = arith.constant 1.000000e+00 : f32
    %18 = arith.divf %cst_15, %17 : f32
    %19 = arith.truncf %6 : vector<1x128xf32> to vector<1x128xbf16>
    %20 = arith.truncf %15 : vector<8x128xf32> to vector<8x128xbf16>
    %cst_16 = arith.constant dense<0.000000e+00> : vector<1x8xf32>
    %21 = tpu.matmul %19, %20, %cst_16 {dimension_numbers = #tpu.dot_dimension_numbers<[1], [1], [0], [0], [0, 0, 1, 0], [], []>} : vector<1x128xbf16>, vector<8x128xbf16>, vector<1x8xf32> -> vector<1x8xf32>
    %22 = vector.broadcast %18 : f32 to vector<1x8xf32>
    %23 = arith.mulf %21, %22 : vector<1x8xf32>
    %cst_17 = arith.constant dense<0xFF800000> : vector<1xf32>
    %24 = vector.multi_reduction <maximumf>, %23, %cst_17 [1] : vector<1x8xf32> to vector<1xf32>
    %25 = vector.shape_cast %24 : vector<1xf32> to vector<1x1xf32>
    %26 = vector.broadcast %25 : vector<1x1xf32> to vector<1x8xf32>
    %27 = arith.subf %23, %26 : vector<1x8xf32>
    %28 = math.exp %27 : vector<1x8xf32>
    %cst_18 = arith.constant dense<0.000000e+00> : vector<1xf32>
    %29 = vector.multi_reduction <add>, %28, %cst_18 [1] : vector<1x8xf32> to vector<1xf32>
    %30 = vector.shape_cast %29 : vector<1xf32> to vector<1x1xf32>
    %31 = vector.broadcast %30 : vector<1x1xf32> to vector<1x8xf32>
    %32 = arith.divf %28, %31 : vector<1x8xf32>
    %33 = arith.truncf %32 : vector<1x8xf32> to vector<1x8xbf16>
    %34 = arith.truncf %16 : vector<8x128xf32> to vector<8x128xbf16>
    %cst_19 = arith.constant dense<0.000000e+00> : vector<1x128xf32>
    %35 = tpu.matmul %33, %34, %cst_19 {dimension_numbers = #tpu.dot_dimension_numbers<[1], [0], [0], [1], [0, 0, 1, 1], [], []>} : vector<1x8xbf16>, vector<8x128xbf16>, vector<1x128xf32> -> vector<1x128xf32>
    %36 = arith.truncf %35 : vector<1x128xf32> to vector<1x128xbf16>
    %c0_20 = arith.constant 0 : index
    %c0_21 = arith.constant 0 : index
    %37 = vector.load %arg8[%c0_20, %c0_21] : memref<128x128xbf16, #tpu.memory_space<vmem>>, vector<128x128xbf16>
    %cst_22 = arith.constant dense<0.000000e+00> : vector<1x128xf32>
    %38 = tpu.matmul %36, %37, %cst_22 {dimension_numbers = #tpu.dot_dimension_numbers<[1], [0], [0], [1], [0, 0, 1, 1], [], []>} : vector<1x128xbf16>, vector<128x128xbf16>, vector<1x128xf32> -> vector<1x128xf32>
    %c0_23 = arith.constant 0 : index
    %c0_24 = arith.constant 0 : index
    %39 = vector.load %arg9[%c0_23, %c0_24] : memref<1x128xf32, #tpu.memory_space<vmem>>, vector<1x128xf32>
    %40 = arith.addf %38, %39 : vector<1x128xf32>
    %41 = arith.addf %1, %40 : vector<1x128xf32>
    %cst_25 = arith.constant dense<0.000000e+00> : vector<1xf32>
    %42 = vector.multi_reduction <add>, %41, %cst_25 [1] : vector<1x128xf32> to vector<1xf32>
    %43 = vector.shape_cast %42 : vector<1xf32> to vector<1x1xf32>
    %cst_26 = arith.constant 1.280000e+02 : f32
    %44 = vector.broadcast %cst_26 : f32 to vector<1x1xf32>
    %45 = arith.divf %43, %44 : vector<1x1xf32>
    %46 = vector.broadcast %45 : vector<1x1xf32> to vector<1x128xf32>
    %47 = arith.subf %41, %46 : vector<1x128xf32>
    %48 = arith.mulf %47, %47 : vector<1x128xf32>
    %cst_27 = arith.constant dense<0.000000e+00> : vector<1xf32>
    %49 = vector.multi_reduction <add>, %48, %cst_27 [1] : vector<1x128xf32> to vector<1xf32>
    %50 = vector.shape_cast %49 : vector<1xf32> to vector<1x1xf32>
    %cst_28 = arith.constant 1.280000e+02 : f32
    %51 = vector.broadcast %cst_28 : f32 to vector<1x1xf32>
    %52 = arith.divf %50, %51 : vector<1x1xf32>
    %53 = vector.broadcast %45 : vector<1x1xf32> to vector<1x128xf32>
    %54 = arith.subf %41, %53 : vector<1x128xf32>
    %cst_29 = arith.constant 9.99999974E-6 : f32
    %55 = vector.broadcast %cst_29 : f32 to vector<1x1xf32>
    %56 = arith.addf %52, %55 : vector<1x1xf32>
    %57 = math.rsqrt %56 : vector<1x1xf32>
    %58 = vector.broadcast %57 : vector<1x1xf32> to vector<1x128xf32>
    %59 = arith.mulf %54, %58 : vector<1x128xf32>
    %c0_30 = arith.constant 0 : index
    %c0_31 = arith.constant 0 : index
    %60 = vector.load %arg10[%c0_30, %c0_31] : memref<1x128xf32, #tpu.memory_space<vmem>>, vector<1x128xf32>
    %61 = arith.mulf %59, %60 : vector<1x128xf32>
    %c0_32 = arith.constant 0 : index
    %c0_33 = arith.constant 0 : index
    %62 = vector.load %arg11[%c0_32, %c0_33] : memref<1x128xf32, #tpu.memory_space<vmem>>, vector<1x128xf32>
    %63 = arith.addf %61, %62 : vector<1x128xf32>
    %c0_34 = arith.constant 0 : index
    %c0_35 = arith.constant 0 : index
    %c0_36 = arith.constant 0 : index
    %64 = vector.load %arg1[%c0_34, %c0_35, %c0_36] : memref<1x8x128xf32, #tpu.memory_space<vmem>>, vector<1x8x128xf32>
    %65 = vector.shape_cast %64 : vector<1x8x128xf32> to vector<8x128xf32>
    %c0_37 = arith.constant 0 : index
    %c0_38 = arith.constant 0 : index
    %66 = vector.load %arg19[%c0_37, %c0_38] : memref<8x128xf32, #tpu.memory_space<vmem>>, vector<8x128xf32>
    tpu.vector_store %arg19[%c0_37, %c0_38], %65 {strides = array<i32>} : memref<8x128xf32, #tpu.memory_space<vmem>>, vector<8x128xf32>,
    %c7 = arith.constant 7 : index
    %c0_39 = arith.constant 0 : index
    %67 = vector.load %arg19[%c7, %c0_39] : memref<8x128xf32, #tpu.memory_space<vmem>>, vector<1x128xf32>
    tpu.vector_store %arg19[%c7, %c0_39], %63 {strides = array<i32>} : memref<8x128xf32, #tpu.memory_space<vmem>>, vector<1x128xf32>,
    %c0_40 = arith.constant 0 : index
    %c0_41 = arith.constant 0 : index
    %68 = vector.load %arg19[%c0_40, %c0_41] : memref<8x128xf32, #tpu.memory_space<vmem>>, vector<8x128xf32>
    %69 = arith.truncf %68 : vector<8x128xf32> to vector<8x128xbf16>
    %c0_42 = arith.constant 0 : index
    %c0_43 = arith.constant 0 : index
    %70 = vector.load %arg12[%c0_42, %c0_43] : memref<128x512xbf16, #tpu.memory_space<vmem>>, vector<128x512xbf16>
    %cst_44 = arith.constant dense<0.000000e+00> : vector<8x512xf32>
    %71 = tpu.matmul %69, %70, %cst_44 {dimension_numbers = #tpu.dot_dimension_numbers<[1], [0], [0], [1], [0, 0, 1, 1], [], []>} : vector<8x128xbf16>, vector<128x512xbf16>, vector<8x512xf32> -> vector<8x512xf32>
    %c0_45 = arith.constant 0 : index
    %c0_46 = arith.constant 0 : index
    %72 = vector.load %arg13[%c0_45, %c0_46] : memref<1x512xf32, #tpu.memory_space<vmem>>, vector<1x512xf32>
    %73 = vector.broadcast %72 : vector<1x512xf32> to vector<8x512xf32>
    %74 = arith.addf %71, %73 : vector<8x512xf32>
    %cst_47 = arith.constant 0.000000e+00 : f32
    %75 = vector.broadcast %cst_47 : f32 to vector<8x512xf32>
    %76 = arith.maximumf %74, %75 : vector<8x512xf32>
    %77 = arith.truncf %76 : vector<8x512xf32> to vector<8x512xbf16>
    %c0_48 = arith.constant 0 : index
    %c0_49 = arith.constant 0 : index
    %78 = vector.load %arg14[%c0_48, %c0_49] : memref<512x128xbf16, #tpu.memory_space<vmem>>, vector<512x128xbf16>
    %cst_50 = arith.constant dense<0.000000e+00> : vector<8x128xf32>
    %79 = tpu.matmul %77, %78, %cst_50 {dimension_numbers = #tpu.dot_dimension_numbers<[1], [0], [0], [1], [0, 0, 1, 1], [], []>} : vector<8x512xbf16>, vector<512x128xbf16>, vector<8x128xf32> -> vector<8x128xf32>
    %c0_51 = arith.constant 0 : index
    %c0_52 = arith.constant 0 : index
    %80 = vector.load %arg15[%c0_51, %c0_52] : memref<1x128xf32, #tpu.memory_space<vmem>>, vector<1x128xf32>
    %81 = vector.broadcast %80 : vector<1x128xf32> to vector<8x128xf32>
    %82 = arith.addf %79, %81 : vector<8x128xf32>
    %83 = arith.addf %68, %82 : vector<8x128xf32>
    %cst_53 = arith.constant dense<0.000000e+00> : vector<8xf32>
    %84 = vector.multi_reduction <add>, %83, %cst_53 [1] : vector<8x128xf32> to vector<8xf32>
    %85 = vector.shape_cast %84 : vector<8xf32> to vector<8x1xf32>
    %cst_54 = arith.constant 1.280000e+02 : f32
    %86 = vector.broadcast %cst_54 : f32 to vector<8x1xf32>
    %87 = arith.divf %85, %86 : vector<8x1xf32>
    %88 = vector.broadcast %87 : vector<8x1xf32> to vector<8x128xf32>
    %89 = arith.subf %83, %88 : vector<8x128xf32>
    %90 = arith.mulf %89, %89 : vector<8x128xf32>
    %cst_55 = arith.constant dense<0.000000e+00> : vector<8xf32>
    %91 = vector.multi_reduction <add>, %90, %cst_55 [1] : vector<8x128xf32> to vector<8xf32>
    %92 = vector.shape_cast %91 : vector<8xf32> to vector<8x1xf32>
    %cst_56 = arith.constant 1.280000e+02 : f32
    %93 = vector.broadcast %cst_56 : f32 to vector<8x1xf32>
    %94 = arith.divf %92, %93 : vector<8x1xf32>
    %95 = vector.broadcast %87 : vector<8x1xf32> to vector<8x128xf32>
    %96 = arith.subf %83, %95 : vector<8x128xf32>
    %cst_57 = arith.constant 9.99999974E-6 : f32
    %97 = vector.broadcast %cst_57 : f32 to vector<8x1xf32>
    %98 = arith.addf %94, %97 : vector<8x1xf32>
    %99 = math.rsqrt %98 : vector<8x1xf32>
    %100 = vector.broadcast %99 : vector<8x1xf32> to vector<8x128xf32>
    %101 = arith.mulf %96, %100 : vector<8x128xf32>
    %c0_58 = arith.constant 0 : index
    %c0_59 = arith.constant 0 : index
    %102 = vector.load %arg16[%c0_58, %c0_59] : memref<1x128xf32, #tpu.memory_space<vmem>>, vector<1x128xf32>
    %103 = vector.broadcast %102 : vector<1x128xf32> to vector<8x128xf32>
    %104 = arith.mulf %101, %103 : vector<8x128xf32>
    %c0_60 = arith.constant 0 : index
    %c0_61 = arith.constant 0 : index
    %105 = vector.load %arg17[%c0_60, %c0_61] : memref<1x128xf32, #tpu.memory_space<vmem>>, vector<1x128xf32>
    %106 = vector.broadcast %105 : vector<1x128xf32> to vector<8x128xf32>
    %107 = arith.addf %104, %106 : vector<8x128xf32>
    %108 = vector.shape_cast %107 : vector<8x128xf32> to vector<1x8x128xf32>
    %c0_62 = arith.constant 0 : index
    %c0_63 = arith.constant 0 : index
    %c0_64 = arith.constant 0 : index
    %109 = vector.load %arg18[%c0_62, %c0_63, %c0_64] : memref<1x8x128xf32, #tpu.memory_space<vmem>>, vector<1x8x128xf32>
    tpu.vector_store %arg18[%c0_62, %c0_63, %c0_64], %108 {strides = array<i32>} : memref<1x8x128xf32, #tpu.memory_space<vmem>>, vector<1x8x128xf32>,
    return
  }
  func.func @transform_0(%arg0: i32) -> (i32, i32, i32) {
    %c0_i32 = arith.constant 0 : i32
    %c0_i32_0 = arith.constant 0 : i32
    %c0_i32_1 = arith.constant 0 : i32
    return %arg0, %c0_i32, %c0_i32_0 : i32, i32, i32
  }
  func.func @transform_1(%arg0: i32) -> (i32, i32, i32) {
    %c0_i32 = arith.constant 0 : i32
    %c0_i32_0 = arith.constant 0 : i32
    %c0_i32_1 = arith.constant 0 : i32
    return %arg0, %c0_i32, %c0_i32_0 : i32, i32, i32
  }
  func.func @transform_2(%arg0: i32) -> (i32, i32, i32) {
    %c0_i32 = arith.constant 0 : i32
    %c0_i32_0 = arith.constant 0 : i32
    %c0_i32_1 = arith.constant 0 : i32
    return %arg0, %c0_i32, %c0_i32_0 : i32, i32, i32
  }
  func.func @transform_3(%arg0: i32) -> (i32, i32) {
    %c0_i32 = arith.constant 0 : i32
    %c0_i32_0 = arith.constant 0 : i32
    %c0_i32_1 = arith.constant 0 : i32
    return %c0_i32, %c0_i32_0 : i32, i32
  }
  func.func @transform_4(%arg0: i32) -> (i32, i32) {
    %c0_i32 = arith.constant 0 : i32
    %c0_i32_0 = arith.constant 0 : i32
    %c0_i32_1 = arith.constant 0 : i32
    return %c0_i32, %c0_i32_0 : i32, i32
  }
  func.func @transform_5(%arg0: i32) -> (i32, i32) {
    %c0_i32 = arith.constant 0 : i32
    %c0_i32_0 = arith.constant 0 : i32
    %c0_i32_1 = arith.constant 0 : i32
    return %c0_i32, %c0_i32_0 : i32, i32
  }
  func.func @transform_6(%arg0: i32) -> (i32, i32) {
    %c0_i32 = arith.constant 0 : i32
    %c0_i32_0 = arith.constant 0 : i32
    %c0_i32_1 = arith.constant 0 : i32
    return %c0_i32, %c0_i32_0 : i32, i32
  }
  func.func @transform_7(%arg0: i32) -> (i32, i32) {
    %c0_i32 = arith.constant 0 : i32
    %c0_i32_0 = arith.constant 0 : i32
    %c0_i32_1 = arith.constant 0 : i32
    return %c0_i32, %c0_i32_0 : i32, i32
  }
  func.func @transform_8(%arg0: i32) -> (i32, i32) {
    %c0_i32 = arith.constant 0 : i32
    %c0_i32_0 = arith.constant 0 : i32
    %c0_i32_1 = arith.constant 0 : i32
    return %c0_i32, %c0_i32_0 : i32, i32
  }
  func.func @transform_9(%arg0: i32) -> (i32, i32) {
    %c0_i32 = arith.constant 0 : i32
    %c0_i32_0 = arith.constant 0 : i32
    %c0_i32_1 = arith.constant 0 : i32
    return %c0_i32, %c0_i32_0 : i32, i32
  }
  func.func @transform_10(%arg0: i32) -> (i32, i32) {
    %c0_i32 = arith.constant 0 : i32
    %c0_i32_0 = arith.constant 0 : i32
    %c0_i32_1 = arith.constant 0 : i32
    return %c0_i32, %c0_i32_0 : i32, i32
  }
  func.func @transform_11(%arg0: i32) -> (i32, i32) {
    %c0_i32 = arith.constant 0 : i32
    %c0_i32_0 = arith.constant 0 : i32
    %c0_i32_1 = arith.constant 0 : i32
    return %c0_i32, %c0_i32_0 : i32, i32
  }
  func.func @transform_12(%arg0: i32) -> (i32, i32) {
    %c0_i32 = arith.constant 0 : i32
    %c0_i32_0 = arith.constant 0 : i32
    %c0_i32_1 = arith.constant 0 : i32
    return %c0_i32, %c0_i32_0 : i32, i32
  }
  func.func @transform_13(%arg0: i32) -> (i32, i32) {
    %c0_i32 = arith.constant 0 : i32
    %c0_i32_0 = arith.constant 0 : i32
    %c0_i32_1 = arith.constant 0 : i32
    return %c0_i32, %c0_i32_0 : i32, i32
  }
  func.func @transform_14(%arg0: i32) -> (i32, i32) {
    %c0_i32 = arith.constant 0 : i32
    %c0_i32_0 = arith.constant 0 : i32
    %c0_i32_1 = arith.constant 0 : i32
    return %c0_i32, %c0_i32_0 : i32, i32
  }
  func.func @transform_15(%arg0: i32) -> (i32, i32) {
    %c0_i32 = arith.constant 0 : i32
    %c0_i32_0 = arith.constant 0 : i32
    %c0_i32_1 = arith.constant 0 : i32
    return %c0_i32, %c0_i32_0 : i32, i32
  }
  func.func @transform_16(%arg0: i32) -> (i32, i32) {
    %c0_i32 = arith.constant 0 : i32
    %c0_i32_0 = arith.constant 0 : i32
    %c0_i32_1 = arith.constant 0 : i32
    return %c0_i32, %c0_i32_0 : i32, i32
  }
  func.func @transform_17(%arg0: i32) -> (i32, i32, i32) {
    %c0_i32 = arith.constant 0 : i32
    %c0_i32_0 = arith.constant 0 : i32
    %c0_i32_1 = arith.constant 0 : i32
    return %arg0, %c0_i32, %c0_i32_0 : i32, i32, i32
  }
}

</mosaic_0001>

<llo_original>
// kernel: encoder_layer_forward.2
$region0: #{encoder_layer_forward.2}
  #allocation0 [shape = 'u32[]', space=smem, size = 0x4, offset = 0x4, fixed_abs, tag = 'smem constant byte address 0x4 - core index']
  #allocation1 [shape = 'u32[144,128]{1,0:T(1,128)}', space=vmem, size = 0x12000, scoped, tag = 'internal scratch']
  #allocation2 [shape = 'f32[8,512]{1,0:T(8,128)}', space=vmem, size = 0x4000, scoped, tag = 'scratch operand']
  #allocation3 [shape = 'f32[8,256]{1,0:T(8,128)}', space=vmem, size = 0x2000, scoped, tag = 'scratch operand']
  %s0 = inlined_call_operand.hbm [shape: f32[2,8,128], index: 0, kind: input, shape index: {}]
  %s1 = inlined_call_operand.hbm [shape: bf16[128,512], index: 1, kind: input, shape index: {}]
  %s2 = inlined_call_operand.vmem [shape: f32[1,512], index: 2, kind: input, shape index: {}]
  %s3 = inlined_call_operand.hbm [shape: bf16[256,128], index: 3, kind: input, shape index: {}]
  %s4 = inlined_call_operand.vmem [shape: f32[1,128], index: 4, kind: input, shape index: {}, may-alias: {4,8}]
  %s5 = inlined_call_operand.vmem [shape: f32[1,128], index: 5, kind: input, shape index: {}]
  %s6 = inlined_call_operand.vmem [shape: f32[1,128], index: 6, kind: input, shape index: {}]
  %s7 = inlined_call_operand.vmem [shape: f32[1,128], index: 7, kind: input, shape index: {}]
  %s8 = inlined_call_operand.vmem [shape: f32[1,128], index: 8, kind: input, shape index: {}, may-alias: {4,8}]
  %s9 = inlined_call_operand.vmem [shape: f32[2,8,128], index: 9, kind: output, shape index: {0}]
  %s10 = inlined_call_operand.vmem [shape: f32[2,1,128], index: 10, kind: output, shape index: {1}]
  %11 = xla_tuple %s9, %s10
  %s12 = sld [smem:[#allocation0]]
  $region89: #{encoder_layer_forward.2} parent=0
    _
  %s14 = ssub.s32 1, %s12
  %s15 = scalar_select 0, %s14, %s12
  $region1: #{encoder_layer_forward.2} parent=0
    #allocation4 [shape = 'u8[8192]{0}', space=vmem, size = 0x2000, scoped, tag = 'input window, operand 0']
    #allocation5 [shape = 's32[2]{0}', space=sflag, size = 0x8, scoped, tag = 'scoped memory for encoder_layer_forward.2']
    #allocation6 [shape = 'u8[131072]{0}', space=vmem, size = 0x20000, scoped, tag = 'input window, operand 1, single buffered']
    #allocation7 [shape = 's32[1]{0}', space=sflag, size = 0x4, scoped, tag = 'scoped memory for encoder_layer_forward.2']
    #allocation8 [shape = 'u8[65536]{0}', space=vmem, size = 0x10000, scoped, tag = 'input window, operand 3, single buffered']
    %16 = vsyncpa [#allocation5], 0
    %s17 = scalar_lea.sflag [#allocation5], 1
    %18 = vsyncpa %s17, 0
    %19 = vsyncpa [#allocation7], 0
    loop: start=0, step=1, limit=4
    $region2: #{encoder_layer_forward.2} parent=1 // loop_pre_header
      _
    $region3: #{encoder_layer_forward.2} parent=1 // loop_header
      %s21 = sphi 0, %s25
      %p22 = scmp.ge.s32.totalorder %s21, 4
      %s31 = sphi 0, %s33
      %s34 = sphi 0, %s31
      %s35 = sphi 0, %s34
      %s51 = sphi 0, %s35
      %s55 = sphi 0, %s55
      %s57 = sphi 0, %s55
      %s58 = sphi 0, %s57
      %s72 = sphi 0, %s58
      %s76 = sphi 0, %s76
      %s78 = sphi 0, %s76
      %s79 = sphi 0, %s78
      %s93 = sphi 0, %s79
      %s97 = sphi 0, %s97
      %s99 = sphi 0, %s97
      %s100 = sphi 0, %s99
      %s114 = sphi 0, %s100
      %s118 = sphi 0, %s118
      %s120 = sphi 0, %s118
      %s121 = sphi 0, %s120
      %s135 = sphi 0, %s121
      %s139 = sphi 0, %s139
      %s141 = sphi 0, %s139
      %s142 = sphi 0, %s141
      %s156 = sphi 0, %s142
      %s160 = sphi 0, %s160
      %s162 = sphi 0, %s160
      %s163 = sphi 0, %s162
      %s177 = sphi 0, %s163
      %s181 = sphi 0, %s181
      %s183 = sphi 0, %s181
      %s184 = sphi 0, %s183
      %s198 = sphi 0, %s184
      %s202 = sphi 0, %s202
      %s204 = sphi 0, %s202
      %s205 = sphi 0, %s204
      %s219 = sphi 0, %s205
      %s225 = sphi 0, %s227
      %s228 = sphi 0, %s225
      %s229 = sphi 0, %s228
      %s245 = sphi 0, %s229
      %s251 = sphi 0, %s253
      %s254 = sphi 0, %s251
      %s255 = sphi 0, %s254
      %s271 = sphi 0, %s255
    $region4: #{encoder_layer_forward.2} parent=1 // loop_header_branch
      %24 = sbr.rel (%p22) target = $region8
    $region5: #{encoder_layer_forward.2} parent=1 // loop_body
      %s26 = ssub.s32 %s21, 1
      %s27 = ssub.s32 %s21, 2
      %s28 = sadd.s32 %s21, 1
      %s29 = ssub.s32 %s21, %s28
      %p30 = scmp.eq.s32.totalorder %s29, 0
      %s32 = sadd.s32 %s31, 1
      %s33 = scalar_select %p30, %s31, %s32
      %p36 = pneg %p30
      %p37 = scmp.eq.s32.totalorder %s21, 1
      %p38 = por %p36, %p37
      %p39 = scmp.ne.s32.totalorder %s31, %s34
      %p40 = scmp.eq.s32.totalorder %s21, 0
      %p41 = por %p39, %p40
      %p42 = scmp.ne.s32.totalorder %s31, %s34
      %p43 = scmp.eq.s32.totalorder %s26, 1
      %p44 = por %p42, %p43
      %p45 = scmp.ne.s32.totalorder %s34, %s35
      %p46 = scmp.eq.s32.totalorder %s26, 0
      %p47 = por %p45, %p46
      %p48 = scmp.ne.s32.totalorder %s34, %s35
      %p49 = scmp.eq.s32.totalorder %s27, 1
      %p50 = por %p48, %p49
      %p52 = scmp.ne.s32.totalorder %s35, %s51
      %p53 = scmp.eq.s32.totalorder %s27, 0
      %p54 = por %p52, %p53
      %s56 = sadd.s32 %s55, 1
      %p59 = scmp.eq.s32.totalorder %s21, 1
      %p60 = scmp.ne.s32.totalorder %s55, %s57
      %p61 = scmp.eq.s32.totalorder %s21, 0
      %p62 = por %p60, %p61
      %p63 = scmp.ne.s32.totalorder %s55, %s57
      %p64 = scmp.eq.s32.totalorder %s26, 1
      %p65 = por %p63, %p64
      %p66 = scmp.ne.s32.totalorder %s57, %s58
      %p67 = scmp.eq.s32.totalorder %s26, 0
      %p68 = por %p66, %p67
      %p69 = scmp.ne.s32.totalorder %s57, %s58
      %p70 = scmp.eq.s32.totalorder %s27, 1
      %p71 = por %p69, %p70
      %p73 = scmp.ne.s32.totalorder %s58, %s72
      %p74 = scmp.eq.s32.totalorder %s27, 0
      %p75 = por %p73, %p74
      %s77 = sadd.s32 %s76, 1
      %p80 = scmp.eq.s32.totalorder %s21, 1
      %p81 = scmp.ne.s32.totalorder %s76, %s78
      %p82 = scmp.eq.s32.totalorder %s21, 0
      %p83 = por %p81, %p82
      %p84 = scmp.ne.s32.totalorder %s76, %s78
      %p85 = scmp.eq.s32.totalorder %s26, 1
      %p86 = por %p84, %p85
      %p87 = scmp.ne.s32.totalorder %s78, %s79
      %p88 = scmp.eq.s32.totalorder %s26, 0
      %p89 = por %p87, %p88
      %p90 = scmp.ne.s32.totalorder %s78, %s79
      %p91 = scmp.eq.s32.totalorder %s27, 1
      %p92 = por %p90, %p91
      %p94 = scmp.ne.s32.totalorder %s79, %s93
      %p95 = scmp.eq.s32.totalorder %s27, 0
      %p96 = por %p94, %p95
      %s98 = sadd.s32 %s97, 1
      %p101 = scmp.eq.s32.totalorder %s21, 1
      %p102 = scmp.ne.s32.totalorder %s97, %s99
      %p103 = scmp.eq.s32.totalorder %s21, 0
      %p104 = por %p102, %p103
      %p105 = scmp.ne.s32.totalorder %s97, %s99
      %p106 = scmp.eq.s32.totalorder %s26, 1
      %p107 = por %p105, %p106
      %p108 = scmp.ne.s32.totalorder %s99, %s100
      %p109 = scmp.eq.s32.totalorder %s26, 0
      %p110 = por %p108, %p109
      %p111 = scmp.ne.s32.totalorder %s99, %s100
      %p112 = scmp.eq.s32.totalorder %s27, 1
      %p113 = por %p111, %p112
      %p115 = scmp.ne.s32.totalorder %s100, %s114
      %p116 = scmp.eq.s32.totalorder %s27, 0
      %p117 = por %p115, %p116
      %s119 = sadd.s32 %s118, 1
      %p122 = scmp.eq.s32.totalorder %s21, 1
      %p123 = scmp.ne.s32.totalorder %s118, %s120
      %p124 = scmp.eq.s32.totalorder %s21, 0
      %p125 = por %p123, %p124
      %p126 = scmp.ne.s32.totalorder %s118, %s120
      %p127 = scmp.eq.s32.totalorder %s26, 1
      %p128 = por %p126, %p127
      %p129 = scmp.ne.s32.totalorder %s120, %s121
      %p130 = scmp.eq.s32.totalorder %s26, 0
      %p131 = por %p129, %p130
      %p132 = scmp.ne.s32.totalorder %s120, %s121
      %p133 = scmp.eq.s32.totalorder %s27, 1
      %p134 = por %p132, %p133
      %p136 = scmp.ne.s32.totalorder %s121, %s135
      %p137 = scmp.eq.s32.totalorder %s27, 0
      %p138 = por %p136, %p137
      %s140 = sadd.s32 %s139, 1
      %p143 = scmp.eq.s32.totalorder %s21, 1
      %p144 = scmp.ne.s32.totalorder %s139, %s141
      %p145 = scmp.eq.s32.totalorder %s21, 0
      %p146 = por %p144, %p145
      %p147 = scmp.ne.s32.totalorder %s139, %s141
      %p148 = scmp.eq.s32.totalorder %s26, 1
      %p149 = por %p147, %p148
      %p150 = scmp.ne.s32.totalorder %s141, %s142
      %p151 = scmp.eq.s32.totalorder %s26, 0
      %p152 = por %p150, %p151
      %p153 = scmp.ne.s32.totalorder %s141, %s142
      %p154 = scmp.eq.s32.totalorder %s27, 1
      %p155 = por %p153, %p154
      %p157 = scmp.ne.s32.totalorder %s142, %s156
      %p158 = scmp.eq.s32.totalorder %s27, 0
      %p159 = por %p157, %p158
      %s161 = sadd.s32 %s160, 1
      %p164 = scmp.eq.s32.totalorder %s21, 1
      %p165 = scmp.ne.s32.totalorder %s160, %s162
      %p166 = scmp.eq.s32.totalorder %s21, 0
      %p167 = por %p165, %p166
      %p168 = scmp.ne.s32.totalorder %s160, %s162
      %p169 = scmp.eq.s32.totalorder %s26, 1
      %p170 = por %p168, %p169
      %p171 = scmp.ne.s32.totalorder %s162, %s163
      %p172 = scmp.eq.s32.totalorder %s26, 0
      %p173 = por %p171, %p172
      %p174 = scmp.ne.s32.totalorder %s162, %s163
      %p175 = scmp.eq.s32.totalorder %s27, 1
      %p176 = por %p174, %p175
      %p178 = scmp.ne.s32.totalorder %s163, %s177
      %p179 = scmp.eq.s32.totalorder %s27, 0
      %p180 = por %p178, %p179
      %s182 = sadd.s32 %s181, 1
      %p185 = scmp.eq.s32.totalorder %s21, 1
      %p186 = scmp.ne.s32.totalorder %s181, %s183
      %p187 = scmp.eq.s32.totalorder %s21, 0
      %p188 = por %p186, %p187
      %p189 = scmp.ne.s32.totalorder %s181, %s183
      %p190 = scmp.eq.s32.totalorder %s26, 1
      %p191 = por %p189, %p190
      %p192 = scmp.ne.s32.totalorder %s183, %s184
      %p193 = scmp.eq.s32.totalorder %s26, 0
      %p194 = por %p192, %p193
      %p195 = scmp.ne.s32.totalorder %s183, %s184
      %p196 = scmp.eq.s32.totalorder %s27, 1
      %p197 = por %p195, %p196
      %p199 = scmp.ne.s32.totalorder %s184, %s198
      %p200 = scmp.eq.s32.totalorder %s27, 0
      %p201 = por %p199, %p200
      %s203 = sadd.s32 %s202, 1
      %p206 = scmp.eq.s32.totalorder %s21, 1
      %p207 = scmp.ne.s32.totalorder %s202, %s204
      %p208 = scmp.eq.s32.totalorder %s21, 0
      %p209 = por %p207, %p208
      %p210 = scmp.ne.s32.totalorder %s202, %s204
      %p211 = scmp.eq.s32.totalorder %s26, 1
      %p212 = por %p210, %p211
      %p213 = scmp.ne.s32.totalorder %s204, %s205
      %p214 = scmp.eq.s32.totalorder %s26, 0
      %p215 = por %p213, %p214
      %p216 = scmp.ne.s32.totalorder %s204, %s205
      %p217 = scmp.eq.s32.totalorder %s27, 1
      %p218 = por %p216, %p217
      %p220 = scmp.ne.s32.totalorder %s205, %s219
      %p221 = scmp.eq.s32.totalorder %s27, 0
      %p222 = por %p220, %p221
      %s223 = ssub.s32 %s21, %s28
      %p224 = scmp.eq.s32.totalorder %s223, 0
      %s226 = sadd.s32 %s225, 1
      %s227 = scalar_select %p224, %s225, %s226
      %p230 = pneg %p224
      %p231 = scmp.eq.s32.totalorder %s21, 1
      %p232 = por %p230, %p231
      %p233 = scmp.ne.s32.totalorder %s225, %s228
      %p234 = scmp.eq.s32.totalorder %s21, 0
      %p235 = por %p233, %p234
      %p236 = scmp.ne.s32.totalorder %s225, %s228
      %p237 = scmp.eq.s32.totalorder %s26, 1
      %p238 = por %p236, %p237
      %p239 = scmp.ne.s32.totalorder %s228, %s229
      %p240 = scmp.eq.s32.totalorder %s26, 0
      %p241 = por %p239, %p240
      %p242 = scmp.ne.s32.totalorder %s228, %s229
      %p243 = scmp.eq.s32.totalorder %s27, 1
      %p244 = por %p242, %p243
      %p246 = scmp.ne.s32.totalorder %s229, %s245
      %p247 = scmp.eq.s32.totalorder %s27, 0
      %p248 = por %p246, %p247
      %s249 = ssub.s32 %s21, %s28
      %p250 = scmp.eq.s32.totalorder %s249, 0
      %s252 = sadd.s32 %s251, 1
      %s253 = scalar_select %p250, %s251, %s252
      %p256 = pneg %p250
      %p257 = scmp.eq.s32.totalorder %s21, 1
      %p258 = por %p256, %p257
      %p259 = scmp.ne.s32.totalorder %s251, %s254
      %p260 = scmp.eq.s32.totalorder %s21, 0
      %p261 = por %p259, %p260
      %p262 = scmp.ne.s32.totalorder %s251, %s254
      %p263 = scmp.eq.s32.totalorder %s26, 1
      %p264 = por %p262, %p263
      %p265 = scmp.ne.s32.totalorder %s254, %s255
      %p266 = scmp.eq.s32.totalorder %s26, 0
      %p267 = por %p265, %p266
      %p268 = scmp.ne.s32.totalorder %s254, %s255
      %p269 = scmp.eq.s32.totalorder %s27, 1
      %p270 = por %p268, %p269
      %p272 = scmp.ne.s32.totalorder %s255, %s271
      %p273 = scmp.eq.s32.totalorder %s27, 0
      %p274 = por %p272, %p273
      %p275 = scmp.le.s32.totalorder 1, %s21
      %p276 = scmp.lt.s32.totalorder %s21, 3
      %p277 = pnand %p275, %p276
      %p278 = pneg %p277
      // Predicated region
      $region9: #{encoder_layer_forward.2} parent=5 // pred_check
        _
      $region10: #{encoder_layer_forward.2} parent=5 // pred_check_branch
        %280 = sbr.rel (%p277) target = $region12
      $region11: #{encoder_layer_forward.2} parent=5 // pred_region
        %s281 = ssub.s32 %s21, 1
        // Predicated region
        $region13: #{encoder_layer_forward.2} parent=11 // pred_check
          %p282 = pneg %p68
        $region14: #{encoder_layer_forward.2} parent=11 // pred_check_branch
          %284 = sbr.rel (%p282) target = $region16
        $region15: #{encoder_layer_forward.2} parent=11 // pred_region
          %s286 = ssub.s32 4096, 4096
          %287 = vsyncadd [#allocation7], %s286
          %s288 = sshll.u32 [#allocation6], 4
          %s289 = int_to_ptr.vmem [resolvable:$true] %s288
          %294 = dma.hbm_to_vmem [thread:$0]  %s1, 4096, %s289, [#allocation7], 256, 256, 16
        $region16: #{encoder_layer_forward.2} parent=11 // pred_fallthru
          _
        // Predicated region
        $region17: #{encoder_layer_forward.2} parent=11 // pred_check
          %p295 = pneg %p89
        $region18: #{encoder_layer_forward.2} parent=11 // pred_check_branch
          %297 = sbr.rel (%p295) target = $region20
        $region19: #{encoder_layer_forward.2} parent=11 // pred_region
          _
        $region20: #{encoder_layer_forward.2} parent=11 // pred_fallthru
          _
        // Predicated region
        $region21: #{encoder_layer_forward.2} parent=11 // pred_check
          %p298 = pneg %p110
        $region22: #{encoder_layer_forward.2} parent=11 // pred_check_branch
          %300 = sbr.rel (%p298) target = $region24
        $region23: #{encoder_layer_forward.2} parent=11 // pred_region
          %s302 = ssub.s32 2048, 2048
          %303 = vsyncadd [#allocation7], %s302
          %s304 = sshll.u32 [#allocation8], 4
          %s305 = int_to_ptr.vmem [resolvable:$true] %s304
          %310 = dma.hbm_to_vmem [thread:$0]  %s3, 2048, %s305, [#allocation7], 64, 64, 4
        $region24: #{encoder_layer_forward.2} parent=11 // pred_fallthru
          _
        // Predicated region
        $region25: #{encoder_layer_forward.2} parent=11 // pred_check
          %p311 = pneg %p131
        $region26: #{encoder_layer_forward.2} parent=11 // pred_check_branch
          %313 = sbr.rel (%p311) target = $region28
        $region27: #{encoder_layer_forward.2} parent=11 // pred_region
          _
        $region28: #{encoder_layer_forward.2} parent=11 // pred_fallthru
          _
        // Predicated region
        $region29: #{encoder_layer_forward.2} parent=11 // pred_check
          %p314 = pneg %p152
        $region30: #{encoder_layer_forward.2} parent=11 // pred_check_branch
          %316 = sbr.rel (%p314) target = $region32
        $region31: #{encoder_layer_forward.2} parent=11 // pred_region
          _
        $region32: #{encoder_layer_forward.2} parent=11 // pred_fallthru
          _
        // Predicated region
        $region33: #{encoder_layer_forward.2} parent=11 // pred_check
          %p317 = pneg %p173
        $region34: #{encoder_layer_forward.2} parent=11 // pred_check_branch
          %319 = sbr.rel (%p317) target = $region36
        $region35: #{encoder_layer_forward.2} parent=11 // pred_region
          _
        $region36: #{encoder_layer_forward.2} parent=11 // pred_fallthru
          _
        // Predicated region
        $region37: #{encoder_layer_forward.2} parent=11 // pred_check
          %p320 = pneg %p194
        $region38: #{encoder_layer_forward.2} parent=11 // pred_check_branch
          %322 = sbr.rel (%p320) target = $region40
        $region39: #{encoder_layer_forward.2} parent=11 // pred_region
          _
        $region40: #{encoder_layer_forward.2} parent=11 // pred_fallthru
          _
        // Predicated region
        $region41: #{encoder_layer_forward.2} parent=11 // pred_check
          %p323 = pneg %p215
        $region42: #{encoder_layer_forward.2} parent=11 // pred_check_branch
          %325 = sbr.rel (%p323) target = $region44
        $region43: #{encoder_layer_forward.2} parent=11 // pred_region
          _
        $region44: #{encoder_layer_forward.2} parent=11 // pred_fallthru
          _
      $region12: #{encoder_layer_forward.2} parent=5 // pred_fallthru
        _
      %p326 = scmp.lt.s32.totalorder %s21, 2
      // Predicated region
      $region45: #{encoder_layer_forward.2} parent=5 // pred_check
        %p327 = pneg %p326
      $region46: #{encoder_layer_forward.2} parent=5 // pred_check_branch
        %329 = sbr.rel (%p327) target = $region48
      $region47: #{encoder_layer_forward.2} parent=5 // pred_region
        // Predicated region
        $region49: #{encoder_layer_forward.2} parent=47 // pred_check
          %p330 = pneg %p41
        $region50: #{encoder_layer_forward.2} parent=47 // pred_check_branch
          %332 = sbr.rel (%p330) target = $region52
        $region51: #{encoder_layer_forward.2} parent=47 // pred_region
          %s333 = sand.u32 %s31, 1
          %s334 = scalar_lea.sflag [#allocation5], %s333
          %s335 = sand.u32 %s31, 1
          %s336 = smul.addr %s335, 8
          %s337 = scalar_lea.vmem [#allocation4], %s336
          %s339 = ssub.s32 128, 128
          %340 = vsyncadd %s334, %s339
          %s341 = smul.addr %s21, 128
          %s342 = scalar_lea.hbm %s0, %s341
          %s344 = sshll.u32 %s337, 4
          %s345 = int_to_ptr.vmem [resolvable:$true] %s344
          %347 = dma.hbm_to_vmem [thread:$0]  %s342, 128, %s345, %s334
        $region52: #{encoder_layer_forward.2} parent=47 // pred_fallthru
          _
      $region48: #{encoder_layer_forward.2} parent=5 // pred_fallthru
        _
      %p348 = scmp.le.s32.totalorder 1, %s21
      %p349 = scmp.lt.s32.totalorder %s21, 3
      %p350 = pnand %p348, %p349
      %p351 = pneg %p350
      // Predicated region
      $region53: #{encoder_layer_forward.2} parent=5 // pred_check
        _
      $region54: #{encoder_layer_forward.2} parent=5 // pred_check_branch
        %353 = sbr.rel (%p350) target = $region56
      $region55: #{encoder_layer_forward.2} parent=5 // pred_region
        %s354 = ssub.s32 %s21, 1
        %s355 = sand.u32 %s34, 1
        %s356 = scalar_lea.sflag [#allocation5], %s355
        %s357 = sand.u32 %s34, 1
        %s358 = smul.addr %s357, 8
        %s359 = scalar_lea.vmem [#allocation4], %s358
        // Predicated region
        $region57: #{encoder_layer_forward.2} parent=55 // pred_check
          %p360 = pneg %p47
        $region58: #{encoder_layer_forward.2} parent=55 // pred_check_branch
          %362 = sbr.rel (%p360) target = $region60
        $region59: #{encoder_layer_forward.2} parent=55 // pred_region
          %363 = dma.done %s356, 128
        $region60: #{encoder_layer_forward.2} parent=55 // pred_fallthru
          _
        // Predicated region
        $region61: #{encoder_layer_forward.2} parent=55 // pred_check
          %p364 = pneg %p68
        $region62: #{encoder_layer_forward.2} parent=55 // pred_check_branch
          %366 = sbr.rel (%p364) target = $region64
        $region63: #{encoder_layer_forward.2} parent=55 // pred_region
          %367 = dma.done [#allocation7], 4096
        $region64: #{encoder_layer_forward.2} parent=55 // pred_fallthru
          _
        // Predicated region
        $region65: #{encoder_layer_forward.2} parent=55 // pred_check
          %p368 = pneg %p110
        $region66: #{encoder_layer_forward.2} parent=55 // pred_check_branch
          %370 = sbr.rel (%p368) target = $region68
        $region67: #{encoder_layer_forward.2} parent=55 // pred_region
          %371 = dma.done [#allocation7], 2048
        $region68: #{encoder_layer_forward.2} parent=55 // pred_fallthru
          _
        %s372 = sand.u32 %s34, 1
        %s373 = scalar_lea.sflag [#allocation5], %s372
        %s374 = sand.u32 %s34, 1
        %s375 = smul.addr %s374, 8
        %s376 = scalar_lea.vmem [#allocation4], %s375
        %p377 = pneg %p47
        %p378 = pneg %p44
        %p379 = pneg %p68
        %p380 = pneg %p65
        %p381 = pneg %p89
        %p382 = pneg %p86
        %p383 = pneg %p110
        %p384 = pneg %p107
        %p385 = pneg %p131
        %p386 = pneg %p128
        %p387 = pneg %p152
        %p388 = pneg %p149
        %p389 = pneg %p173
        %p390 = pneg %p170
        %p391 = pneg %p194
        %p392 = pneg %p191
        %p393 = pneg %p215
        %p394 = pneg %p212
        %p395 = pneg %p241
        %p396 = pneg %p238
        %p397 = scmp.lt.s32.totalorder %s26, 1
        %s398 = scalar_select %p397, %s26, 1
        %s399 = smul.addr %s398, 8
        %s400 = scalar_lea.vmem %s9, %s399
        %p401 = pneg %p267
        %p402 = pneg %p264
        %p403 = scmp.lt.s32.totalorder %s26, 1
        %s404 = scalar_select %p403, %s26, 1
        %s405 = scalar_lea.vmem %s10, %s404
        %p406 = scmp.lt.s32.totalorder %s26, 1
        %s407 = scalar_select %p406, %s26, 1
        %s408 = smul.addr %s407, 8
        %s409 = scalar_lea.vmem %s9, %s408
        %p410 = scmp.lt.s32.totalorder %s26, 1
        %s411 = scalar_select %p410, %s26, 1
        %s412 = scalar_lea.vmem %s10, %s411
        %v414 = vld [vmem:[%s359] sm:$0xff]
        %v415 = vpack.c.bf16 %v414, %v414
        %v416 = vld [vmem:[#allocation6] sm:$0xff]
        %v417 = vld [vmem:[#allocation6 + $0x8] sm:$0xff]
        %v418 = vld [vmem:[#allocation6 + $0x10] sm:$0xff]
        %v419 = vld [vmem:[#allocation6 + $0x18] sm:$0xff]
        %v420 = vld [vmem:[#allocation6 + $0x20] sm:$0xff]
        %v421 = vld [vmem:[#allocation6 + $0x28] sm:$0xff]
        %v422 = vld [vmem:[#allocation6 + $0x30] sm:$0xff]
        %v423 = vld [vmem:[#allocation6 + $0x38] sm:$0xff]
        %v424 = vld [vmem:[#allocation6 + $0x40] sm:$0xff]
        %v425 = vld [vmem:[#allocation6 + $0x48] sm:$0xff]
        %v426 = vld [vmem:[#allocation6 + $0x50] sm:$0xff]
        %v427 = vld [vmem:[#allocation6 + $0x58] sm:$0xff]
        %v428 = vld [vmem:[#allocation6 + $0x60] sm:$0xff]
        %v429 = vld [vmem:[#allocation6 + $0x68] sm:$0xff]
        %v430 = vld [vmem:[#allocation6 + $0x70] sm:$0xff]
        %v431 = vld [vmem:[#allocation6 + $0x78] sm:$0xff]
        %v432 = vld [vmem:[#allocation6 + $0x80] sm:$0xff]
        %v433 = vld [vmem:[#allocation6 + $0x88] sm:$0xff]
        %v434 = vld [vmem:[#allocation6 + $0x90] sm:$0xff]
        %v435 = vld [vmem:[#allocation6 + $0x98] sm:$0xff]
        %v436 = vld [vmem:[#allocation6 + $0xa0] sm:$0xff]
        %v437 = vld [vmem:[#allocation6 + $0xa8] sm:$0xff]
        %v438 = vld [vmem:[#allocation6 + $0xb0] sm:$0xff]
        %v439 = vld [vmem:[#allocation6 + $0xb8] sm:$0xff]
        %v440 = vld [vmem:[#allocation6 + $0xc0] sm:$0xff]
        %v441 = vld [vmem:[#allocation6 + $0xc8] sm:$0xff]
        %v442 = vld [vmem:[#allocation6 + $0xd0] sm:$0xff]
        %v443 = vld [vmem:[#allocation6 + $0xd8] sm:$0xff]
        %v444 = vld [vmem:[#allocation6 + $0xe0] sm:$0xff]
        %v445 = vld [vmem:[#allocation6 + $0xe8] sm:$0xff]
        %v446 = vld [vmem:[#allocation6 + $0xf0] sm:$0xff]
        %v447 = vld [vmem:[#allocation6 + $0xf8] sm:$0xff]
        %v448 = vld [vmem:[%s2] sm:$0xf]
        %v450 = vlaneseq
        %v451 = vshrl.u32 %v450, 7
        %v452 = vsub.s32 0, %v451
        %v453 = vrot.slane %v448, %v452
        %v454 = vlaneseq
        %v455 = vshrl.u32 %v454, 7
        %v456 = vsub.s32 1, %v455
        %v457 = vrot.slane %v448, %v456
        %v458 = vlaneseq
        %v459 = vshrl.u32 %v458, 7
        %v460 = vsub.s32 2, %v459
        %v461 = vrot.slane %v448, %v460
        %v462 = vlaneseq
        %v463 = vshrl.u32 %v462, 7
        %v464 = vsub.s32 3, %v463
        %v465 = vrot.slane %v448, %v464
        %v502 = vunpack.c.l.b16 %v416
        %v503 = vunpack.c.h.b16 %v416
        %v504 = vunpack.c.l.b16 %v417
        %v505 = vunpack.c.h.b16 %v417
        %v506 = vunpack.c.l.b16 %v418
        %v507 = vunpack.c.h.b16 %v418
        %v508 = vunpack.c.l.b16 %v419
        %v509 = vunpack.c.h.b16 %v419
        %v510 = vunpack.c.l.b16 %v420
        %v511 = vunpack.c.h.b16 %v420
        %v512 = vunpack.c.l.b16 %v421
        %v513 = vunpack.c.h.b16 %v421
        %v514 = vunpack.c.l.b16 %v422
        %v515 = vunpack.c.h.b16 %v422
        %v516 = vunpack.c.l.b16 %v423
        %v517 = vunpack.c.h.b16 %v423
        %v518 = vunpack.c.l.b16 %v424
        %v519 = vunpack.c.h.b16 %v424
        %v520 = vunpack.c.l.b16 %v425
        %v521 = vunpack.c.h.b16 %v425
        %v522 = vunpack.c.l.b16 %v426
        %v523 = vunpack.c.h.b16 %v426
        %v524 = vunpack.c.l.b16 %v427
        %v525 = vunpack.c.h.b16 %v427
        %v526 = vunpack.c.l.b16 %v428
        %v527 = vunpack.c.h.b16 %v428
        %v528 = vunpack.c.l.b16 %v429
        %v529 = vunpack.c.h.b16 %v429
        %v530 = vunpack.c.l.b16 %v430
        %v531 = vunpack.c.h.b16 %v430
        %v532 = vunpack.c.l.b16 %v431
        %v533 = vunpack.c.h.b16 %v431
        %v534 = vunpack.c.l.b16 %v432
        %v535 = vunpack.c.h.b16 %v432
        %v536 = vunpack.c.l.b16 %v433
        %v537 = vunpack.c.h.b16 %v433
        %v538 = vunpack.c.l.b16 %v434
        %v539 = vunpack.c.h.b16 %v434
        %v540 = vunpack.c.l.b16 %v435
        %v541 = vunpack.c.h.b16 %v435
        %v542 = vunpack.c.l.b16 %v436
        %v543 = vunpack.c.h.b16 %v436
        %v544 = vunpack.c.l.b16 %v437
        %v545 = vunpack.c.h.b16 %v437
        %v546 = vunpack.c.l.b16 %v438
        %v547 = vunpack.c.h.b16 %v438
        %v548 = vunpack.c.l.b16 %v439
        %v549 = vunpack.c.h.b16 %v439
        %v550 = vunpack.c.l.b16 %v440
        %v551 = vunpack.c.h.b16 %v440
        %v552 = vunpack.c.l.b16 %v441
        %v553 = vunpack.c.h.b16 %v441
        %v554 = vunpack.c.l.b16 %v442
        %v555 = vunpack.c.h.b16 %v442
        %v556 = vunpack.c.l.b16 %v443
        %v557 = vunpack.c.h.b16 %v443
        %v558 = vunpack.c.l.b16 %v444
        %v559 = vunpack.c.h.b16 %v444
        %v560 = vunpack.c.l.b16 %v445
        %v561 = vunpack.c.h.b16 %v445
        %v562 = vunpack.c.l.b16 %v446
        %v563 = vunpack.c.h.b16 %v446
        %v564 = vunpack.c.l.b16 %v447
        %v565 = vunpack.c.h.b16 %v447
        %v566 = vpack.c.b16 %v506, %v502
        %v567 = vpack.c.b16 %v507, %v503
        %v568 = vpack.c.b16 %v508, %v504
        %v569 = vpack.c.b16 %v509, %v505
        %v570 = vpack.c.b16 %v514, %v510
        %v571 = vpack.c.b16 %v515, %v511
        %v572 = vpack.c.b16 %v516, %v512
        %v573 = vpack.c.b16 %v517, %v513
        %v574 = vpack.c.b16 %v522, %v518
        %v575 = vpack.c.b16 %v523, %v519
        %v576 = vpack.c.b16 %v524, %v520
        %v577 = vpack.c.b16 %v525, %v521
        %v578 = vpack.c.b16 %v530, %v526
        %v579 = vpack.c.b16 %v531, %v527
        %v580 = vpack.c.b16 %v532, %v528
        %v581 = vpack.c.b16 %v533, %v529
        %v582 = vpack.c.b16 %v538, %v534
        %v583 = vpack.c.b16 %v539, %v535
        %v584 = vpack.c.b16 %v540, %v536
        %v585 = vpack.c.b16 %v541, %v537
        %v586 = vpack.c.b16 %v546, %v542
        %v587 = vpack.c.b16 %v547, %v543
        %v588 = vpack.c.b16 %v548, %v544
        %v589 = vpack.c.b16 %v549, %v545
        %v590 = vpack.c.b16 %v554, %v550
        %v591 = vpack.c.b16 %v555, %v551
        %v592 = vpack.c.b16 %v556, %v552
        %v593 = vpack.c.b16 %v557, %v553
        %v594 = vpack.c.b16 %v562, %v558
        %v595 = vpack.c.b16 %v563, %v559
        %v596 = vpack.c.b16 %v564, %v560
        %v597 = vpack.c.b16 %v565, %v561
        %630 = vmatprep.subr.bf16.mxu0 %v595
        %631 = vmatpush1.bf16.msra.mxu0 %v594
        %632 = vmatprep.subr.bf16.mxu0 %v591
        %633 = vmatpush1.bf16.msra.mxu0 %v590
        %634 = vmatprep.subr.bf16.mxu0 %v587
        %635 = vmatpush1.bf16.msra.mxu0 %v586
        %636 = vmatprep.subr.bf16.mxu0 %v583
        %637 = vmatpush1.bf16.msra.mxu0 %v582
        %638 = vmatprep.subr.bf16.mxu0 %v579
        %639 = vmatpush1.bf16.msra.mxu0 %v578
        %640 = vmatprep.subr.bf16.mxu0 %v575
        %641 = vmatpush1.bf16.msra.mxu0 %v574
        %642 = vmatprep.subr.bf16.mxu0 %v571
        %643 = vmatpush1.bf16.msra.mxu0 %v570
        %644 = vmatprep.subr.bf16.mxu0 %v567
        %645 = vmatpush1.bf16.msra.mxu0 %v566
        %646 = vmatprep.subr.bf16.mxu0 0
        %647 = vmatpush2.bf16.msra.mxu0 0
        %648 = vmatprep.subr.bf16.mxu0 0
        %649 = vmatpush2.bf16.msra.mxu0 0
        %650 = vmatprep.subr.bf16.mxu0 0
        %651 = vmatpush2.bf16.msra.mxu0 0
        %652 = vmatprep.subr.bf16.mxu0 0
        %653 = vmatpush2.bf16.msra.mxu0 0
        %654 = vmatprep.subr.bf16.mxu0 0
        %655 = vmatpush2.bf16.msra.mxu0 0
        %656 = vmatprep.subr.bf16.mxu0 0
        %657 = vmatpush2.bf16.msra.mxu0 0
        %658 = vmatprep.subr.bf16.mxu0 0
        %659 = vmatpush2.bf16.msra.mxu0 0
        %660 = vmatprep.subr.bf16.mxu0 0
        %661 = vmatpush2.bf16.msra.mxu0 0
        %662 = vmatprep.mubr.bf16.mxu0 0
        %663 = vmatmul.mubr.bf16.gmra.mxu0 %v415
        %v664 = vpop.f32.mrf.mxu0
        %v665 = vadd.f32 %v453, %v664
        %v666 = vpop.f32.mrf.mxu0
        %v667 = vadd.f32 %v457, %v666
        %v668 = vpop.f32.mrf.mxu0
        %v669 = vpop.f32.mrf.mxu0
        %670 = vdwg.mxu0
        %671 = vmatprep.subr.bf16.mxu0 %v597
        %672 = vmatpush1.bf16.msra.mxu0 %v596
        %673 = vmatprep.subr.bf16.mxu0 %v593
        %674 = vmatpush1.bf16.msra.mxu0 %v592
        %675 = vmatprep.subr.bf16.mxu0 %v589
        %676 = vmatpush1.bf16.msra.mxu0 %v588
        %677 = vmatprep.subr.bf16.mxu0 %v585
        %678 = vmatpush1.bf16.msra.mxu0 %v584
        %679 = vmatprep.subr.bf16.mxu0 %v581
        %680 = vmatpush1.bf16.msra.mxu0 %v580
        %681 = vmatprep.subr.bf16.mxu0 %v577
        %682 = vmatpush1.bf16.msra.mxu0 %v576
        %683 = vmatprep.subr.bf16.mxu0 %v573
        %684 = vmatpush1.bf16.msra.mxu0 %v572
        %685 = vmatprep.subr.bf16.mxu0 %v569
        %686 = vmatpush1.bf16.msra.mxu0 %v568
        %687 = vmatprep.subr.bf16.mxu0 0
        %688 = vmatpush2.bf16.msra.mxu0 0
        %689 = vmatprep.subr.bf16.mxu0 0
        %690 = vmatpush2.bf16.msra.mxu0 0
        %691 = vmatprep.subr.bf16.mxu0 0
        %692 = vmatpush2.bf16.msra.mxu0 0
        %693 = vmatprep.subr.bf16.mxu0 0
        %694 = vmatpush2.bf16.msra.mxu0 0
        %695 = vmatprep.subr.bf16.mxu0 0
        %696 = vmatpush2.bf16.msra.mxu0 0
        %697 = vmatprep.subr.bf16.mxu0 0
        %698 = vmatpush2.bf16.msra.mxu0 0
        %699 = vmatprep.subr.bf16.mxu0 0
        %700 = vmatpush2.bf16.msra.mxu0 0
        %701 = vmatprep.subr.bf16.mxu0 0
        %702 = vmatpush2.bf16.msra.mxu0 0
        %703 = vmatprep.mubr.bf16.mxu0 0
        %704 = vmatmul.mubr.bf16.gmra.mxu0 %v415
        %v705 = vpop.f32.mrf.mxu0
        %v706 = vadd.f32 %v461, %v705
        %v707 = vpop.f32.mrf.mxu0
        %v708 = vadd.f32 %v465, %v707
        %v709 = vpop.f32.mrf.mxu0
        %v710 = vpop.f32.mrf.mxu0
        %711 = vdwg.mxu0
        %712 = vst [vmem:[#allocation2] sm:$0xff] %v665
        %713 = vst [vmem:[#allocation2 + $0x8] sm:$0xff] %v667
        %714 = vst [vmem:[#allocation2 + $0x10] sm:$0xff] %v706
        %715 = vst [vmem:[#allocation2 + $0x18] sm:$0xff] %v708
        %v716 = vld [vmem:[%s5] sm:$0x1]
        %v717 = vld [vmem:[%s6] sm:$0x1]
        %s718 = smul.u32 0, 4
        %s719 = smul.addr %s718, 8
        %s720 = scalar_lea.vmem [#allocation2], %s719
        %v721 = vld [vmem:[%s720] sm:$0xff]
        %v722 = vld [vmem:[%s720 + $0x8] sm:$0xff]
        %v723 = vld [vmem:[%s720 + $0x10] sm:$0xff]
        %v724 = vld [vmem:[%s720 + $0x18] sm:$0xff]
        %v725 = vxor.u32 %v722, 2147483648
        %v726 = vmul.f32 %v725, 1.442695
        %v727 = vpow.pop %v726
        %v728 = vadd.f32 %v727, 1.0
        %v729 = vrcp.pop %v728
        %v730 = vmul.f32 1.0, %v729
        %v731 = vmul.f32 %v722, %v730
        %v732 = vxor.u32 %v724, 2147483648
        %v733 = vmul.f32 %v732, 1.442695
        %v734 = vpow.pop %v733
        %v735 = vadd.f32 %v734, 1.0
        %v736 = vrcp.pop %v735
        %v737 = vmul.f32 1.0, %v736
        %v738 = vmul.f32 %v724, %v737
        %v739 = vmul.f32 %v716, 0.0
        %v740 = vadd.f32 %v739, %v721
        %v741 = vmul.f32 %v740, %v731
        %v742 = vmul.f32 %v717, 0.0
        %v744 = vcombine.high %v723, %v723
        %v746 = vunpack.c.l.s4 1966171168
        %v747 = vunpack.c.0.s8 %v746
        %v748 = vlaneseq
        %v749 = vshrl.u32 %v748, 7
        %v750 = vsub.s32 %v747, %v749
        %v751 = vrot.slane %v723, %v750
        %v753 = vunpack.c.l.s4 1966171168
        %v754 = vunpack.c.0.s8 %v753
        %v755 = vlaneseq
        %v756 = vshrl.u32 %v755, 7
        %v757 = vsub.s32 %v754, %v756
        %v758 = vrot.slane %v744, %v757
        %v759 = vcombine.high %v758, %v758
        %v761 = vunpack.c.l.s4 1966171168
        %v762 = vunpack.c.0.s8 %v761
        %v763 = vlaneseq
        %v764 = vshrl.u32 %v763, 7
        %v765 = vsub.s32 %v762, %v764
        %v766 = vrot.slane %v751, %v765
        %v768 = vunpack.c.l.s4 1966171168
        %v769 = vunpack.c.0.s8 %v768
        %v770 = vlaneseq
        %v771 = vshrl.u32 %v770, 7
        %v772 = vsub.s32 %v769, %v771
        %v773 = vrot.slane %v759, %v772
        %v774 = vcombine.high %v773, %v773
        %v776 = vadd.f32 %v742, %v774
        %v778 = vcombine.high %v738, %v738
        %v780 = vunpack.c.l.s4 1966171168
        %v781 = vunpack.c.0.s8 %v780
        %v782 = vlaneseq
        %v783 = vshrl.u32 %v782, 7
        %v784 = vsub.s32 %v781, %v783
        %v785 = vrot.slane %v738, %v784
        %v787 = vunpack.c.l.s4 1966171168
        %v788 = vunpack.c.0.s8 %v787
        %v789 = vlaneseq
        %v790 = vshrl.u32 %v789, 7
        %v791 = vsub.s32 %v788, %v790
        %v792 = vrot.slane %v778, %v791
        %v793 = vcombine.high %v792, %v792
        %v795 = vunpack.c.l.s4 1966171168
        %v796 = vunpack.c.0.s8 %v795
        %v797 = vlaneseq
        %v798 = vshrl.u32 %v797, 7
        %v799 = vsub.s32 %v796, %v798
        %v800 = vrot.slane %v785, %v799
        %v802 = vunpack.c.l.s4 1966171168
        %v803 = vunpack.c.0.s8 %v802
        %v804 = vlaneseq
        %v805 = vshrl.u32 %v804, 7
        %v806 = vsub.s32 %v803, %v805
        %v807 = vrot.slane %v793, %v806
        %v808 = vcombine.high %v807, %v807
        %v810 = vmul.f32 %v776, %v808
        %v811 = vmul.f32 %v716, %v740
        %v814 = vunpack.c.l.s4 1966171168
        %v815 = vunpack.c.0.s8 %v814
        %v816 = vlaneseq
        %v817 = vshrl.u32 %v816, 7
        %v818 = vsub.s32 %v815, %v817
        %v819 = vrot.slane %v721, %v818
        %v820 = vcombine.high %v819, %v819
        %v822 = vunpack.c.l.s4 1966171168
        %v823 = vunpack.c.0.s8 %v822
        %v824 = vlaneseq
        %v825 = vshrl.u32 %v824, 7
        %v826 = vsub.s32 %v823, %v825
        %v827 = vrot.slane %v819, %v826
        %v829 = vunpack.c.l.s4 1966171168
        %v830 = vunpack.c.0.s8 %v829
        %v831 = vlaneseq
        %v832 = vshrl.u32 %v831, 7
        %v833 = vsub.s32 %v830, %v832
        %v834 = vrot.slane %v820, %v833
        %v836 = vadd.f32 %v811, %v834
        %v839 = vunpack.c.l.s4 1966171168
        %v840 = vunpack.c.0.s8 %v839
        %v841 = vlaneseq
        %v842 = vshrl.u32 %v841, 7
        %v843 = vsub.s32 %v840, %v842
        %v844 = vrot.slane %v731, %v843
        %v845 = vcombine.high %v844, %v844
        %v847 = vunpack.c.l.s4 1966171168
        %v848 = vunpack.c.0.s8 %v847
        %v849 = vlaneseq
        %v850 = vshrl.u32 %v849, 7
        %v851 = vsub.s32 %v848, %v850
        %v852 = vrot.slane %v844, %v851
        %v854 = vunpack.c.l.s4 1966171168
        %v855 = vunpack.c.0.s8 %v854
        %v856 = vlaneseq
        %v857 = vshrl.u32 %v856, 7
        %v858 = vsub.s32 %v855, %v857
        %v859 = vrot.slane %v845, %v858
        %v861 = vmul.f32 %v836, %v859
        %v862 = vmul.f32 %v717, %v776
        %v864 = vunpack.c.l.s4 1966171168
        %v865 = vunpack.c.0.s8 %v864
        %v866 = vlaneseq
        %v867 = vshrl.u32 %v866, 7
        %v868 = vsub.s32 %v865, %v867
        %v869 = vrot.slane %v758, %v868
        %v870 = vcombine.high %v869, %v869
        %v872 = vadd.f32 %v862, %v870
        %v874 = vunpack.c.l.s4 1966171168
        %v875 = vunpack.c.0.s8 %v874
        %v876 = vlaneseq
        %v877 = vshrl.u32 %v876, 7
        %v878 = vsub.s32 %v875, %v877
        %v879 = vrot.slane %v792, %v878
        %v880 = vcombine.high %v879, %v879
        %v882 = vmul.f32 %v872, %v880
        %v883 = vmul.f32 %v716, %v836
        %v884 = vcombine.high %v827, %v827
        %v886 = vadd.f32 %v883, %v884
        %v887 = vcombine.high %v852, %v852
        %v889 = vmul.f32 %v886, %v887
        %v890 = vmul.f32 %v717, %v872
        %v892 = vadd.f32 %v890, %v773
        %v894 = vmul.f32 %v892, %v807
        %v895 = vmul.f32 %v716, %v886
        %v896 = vcombine.high %v834, %v834
        %v898 = vadd.f32 %v895, %v896
        %v899 = vcombine.high %v859, %v859
        %v901 = vmul.f32 %v898, %v899
        %v902 = vmul.f32 %v717, %v892
        %v904 = vadd.f32 %v902, %v869
        %v906 = vmul.f32 %v904, %v879
        %v907 = vmul.f32 %v716, %v898
        %v908 = vcombine.high %v721, %v721
        %v910 = vunpack.c.l.s4 1966171168
        %v911 = vunpack.c.0.s8 %v910
        %v912 = vlaneseq
        %v913 = vshrl.u32 %v912, 7
        %v914 = vsub.s32 %v911, %v913
        %v915 = vrot.slane %v908, %v914
        %v917 = vunpack.c.l.s4 1966171168
        %v918 = vunpack.c.0.s8 %v917
        %v919 = vlaneseq
        %v920 = vshrl.u32 %v919, 7
        %v921 = vsub.s32 %v918, %v920
        %v922 = vrot.slane %v915, %v921
        %v924 = vadd.f32 %v907, %v922
        %v925 = vcombine.high %v731, %v731
        %v927 = vunpack.c.l.s4 1966171168
        %v928 = vunpack.c.0.s8 %v927
        %v929 = vlaneseq
        %v930 = vshrl.u32 %v929, 7
        %v931 = vsub.s32 %v928, %v930
        %v932 = vrot.slane %v925, %v931
        %v934 = vunpack.c.l.s4 1966171168
        %v935 = vunpack.c.0.s8 %v934
        %v936 = vlaneseq
        %v937 = vshrl.u32 %v936, 7
        %v938 = vsub.s32 %v935, %v937
        %v939 = vrot.slane %v932, %v938
        %v941 = vmul.f32 %v924, %v939
        %v942 = vmul.f32 %v717, %v904
        %v943 = vcombine.high %v751, %v751
        %v945 = vunpack.c.l.s4 1966171168
        %v946 = vunpack.c.0.s8 %v945
        %v947 = vlaneseq
        %v948 = vshrl.u32 %v947, 7
        %v949 = vsub.s32 %v946, %v948
        %v950 = vrot.slane %v943, %v949
        %v951 = vcombine.high %v950, %v950
        %v953 = vadd.f32 %v942, %v951
        %v954 = vcombine.high %v785, %v785
        %v956 = vunpack.c.l.s4 1966171168
        %v957 = vunpack.c.0.s8 %v956
        %v958 = vlaneseq
        %v959 = vshrl.u32 %v958, 7
        %v960 = vsub.s32 %v957, %v959
        %v961 = vrot.slane %v954, %v960
        %v962 = vcombine.high %v961, %v961
        %v964 = vmul.f32 %v953, %v962
        %v965 = vmul.f32 %v716, %v924
        %v966 = vcombine.high %v915, %v915
        %v968 = vunpack.c.l.s4 1966171168
        %v969 = vunpack.c.0.s8 %v968
        %v970 = vlaneseq
        %v971 = vshrl.u32 %v970, 7
        %v972 = vsub.s32 %v969, %v971
        %v973 = vrot.slane %v966, %v972
        %v975 = vadd.f32 %v965, %v973
        %v976 = vcombine.high %v932, %v932
        %v978 = vunpack.c.l.s4 1966171168
        %v979 = vunpack.c.0.s8 %v978
        %v980 = vlaneseq
        %v981 = vshrl.u32 %v980, 7
        %v982 = vsub.s32 %v979, %v981
        %v983 = vrot.slane %v976, %v982
        %v985 = vmul.f32 %v975, %v983
        %v986 = vmul.f32 %v717, %v953
        %v987 = vcombine.high %v766, %v766
        %v989 = vadd.f32 %v986, %v987
        %v990 = vcombine.high %v800, %v800
        %v992 = vmul.f32 %v989, %v990
        %v993 = vmul.f32 %v716, %v975
        %v994 = vcombine.high %v922, %v922
        %v996 = vadd.f32 %v993, %v994
        %v997 = vcombine.high %v939, %v939
        %v999 = vmul.f32 %v996, %v997
        %v1000 = vmul.f32 %v717, %v989
        %v1002 = vadd.f32 %v1000, %v950
        %v1004 = vmul.f32 %v1002, %v961
        %v1005 = vmul.f32 %v716, %v996
        %v1006 = vcombine.high %v973, %v973
        %v1008 = vadd.f32 %v1005, %v1006
        %v1009 = vcombine.high %v983, %v983
        %v1011 = vmul.f32 %v1008, %v1009
        %v1012 = vmul.f32 %v717, %v1002
        %v1013 = vadd.f32 %v1012, %v723
        %v1014 = vmul.f32 %v1013, %v738
        %v1016 = vlaneseq
        %v1017 = vshrl.u32 %v1016, 7
        %v1018 = vsub.s32 0, %v1017
        %v1019 = vrot.slane %v861, %v1018
        %v1022 = vlaneseq
        %v1023 = vshrl.u32 %v1022, 7
        %v1024 = vsub.s32 0, %v1023
        %v1025 = vrot.slane %v889, %v1024
        %v1028 = vlaneseq
        %v1029 = vshrl.u32 %v1028, 7
        %v1030 = vsub.s32 0, %v1029
        %v1031 = vrot.slane %v901, %v1030
        %v1034 = vlaneseq
        %v1035 = vshrl.u32 %v1034, 7
        %v1036 = vsub.s32 0, %v1035
        %v1037 = vrot.slane %v941, %v1036
        %v1040 = vlaneseq
        %v1041 = vshrl.u32 %v1040, 7
        %v1042 = vsub.s32 0, %v1041
        %v1043 = vrot.slane %v985, %v1042
        %v1046 = vlaneseq
        %v1047 = vshrl.u32 %v1046, 7
        %v1048 = vsub.s32 0, %v1047
        %v1049 = vrot.slane %v999, %v1048
        %v1052 = vlaneseq
        %v1053 = vshrl.u32 %v1052, 7
        %v1054 = vsub.s32 0, %v1053
        %v1055 = vrot.slane %v1011, %v1054
        %vm1057 = vcmask 1040384
        %v1058 = vsel %vm1057, %v741, %v1019
        %vm1059 = vcmask 1041408
        %v1060 = vsel %vm1059, %v1058, %v1025
        %vm1061 = vcmask 1042432
        %v1062 = vsel %vm1061, %v1060, %v1031
        %vm1063 = vcmask 1043456
        %v1064 = vsel %vm1063, %v1062, %v1037
        %vm1065 = vcmask 1044480
        %v1066 = vsel %vm1065, %v1064, %v1043
        %vm1067 = vcmask 1045504
        %v1068 = vsel %vm1067, %v1066, %v1049
        %vm1069 = vcmask 1046528
        %v1070 = vsel %vm1069, %v1068, %v1055
        %s1071 = smul.u32 0, 2
        %s1072 = smul.addr %s1071, 8
        %s1073 = scalar_lea.vmem [#allocation3], %s1072
        %1074 = vst [vmem:[%s1073] sm:$0xff] %v1070
        %v1076 = vlaneseq
        %v1077 = vshrl.u32 %v1076, 7
        %v1078 = vsub.s32 0, %v1077
        %v1079 = vrot.slane %v1004, %v1078
        %v1082 = vlaneseq
        %v1083 = vshrl.u32 %v1082, 7
        %v1084 = vsub.s32 0, %v1083
        %v1085 = vrot.slane %v992, %v1084
        %v1088 = vlaneseq
        %v1089 = vshrl.u32 %v1088, 7
        %v1090 = vsub.s32 0, %v1089
        %v1091 = vrot.slane %v964, %v1090
        %v1094 = vlaneseq
        %v1095 = vshrl.u32 %v1094, 7
        %v1096 = vsub.s32 0, %v1095
        %v1097 = vrot.slane %v906, %v1096
        %v1100 = vlaneseq
        %v1101 = vshrl.u32 %v1100, 7
        %v1102 = vsub.s32 0, %v1101
        %v1103 = vrot.slane %v894, %v1102
        %v1106 = vlaneseq
        %v1107 = vshrl.u32 %v1106, 7
        %v1108 = vsub.s32 0, %v1107
        %v1109 = vrot.slane %v882, %v1108
        %v1112 = vlaneseq
        %v1113 = vshrl.u32 %v1112, 7
        %v1114 = vsub.s32 0, %v1113
        %v1115 = vrot.slane %v810, %v1114
        %v1117 = vsel %vm1057, %v1014, %v1079
        %v1118 = vsel %vm1059, %v1117, %v1085
        %v1119 = vsel %vm1061, %v1118, %v1091
        %v1120 = vsel %vm1063, %v1119, %v1097
        %v1121 = vsel %vm1065, %v1120, %v1103
        %v1122 = vsel %vm1067, %v1121, %v1109
        %v1123 = vsel %vm1069, %v1122, %v1115
        %1124 = vst [vmem:[%s1073 + $0x8] sm:$0xff] %v1123
        %v1125 = vld [vmem:[#allocation3] sm:$0xff]
        %v1126 = vld [vmem:[#allocation3 + $0x8] sm:$0xff]
        %v1127 = vpack.c.bf16 %v1125, %v1125
        %v1128 = vpack.c.bf16 %v1126, %v1126
        %v1129 = vld [vmem:[#allocation8] sm:$0xf]
        %v1130 = vld [vmem:[#allocation8 + $0x4] sm:$0xf]
        %v1131 = vld [vmem:[#allocation8 + $0x8] sm:$0xf]
        %v1132 = vld [vmem:[#allocation8 + $0xc] sm:$0xf]
        %v1133 = vld [vmem:[#allocation8 + $0x10] sm:$0xf]
        %v1134 = vld [vmem:[#allocation8 + $0x14] sm:$0xf]
        %v1135 = vld [vmem:[#allocation8 + $0x18] sm:$0xf]
        %v1136 = vld [vmem:[#allocation8 + $0x1c] sm:$0xf]
        %v1137 = vld [vmem:[#allocation8 + $0x20] sm:$0xf]
        %v1138 = vld [vmem:[#allocation8 + $0x24] sm:$0xf]
        %v1139 = vld [vmem:[#allocation8 + $0x28] sm:$0xf]
        %v1140 = vld [vmem:[#allocation8 + $0x2c] sm:$0xf]
        %v1141 = vld [vmem:[#allocation8 + $0x30] sm:$0xf]
        %v1142 = vld [vmem:[#allocation8 + $0x34] sm:$0xf]
        %v1143 = vld [vmem:[#allocation8 + $0x38] sm:$0xf]
        %v1144 = vld [vmem:[#allocation8 + $0x3c] sm:$0xf]
        %v1145 = vld [vmem:[#allocation8 + $0x40] sm:$0xf]
        %v1146 = vld [vmem:[#allocation8 + $0x44] sm:$0xf]
        %v1147 = vld [vmem:[#allocation8 + $0x48] sm:$0xf]
        %v1148 = vld [vmem:[#allocation8 + $0x4c] sm:$0xf]
        %v1149 = vld [vmem:[#allocation8 + $0x50] sm:$0xf]
        %v1150 = vld [vmem:[#allocation8 + $0x54] sm:$0xf]
        %v1151 = vld [vmem:[#allocation8 + $0x58] sm:$0xf]
        %v1152 = vld [vmem:[#allocation8 + $0x5c] sm:$0xf]
        %v1153 = vld [vmem:[#allocation8 + $0x60] sm:$0xf]
        %v1154 = vld [vmem:[#allocation8 + $0x64] sm:$0xf]
        %v1155 = vld [vmem:[#allocation8 + $0x68] sm:$0xf]
        %v1156 = vld [vmem:[#allocation8 + $0x6c] sm:$0xf]
        %v1157 = vld [vmem:[#allocation8 + $0x70] sm:$0xf]
        %v1158 = vld [vmem:[#allocation8 + $0x74] sm:$0xf]
        %v1159 = vld [vmem:[#allocation8 + $0x78] sm:$0xf]
        %v1160 = vld [vmem:[#allocation8 + $0x7c] sm:$0xf]
        %v1161 = vld [vmem:[%s4] sm:$0x1]
        %v1163 = vlaneseq
        %v1164 = vshrl.u32 %v1163, 7
        %v1165 = vsub.s32 0, %v1164
        %v1166 = vrot.slane %v1161, %v1165
        %v1200 = vunpack.c.l.b16 %v1129
        %v1201 = vunpack.c.l.b16 %v1130
        %v1202 = vunpack.c.l.b16 %v1131
        %v1203 = vunpack.c.l.b16 %v1132
        %v1204 = vunpack.c.l.b16 %v1133
        %v1205 = vunpack.c.l.b16 %v1134
        %v1206 = vunpack.c.l.b16 %v1135
        %v1207 = vunpack.c.l.b16 %v1136
        %v1208 = vunpack.c.l.b16 %v1137
        %v1209 = vunpack.c.l.b16 %v1138
        %v1210 = vunpack.c.l.b16 %v1139
        %v1211 = vunpack.c.l.b16 %v1140
        %v1212 = vunpack.c.l.b16 %v1141
        %v1213 = vunpack.c.l.b16 %v1142
        %v1214 = vunpack.c.l.b16 %v1143
        %v1215 = vunpack.c.l.b16 %v1144
        %v1216 = vunpack.c.l.b16 %v1145
        %v1217 = vunpack.c.l.b16 %v1146
        %v1218 = vunpack.c.l.b16 %v1147
        %v1219 = vunpack.c.l.b16 %v1148
        %v1220 = vunpack.c.l.b16 %v1149
        %v1221 = vunpack.c.l.b16 %v1150
        %v1222 = vunpack.c.l.b16 %v1151
        %v1223 = vunpack.c.l.b16 %v1152
        %v1224 = vunpack.c.l.b16 %v1153
        %v1225 = vunpack.c.l.b16 %v1154
        %v1226 = vunpack.c.l.b16 %v1155
        %v1227 = vunpack.c.l.b16 %v1156
        %v1228 = vunpack.c.l.b16 %v1157
        %v1229 = vunpack.c.l.b16 %v1158
        %v1230 = vunpack.c.l.b16 %v1159
        %v1231 = vunpack.c.l.b16 %v1160
        %v1232 = vpack.c.b16 %v1201, %v1200
        %v1233 = vpack.c.b16 %v1203, %v1202
        %v1234 = vpack.c.b16 %v1205, %v1204
        %v1235 = vpack.c.b16 %v1207, %v1206
        %v1236 = vpack.c.b16 %v1209, %v1208
        %v1237 = vpack.c.b16 %v1211, %v1210
        %v1238 = vpack.c.b16 %v1213, %v1212
        %v1239 = vpack.c.b16 %v1215, %v1214
        %v1240 = vpack.c.b16 %v1217, %v1216
        %v1241 = vpack.c.b16 %v1219, %v1218
        %v1242 = vpack.c.b16 %v1221, %v1220
        %v1243 = vpack.c.b16 %v1223, %v1222
        %v1244 = vpack.c.b16 %v1225, %v1224
        %v1245 = vpack.c.b16 %v1227, %v1226
        %v1246 = vpack.c.b16 %v1229, %v1228
        %v1247 = vpack.c.b16 %v1231, %v1230
        %1264 = vmatprep.subr.bf16.mxu0 0
        %1265 = vmatpush1.bf16.msra.mxu0 %v1239
        %1266 = vmatprep.subr.bf16.mxu0 0
        %1267 = vmatpush1.bf16.msra.mxu0 %v1238
        %1268 = vmatprep.subr.bf16.mxu0 0
        %1269 = vmatpush1.bf16.msra.mxu0 %v1237
        %1270 = vmatprep.subr.bf16.mxu0 0
        %1271 = vmatpush1.bf16.msra.mxu0 %v1236
        %1272 = vmatprep.subr.bf16.mxu0 0
        %1273 = vmatpush1.bf16.msra.mxu0 %v1235
        %1274 = vmatprep.subr.bf16.mxu0 0
        %1275 = vmatpush1.bf16.msra.mxu0 %v1234
        %1276 = vmatprep.subr.bf16.mxu0 0
        %1277 = vmatpush1.bf16.msra.mxu0 %v1233
        %1278 = vmatprep.subr.bf16.mxu0 0
        %1279 = vmatpush1.bf16.msra.mxu0 %v1232
        %1280 = vmatprep.subr.bf16.mxu0 0
        %1281 = vmatpush2.bf16.msra.mxu0 %v1247
        %1282 = vmatprep.subr.bf16.mxu0 0
        %1283 = vmatpush2.bf16.msra.mxu0 %v1246
        %1284 = vmatprep.subr.bf16.mxu0 0
        %1285 = vmatpush2.bf16.msra.mxu0 %v1245
        %1286 = vmatprep.subr.bf16.mxu0 0
        %1287 = vmatpush2.bf16.msra.mxu0 %v1244
        %1288 = vmatprep.subr.bf16.mxu0 0
        %1289 = vmatpush2.bf16.msra.mxu0 %v1243
        %1290 = vmatprep.subr.bf16.mxu0 0
        %1291 = vmatpush2.bf16.msra.mxu0 %v1242
        %1292 = vmatprep.subr.bf16.mxu0 0
        %1293 = vmatpush2.bf16.msra.mxu0 %v1241
        %1294 = vmatprep.subr.bf16.mxu0 0
        %1295 = vmatpush2.bf16.msra.mxu0 %v1240
        %1296 = vmatprep.mubr.bf16.mxu0 %v1128
        %1297 = vmatmul.mubr.bf16.gmra.mxu0 %v1127
        %v1298 = vpop.f32.mrf.mxu0
        %v1299 = vadd.f32 %v1166, %v1298
        %v1300 = vpop.f32.mrf.mxu0
        %v1301 = vpop.f32.mrf.mxu0
        %v1302 = vpop.f32.mrf.mxu0
        %1303 = vdwg.mxu0
        %v1304 = vadd.f32 %v414, %v1299
        %1305 = vadd.xlane.f32.xlu0 %v1304
        %v1306 = vpop.xlane.xlu0 %1305
        %v1307 = vrcp.pop 128.0
        %v1308 = vmul.f32 %v1306, %v1307
        %v1309 = vsub.f32 %v1304, %v1308
        %v1310 = vmul.f32 %v1309, %v1309
        %1311 = vadd.xlane.f32.xlu0 %v1310
        %v1312 = vpop.xlane.xlu0 %1311
        %v1313 = vmul.f32 %v1312, %v1307
        %v1314 = vadd.f32 %v1313, 1e-05
        %v1315 = vrsqrt.pop %v1314
        %v1316 = vmul.f32 %v1309, %v1315
        %v1317 = vld [vmem:[%s7] sm:$0x1]
        %v1319 = vlaneseq
        %v1320 = vshrl.u32 %v1319, 7
        %v1321 = vsub.s32 0, %v1320
        %v1322 = vrot.slane %v1317, %v1321
        %v1324 = vmul.f32 %v1316, %v1322
        %v1325 = vld [vmem:[%s8] sm:$0x1]
        %v1327 = vlaneseq
        %v1328 = vshrl.u32 %v1327, 7
        %v1329 = vsub.s32 0, %v1328
        %v1330 = vrot.slane %v1325, %v1329
        %v1332 = vadd.f32 %v1324, %v1330
        %1333 = vst [vmem:[%s409] sm:$0xff] %v1332
        %1334 = vst [vmem:[%s412 - $0x7] sm:$0x80] %v1332
        %p1335 = scmp.lt.s32.totalorder %s26, 1
        %s1336 = scalar_select %p1335, %s26, 1
        %s1337 = smul.addr %s1336, 8
        %s1338 = scalar_lea.vmem %s9, %s1337
        %p1339 = scmp.lt.s32.totalorder %s26, 1
        %s1340 = scalar_select %p1339, %s26, 1
        %s1341 = scalar_lea.vmem %s10, %s1340
        // Predicated region
        $region69: #{encoder_layer_forward.2} parent=55 // pred_check
          %p1342 = pneg %p238
        $region70: #{encoder_layer_forward.2} parent=55 // pred_check_branch
          %1344 = sbr.rel (%p1342) target = $region72
        $region71: #{encoder_layer_forward.2} parent=55 // pred_region
          _
        $region72: #{encoder_layer_forward.2} parent=55 // pred_fallthru
          _
        // Predicated region
        $region73: #{encoder_layer_forward.2} parent=55 // pred_check
          %p1345 = pneg %p264
        $region74: #{encoder_layer_forward.2} parent=55 // pred_check_branch
          %1347 = sbr.rel (%p1345) target = $region76
        $region75: #{encoder_layer_forward.2} parent=55 // pred_region
          _
        $region76: #{encoder_layer_forward.2} parent=55 // pred_fallthru
          _
      $region56: #{encoder_layer_forward.2} parent=5 // pred_fallthru
        _
      %p1348 = scmp.le.s32.totalorder 2, %s21
      // Predicated region
      $region77: #{encoder_layer_forward.2} parent=5 // pred_check
        %p1349 = pneg %p1348
      $region78: #{encoder_layer_forward.2} parent=5 // pred_check_branch
        %1351 = sbr.rel (%p1349) target = $region80
      $region79: #{encoder_layer_forward.2} parent=5 // pred_region
        %s1352 = ssub.s32 %s21, 2
        // Predicated region
        $region81: #{encoder_layer_forward.2} parent=79 // pred_check
          %p1353 = pneg %p244
        $region82: #{encoder_layer_forward.2} parent=79 // pred_check_branch
          %1355 = sbr.rel (%p1353) target = $region84
        $region83: #{encoder_layer_forward.2} parent=79 // pred_region
          %p1356 = scmp.lt.s32.totalorder %s27, 1
          %s1357 = scalar_select %p1356, %s27, 1
          %s1358 = smul.addr %s1357, 8
          %s1359 = scalar_lea.vmem %s9, %s1358
        $region84: #{encoder_layer_forward.2} parent=79 // pred_fallthru
          _
        // Predicated region
        $region85: #{encoder_layer_forward.2} parent=79 // pred_check
          %p1360 = pneg %p270
        $region86: #{encoder_layer_forward.2} parent=79 // pred_check_branch
          %1362 = sbr.rel (%p1360) target = $region88
        $region87: #{encoder_layer_forward.2} parent=79 // pred_region
          %p1363 = scmp.lt.s32.totalorder %s27, 1
          %s1364 = scalar_select %p1363, %s27, 1
          %s1365 = scalar_lea.vmem %s10, %s1364
        $region88: #{encoder_layer_forward.2} parent=79 // pred_fallthru
          _
      $region80: #{encoder_layer_forward.2} parent=5 // pred_fallthru
        _
    $region6: #{encoder_layer_forward.2} parent=1 // loop_footer
      %s25 = sadd.s32 1, %s21
    $region7: #{encoder_layer_forward.2} parent=1 // loop_footer_branch
      %20 = sbr.rel target = $region3
    $region8: #{encoder_layer_forward.2} parent=1 // loop_exit
      _
    %1366 = vsyncpa [#allocation5], 1
    %s1367 = scalar_lea.sflag [#allocation5], 1
    %1368 = vsyncpa %s1367, 1
    %1369 = vsyncpa [#allocation7], 1

// kernel: encoder_layer_forward.3
$region0: #{encoder_layer_forward.3}
  #allocation0 [shape = 'u32[]', space=smem, size = 0x4, offset = 0x4, fixed_abs, tag = 'smem constant byte address 0x4 - core index']
  #allocation1 [shape = 'u32[144,128]{1,0:T(1,128)}', space=vmem, size = 0x12000, scoped, tag = 'internal scratch']
  #allocation2 [shape = 'f32[8,128]{1,0:T(8,128)}', space=vmem, size = 0x1000, scoped, tag = 'scratch operand']
  %s0 = inlined_call_operand.vmem [shape: f32[2,8,128], index: 0, kind: input, shape index: {}]
  %s1 = inlined_call_operand.vmem [shape: f32[2,1,128], index: 1, kind: input, shape index: {}]
  %s2 = inlined_call_operand.vmem [shape: f32[2,8,128], index: 2, kind: input, shape index: {}]
  %s3 = inlined_call_operand.hbm [shape: bf16[128,128], index: 3, kind: input, shape index: {}]
  %s4 = inlined_call_operand.vmem [shape: f32[1,128], index: 4, kind: input, shape index: {}, may-alias: {4,8,10,14,16}]
  %s5 = inlined_call_operand.vmem [shape: bf16[128,256], index: 5, kind: input, shape index: {}]
  %s6 = inlined_call_operand.vmem [shape: f32[1,256], index: 6, kind: input, shape index: {}]
  %s7 = inlined_call_operand.hbm [shape: bf16[128,128], index: 7, kind: input, shape index: {}]
  %s8 = inlined_call_operand.vmem [shape: f32[1,128], index: 8, kind: input, shape index: {}, may-alias: {4,8,10,14,16}]
  %s9 = inlined_call_operand.vmem [shape: f32[1,128], index: 9, kind: input, shape index: {}, may-alias: {9,15}]
  %s10 = inlined_call_operand.vmem [shape: f32[1,128], index: 10, kind: input, shape index: {}, may-alias: {4,8,10,14,16}]
  %s11 = inlined_call_operand.hbm [shape: bf16[128,512], index: 11, kind: input, shape index: {}]
  %s12 = inlined_call_operand.vmem [shape: f32[1,512], index: 12, kind: input, shape index: {}]
  %s13 = inlined_call_operand.vmem [shape: bf16[512,128], index: 13, kind: input, shape index: {}]
  %s14 = inlined_call_operand.vmem [shape: f32[1,128], index: 14, kind: input, shape index: {}, may-alias: {4,8,10,14,16}]
  %s15 = inlined_call_operand.vmem [shape: f32[1,128], index: 15, kind: input, shape index: {}, may-alias: {9,15}]
  %s16 = inlined_call_operand.vmem [shape: f32[1,128], index: 16, kind: input, shape index: {}, may-alias: {4,8,10,14,16}]
  %s17 = inlined_call_operand.hbm [shape: f32[2,8,128], index: 17, kind: output, shape index: {}]
  %s18 = sld [smem:[#allocation0]]
  $region113: #{encoder_layer_forward.3} parent=0
    _
  %s20 = ssub.s32 1, %s18
  %s21 = scalar_select 0, %s20, %s18
  $region1: #{encoder_layer_forward.3} parent=0
    #allocation3 [shape = 'u8[32768]{0}', space=vmem, size = 0x8000, scoped, tag = 'input window, operand 3, single buffered']
    #allocation4 [shape = 's32[2]{0}', space=sflag, size = 0x8, scoped, tag = 'scoped memory for encoder_layer_forward.3']
    #allocation5 [shape = 's32[2]{0}', space=sflag, size = 0x8, scoped, tag = 'scoped memory for encoder_layer_forward.3']
    #allocation6 [shape = 'u8[32768]{0}', space=vmem, size = 0x8000, scoped, tag = 'input window, operand 7, single buffered']
    #allocation7 [shape = 's32[1]{0}', space=sflag, size = 0x4, scoped, tag = 'scoped memory for encoder_layer_forward.3']
    #allocation8 [shape = 'u8[131072]{0}', space=vmem, size = 0x20000, scoped, tag = 'input window, operand 11, single buffered']
    #allocation9 [shape = 'u8[8192]{0}', space=vmem, size = 0x2000, scoped, tag = 'output window, operand 0']
    %22 = vsyncpa [#allocation4], 0
    %23 = vsyncpa [#allocation7], 0
    %24 = vsyncpa [#allocation5], 0
    %s25 = scalar_lea.sflag [#allocation5], 1
    %26 = vsyncpa %s25, 0
    loop: start=0, step=1, limit=4
    $region2: #{encoder_layer_forward.3} parent=1 // loop_pre_header
      _
    $region3: #{encoder_layer_forward.3} parent=1 // loop_header
      %s28 = sphi 0, %s32
      %p29 = scmp.ge.s32.totalorder %s28, 4
      %s38 = sphi 0, %s40
      %s41 = sphi 0, %s38
      %s42 = sphi 0, %s41
      %s58 = sphi 0, %s42
      %s64 = sphi 0, %s66
      %s67 = sphi 0, %s64
      %s68 = sphi 0, %s67
      %s84 = sphi 0, %s68
      %s90 = sphi 0, %s92
      %s93 = sphi 0, %s90
      %s94 = sphi 0, %s93
      %s110 = sphi 0, %s94
      %s114 = sphi 0, %s114
      %s116 = sphi 0, %s114
      %s117 = sphi 0, %s116
      %s131 = sphi 0, %s117
      %s135 = sphi 0, %s135
      %s137 = sphi 0, %s135
      %s138 = sphi 0, %s137
      %s152 = sphi 0, %s138
      %s156 = sphi 0, %s156
      %s158 = sphi 0, %s156
      %s159 = sphi 0, %s158
      %s173 = sphi 0, %s159
      %s177 = sphi 0, %s177
      %s179 = sphi 0, %s177
      %s180 = sphi 0, %s179
      %s194 = sphi 0, %s180
      %s198 = sphi 0, %s198
      %s200 = sphi 0, %s198
      %s201 = sphi 0, %s200
      %s215 = sphi 0, %s201
      %s219 = sphi 0, %s219
      %s221 = sphi 0, %s219
      %s222 = sphi 0, %s221
      %s236 = sphi 0, %s222
      %s240 = sphi 0, %s240
      %s242 = sphi 0, %s240
      %s243 = sphi 0, %s242
      %s257 = sphi 0, %s243
      %s261 = sphi 0, %s261
      %s263 = sphi 0, %s261
      %s264 = sphi 0, %s263
      %s278 = sphi 0, %s264
      %s282 = sphi 0, %s282
      %s284 = sphi 0, %s282
      %s285 = sphi 0, %s284
      %s299 = sphi 0, %s285
      %s303 = sphi 0, %s303
      %s305 = sphi 0, %s303
      %s306 = sphi 0, %s305
      %s320 = sphi 0, %s306
      %s324 = sphi 0, %s324
      %s326 = sphi 0, %s324
      %s327 = sphi 0, %s326
      %s341 = sphi 0, %s327
      %s345 = sphi 0, %s345
      %s347 = sphi 0, %s345
      %s348 = sphi 0, %s347
      %s362 = sphi 0, %s348
      %s366 = sphi 0, %s366
      %s368 = sphi 0, %s366
      %s369 = sphi 0, %s368
      %s383 = sphi 0, %s369
      %s387 = sphi 0, %s387
      %s389 = sphi 0, %s387
      %s390 = sphi 0, %s389
      %s404 = sphi 0, %s390
      %s410 = sphi 0, %s412
      %s413 = sphi 0, %s410
      %s414 = sphi 0, %s413
      %s430 = sphi 0, %s414
    $region4: #{encoder_layer_forward.3} parent=1 // loop_header_branch
      %31 = sbr.rel (%p29) target = $region8
    $region5: #{encoder_layer_forward.3} parent=1 // loop_body
      %s33 = ssub.s32 %s28, 1
      %s34 = ssub.s32 %s28, 2
      %s35 = sadd.s32 %s28, 1
      %s36 = ssub.s32 %s28, %s35
      %p37 = scmp.eq.s32.totalorder %s36, 0
      %s39 = sadd.s32 %s38, 1
      %s40 = scalar_select %p37, %s38, %s39
      %p43 = pneg %p37
      %p44 = scmp.eq.s32.totalorder %s28, 1
      %p45 = por %p43, %p44
      %p46 = scmp.ne.s32.totalorder %s38, %s41
      %p47 = scmp.eq.s32.totalorder %s28, 0
      %p48 = por %p46, %p47
      %p49 = scmp.ne.s32.totalorder %s38, %s41
      %p50 = scmp.eq.s32.totalorder %s33, 1
      %p51 = por %p49, %p50
      %p52 = scmp.ne.s32.totalorder %s41, %s42
      %p53 = scmp.eq.s32.totalorder %s33, 0
      %p54 = por %p52, %p53
      %p55 = scmp.ne.s32.totalorder %s41, %s42
      %p56 = scmp.eq.s32.totalorder %s34, 1
      %p57 = por %p55, %p56
      %p59 = scmp.ne.s32.totalorder %s42, %s58
      %p60 = scmp.eq.s32.totalorder %s34, 0
      %p61 = por %p59, %p60
      %s62 = ssub.s32 %s28, %s35
      %p63 = scmp.eq.s32.totalorder %s62, 0
      %s65 = sadd.s32 %s64, 1
      %s66 = scalar_select %p63, %s64, %s65
      %p69 = pneg %p63
      %p70 = scmp.eq.s32.totalorder %s28, 1
      %p71 = por %p69, %p70
      %p72 = scmp.ne.s32.totalorder %s64, %s67
      %p73 = scmp.eq.s32.totalorder %s28, 0
      %p74 = por %p72, %p73
      %p75 = scmp.ne.s32.totalorder %s64, %s67
      %p76 = scmp.eq.s32.totalorder %s33, 1
      %p77 = por %p75, %p76
      %p78 = scmp.ne.s32.totalorder %s67, %s68
      %p79 = scmp.eq.s32.totalorder %s33, 0
      %p80 = por %p78, %p79
      %p81 = scmp.ne.s32.totalorder %s67, %s68
      %p82 = scmp.eq.s32.totalorder %s34, 1
      %p83 = por %p81, %p82
      %p85 = scmp.ne.s32.totalorder %s68, %s84
      %p86 = scmp.eq.s32.totalorder %s34, 0
      %p87 = por %p85, %p86
      %s88 = ssub.s32 %s28, %s35
      %p89 = scmp.eq.s32.totalorder %s88, 0
      %s91 = sadd.s32 %s90, 1
      %s92 = scalar_select %p89, %s90, %s91
      %p95 = pneg %p89
      %p96 = scmp.eq.s32.totalorder %s28, 1
      %p97 = por %p95, %p96
      %p98 = scmp.ne.s32.totalorder %s90, %s93
      %p99 = scmp.eq.s32.totalorder %s28, 0
      %p100 = por %p98, %p99
      %p101 = scmp.ne.s32.totalorder %s90, %s93
      %p102 = scmp.eq.s32.totalorder %s33, 1
      %p103 = por %p101, %p102
      %p104 = scmp.ne.s32.totalorder %s93, %s94
      %p105 = scmp.eq.s32.totalorder %s33, 0
      %p106 = por %p104, %p105
      %p107 = scmp.ne.s32.totalorder %s93, %s94
      %p108 = scmp.eq.s32.totalorder %s34, 1
      %p109 = por %p107, %p108
      %p111 = scmp.ne.s32.totalorder %s94, %s110
      %p112 = scmp.eq.s32.totalorder %s34, 0
      %p113 = por %p111, %p112
      %s115 = sadd.s32 %s114, 1
      %p118 = scmp.eq.s32.totalorder %s28, 1
      %p119 = scmp.ne.s32.totalorder %s114, %s116
      %p120 = scmp.eq.s32.totalorder %s28, 0
      %p121 = por %p119, %p120
      %p122 = scmp.ne.s32.totalorder %s114, %s116
      %p123 = scmp.eq.s32.totalorder %s33, 1
      %p124 = por %p122, %p123
      %p125 = scmp.ne.s32.totalorder %s116, %s117
      %p126 = scmp.eq.s32.totalorder %s33, 0
      %p127 = por %p125, %p126
      %p128 = scmp.ne.s32.totalorder %s116, %s117
      %p129 = scmp.eq.s32.totalorder %s34, 1
      %p130 = por %p128, %p129
      %p132 = scmp.ne.s32.totalorder %s117, %s131
      %p133 = scmp.eq.s32.totalorder %s34, 0
      %p134 = por %p132, %p133
      %s136 = sadd.s32 %s135, 1
      %p139 = scmp.eq.s32.totalorder %s28, 1
      %p140 = scmp.ne.s32.totalorder %s135, %s137
      %p141 = scmp.eq.s32.totalorder %s28, 0
      %p142 = por %p140, %p141
      %p143 = scmp.ne.s32.totalorder %s135, %s137
      %p144 = scmp.eq.s32.totalorder %s33, 1
      %p145 = por %p143, %p144
      %p146 = scmp.ne.s32.totalorder %s137, %s138
      %p147 = scmp.eq.s32.totalorder %s33, 0
      %p148 = por %p146, %p147
      %p149 = scmp.ne.s32.totalorder %s137, %s138
      %p150 = scmp.eq.s32.totalorder %s34, 1
      %p151 = por %p149, %p150
      %p153 = scmp.ne.s32.totalorder %s138, %s152
      %p154 = scmp.eq.s32.totalorder %s34, 0
      %p155 = por %p153, %p154
      %s157 = sadd.s32 %s156, 1
      %p160 = scmp.eq.s32.totalorder %s28, 1
      %p161 = scmp.ne.s32.totalorder %s156, %s158
      %p162 = scmp.eq.s32.totalorder %s28, 0
      %p163 = por %p161, %p162
      %p164 = scmp.ne.s32.totalorder %s156, %s158
      %p165 = scmp.eq.s32.totalorder %s33, 1
      %p166 = por %p164, %p165
      %p167 = scmp.ne.s32.totalorder %s158, %s159
      %p168 = scmp.eq.s32.totalorder %s33, 0
      %p169 = por %p167, %p168
      %p170 = scmp.ne.s32.totalorder %s158, %s159
      %p171 = scmp.eq.s32.totalorder %s34, 1
      %p172 = por %p170, %p171
      %p174 = scmp.ne.s32.totalorder %s159, %s173
      %p175 = scmp.eq.s32.totalorder %s34, 0
      %p176 = por %p174, %p175
      %s178 = sadd.s32 %s177, 1
      %p181 = scmp.eq.s32.totalorder %s28, 1
      %p182 = scmp.ne.s32.totalorder %s177, %s179
      %p183 = scmp.eq.s32.totalorder %s28, 0
      %p184 = por %p182, %p183
      %p185 = scmp.ne.s32.totalorder %s177, %s179
      %p186 = scmp.eq.s32.totalorder %s33, 1
      %p187 = por %p185, %p186
      %p188 = scmp.ne.s32.totalorder %s179, %s180
      %p189 = scmp.eq.s32.totalorder %s33, 0
      %p190 = por %p188, %p189
      %p191 = scmp.ne.s32.totalorder %s179, %s180
      %p192 = scmp.eq.s32.totalorder %s34, 1
      %p193 = por %p191, %p192
      %p195 = scmp.ne.s32.totalorder %s180, %s194
      %p196 = scmp.eq.s32.totalorder %s34, 0
      %p197 = por %p195, %p196
      %s199 = sadd.s32 %s198, 1
      %p202 = scmp.eq.s32.totalorder %s28, 1
      %p203 = scmp.ne.s32.totalorder %s198, %s200
      %p204 = scmp.eq.s32.totalorder %s28, 0
      %p205 = por %p203, %p204
      %p206 = scmp.ne.s32.totalorder %s198, %s200
      %p207 = scmp.eq.s32.totalorder %s33, 1
      %p208 = por %p206, %p207
      %p209 = scmp.ne.s32.totalorder %s200, %s201
      %p210 = scmp.eq.s32.totalorder %s33, 0
      %p211 = por %p209, %p210
      %p212 = scmp.ne.s32.totalorder %s200, %s201
      %p213 = scmp.eq.s32.totalorder %s34, 1
      %p214 = por %p212, %p213
      %p216 = scmp.ne.s32.totalorder %s201, %s215
      %p217 = scmp.eq.s32.totalorder %s34, 0
      %p218 = por %p216, %p217
      %s220 = sadd.s32 %s219, 1
      %p223 = scmp.eq.s32.totalorder %s28, 1
      %p224 = scmp.ne.s32.totalorder %s219, %s221
      %p225 = scmp.eq.s32.totalorder %s28, 0
      %p226 = por %p224, %p225
      %p227 = scmp.ne.s32.totalorder %s219, %s221
      %p228 = scmp.eq.s32.totalorder %s33, 1
      %p229 = por %p227, %p228
      %p230 = scmp.ne.s32.totalorder %s221, %s222
      %p231 = scmp.eq.s32.totalorder %s33, 0
      %p232 = por %p230, %p231
      %p233 = scmp.ne.s32.totalorder %s221, %s222
      %p234 = scmp.eq.s32.totalorder %s34, 1
      %p235 = por %p233, %p234
      %p237 = scmp.ne.s32.totalorder %s222, %s236
      %p238 = scmp.eq.s32.totalorder %s34, 0
      %p239 = por %p237, %p238
      %s241 = sadd.s32 %s240, 1
      %p244 = scmp.eq.s32.totalorder %s28, 1
      %p245 = scmp.ne.s32.totalorder %s240, %s242
      %p246 = scmp.eq.s32.totalorder %s28, 0
      %p247 = por %p245, %p246
      %p248 = scmp.ne.s32.totalorder %s240, %s242
      %p249 = scmp.eq.s32.totalorder %s33, 1
      %p250 = por %p248, %p249
      %p251 = scmp.ne.s32.totalorder %s242, %s243
      %p252 = scmp.eq.s32.totalorder %s33, 0
      %p253 = por %p251, %p252
      %p254 = scmp.ne.s32.totalorder %s242, %s243
      %p255 = scmp.eq.s32.totalorder %s34, 1
      %p256 = por %p254, %p255
      %p258 = scmp.ne.s32.totalorder %s243, %s257
      %p259 = scmp.eq.s32.totalorder %s34, 0
      %p260 = por %p258, %p259
      %s262 = sadd.s32 %s261, 1
      %p265 = scmp.eq.s32.totalorder %s28, 1
      %p266 = scmp.ne.s32.totalorder %s261, %s263
      %p267 = scmp.eq.s32.totalorder %s28, 0
      %p268 = por %p266, %p267
      %p269 = scmp.ne.s32.totalorder %s261, %s263
      %p270 = scmp.eq.s32.totalorder %s33, 1
      %p271 = por %p269, %p270
      %p272 = scmp.ne.s32.totalorder %s263, %s264
      %p273 = scmp.eq.s32.totalorder %s33, 0
      %p274 = por %p272, %p273
      %p275 = scmp.ne.s32.totalorder %s263, %s264
      %p276 = scmp.eq.s32.totalorder %s34, 1
      %p277 = por %p275, %p276
      %p279 = scmp.ne.s32.totalorder %s264, %s278
      %p280 = scmp.eq.s32.totalorder %s34, 0
      %p281 = por %p279, %p280
      %s283 = sadd.s32 %s282, 1
      %p286 = scmp.eq.s32.totalorder %s28, 1
      %p287 = scmp.ne.s32.totalorder %s282, %s284
      %p288 = scmp.eq.s32.totalorder %s28, 0
      %p289 = por %p287, %p288
      %p290 = scmp.ne.s32.totalorder %s282, %s284
      %p291 = scmp.eq.s32.totalorder %s33, 1
      %p292 = por %p290, %p291
      %p293 = scmp.ne.s32.totalorder %s284, %s285
      %p294 = scmp.eq.s32.totalorder %s33, 0
      %p295 = por %p293, %p294
      %p296 = scmp.ne.s32.totalorder %s284, %s285
      %p297 = scmp.eq.s32.totalorder %s34, 1
      %p298 = por %p296, %p297
      %p300 = scmp.ne.s32.totalorder %s285, %s299
      %p301 = scmp.eq.s32.totalorder %s34, 0
      %p302 = por %p300, %p301
      %s304 = sadd.s32 %s303, 1
      %p307 = scmp.eq.s32.totalorder %s28, 1
      %p308 = scmp.ne.s32.totalorder %s303, %s305
      %p309 = scmp.eq.s32.totalorder %s28, 0
      %p310 = por %p308, %p309
      %p311 = scmp.ne.s32.totalorder %s303, %s305
      %p312 = scmp.eq.s32.totalorder %s33, 1
      %p313 = por %p311, %p312
      %p314 = scmp.ne.s32.totalorder %s305, %s306
      %p315 = scmp.eq.s32.totalorder %s33, 0
      %p316 = por %p314, %p315
      %p317 = scmp.ne.s32.totalorder %s305, %s306
      %p318 = scmp.eq.s32.totalorder %s34, 1
      %p319 = por %p317, %p318
      %p321 = scmp.ne.s32.totalorder %s306, %s320
      %p322 = scmp.eq.s32.totalorder %s34, 0
      %p323 = por %p321, %p322
      %s325 = sadd.s32 %s324, 1
      %p328 = scmp.eq.s32.totalorder %s28, 1
      %p329 = scmp.ne.s32.totalorder %s324, %s326
      %p330 = scmp.eq.s32.totalorder %s28, 0
      %p331 = por %p329, %p330
      %p332 = scmp.ne.s32.totalorder %s324, %s326
      %p333 = scmp.eq.s32.totalorder %s33, 1
      %p334 = por %p332, %p333
      %p335 = scmp.ne.s32.totalorder %s326, %s327
      %p336 = scmp.eq.s32.totalorder %s33, 0
      %p337 = por %p335, %p336
      %p338 = scmp.ne.s32.totalorder %s326, %s327
      %p339 = scmp.eq.s32.totalorder %s34, 1
      %p340 = por %p338, %p339
      %p342 = scmp.ne.s32.totalorder %s327, %s341
      %p343 = scmp.eq.s32.totalorder %s34, 0
      %p344 = por %p342, %p343
      %s346 = sadd.s32 %s345, 1
      %p349 = scmp.eq.s32.totalorder %s28, 1
      %p350 = scmp.ne.s32.totalorder %s345, %s347
      %p351 = scmp.eq.s32.totalorder %s28, 0
      %p352 = por %p350, %p351
      %p353 = scmp.ne.s32.totalorder %s345, %s347
      %p354 = scmp.eq.s32.totalorder %s33, 1
      %p355 = por %p353, %p354
      %p356 = scmp.ne.s32.totalorder %s347, %s348
      %p357 = scmp.eq.s32.totalorder %s33, 0
      %p358 = por %p356, %p357
      %p359 = scmp.ne.s32.totalorder %s347, %s348
      %p360 = scmp.eq.s32.totalorder %s34, 1
      %p361 = por %p359, %p360
      %p363 = scmp.ne.s32.totalorder %s348, %s362
      %p364 = scmp.eq.s32.totalorder %s34, 0
      %p365 = por %p363, %p364
      %s367 = sadd.s32 %s366, 1
      %p370 = scmp.eq.s32.totalorder %s28, 1
      %p371 = scmp.ne.s32.totalorder %s366, %s368
      %p372 = scmp.eq.s32.totalorder %s28, 0
      %p373 = por %p371, %p372
      %p374 = scmp.ne.s32.totalorder %s366, %s368
      %p375 = scmp.eq.s32.totalorder %s33, 1
      %p376 = por %p374, %p375
      %p377 = scmp.ne.s32.totalorder %s368, %s369
      %p378 = scmp.eq.s32.totalorder %s33, 0
      %p379 = por %p377, %p378
      %p380 = scmp.ne.s32.totalorder %s368, %s369
      %p381 = scmp.eq.s32.totalorder %s34, 1
      %p382 = por %p380, %p381
      %p384 = scmp.ne.s32.totalorder %s369, %s383
      %p385 = scmp.eq.s32.totalorder %s34, 0
      %p386 = por %p384, %p385
      %s388 = sadd.s32 %s387, 1
      %p391 = scmp.eq.s32.totalorder %s28, 1
      %p392 = scmp.ne.s32.totalorder %s387, %s389
      %p393 = scmp.eq.s32.totalorder %s28, 0
      %p394 = por %p392, %p393
      %p395 = scmp.ne.s32.totalorder %s387, %s389
      %p396 = scmp.eq.s32.totalorder %s33, 1
      %p397 = por %p395, %p396
      %p398 = scmp.ne.s32.totalorder %s389, %s390
      %p399 = scmp.eq.s32.totalorder %s33, 0
      %p400 = por %p398, %p399
      %p401 = scmp.ne.s32.totalorder %s389, %s390
      %p402 = scmp.eq.s32.totalorder %s34, 1
      %p403 = por %p401, %p402
      %p405 = scmp.ne.s32.totalorder %s390, %s404
      %p406 = scmp.eq.s32.totalorder %s34, 0
      %p407 = por %p405, %p406
      %s408 = ssub.s32 %s28, %s35
      %p409 = scmp.eq.s32.totalorder %s408, 0
      %s411 = sadd.s32 %s410, 1
      %s412 = scalar_select %p409, %s410, %s411
      %p415 = pneg %p409
      %p416 = scmp.eq.s32.totalorder %s28, 1
      %p417 = por %p415, %p416
      %p418 = scmp.ne.s32.totalorder %s410, %s413
      %p419 = scmp.eq.s32.totalorder %s28, 0
      %p420 = por %p418, %p419
      %p421 = scmp.ne.s32.totalorder %s410, %s413
      %p422 = scmp.eq.s32.totalorder %s33, 1
      %p423 = por %p421, %p422
      %p424 = scmp.ne.s32.totalorder %s413, %s414
      %p425 = scmp.eq.s32.totalorder %s33, 0
      %p426 = por %p424, %p425
      %p427 = scmp.ne.s32.totalorder %s413, %s414
      %p428 = scmp.eq.s32.totalorder %s34, 1
      %p429 = por %p427, %p428
      %p431 = scmp.ne.s32.totalorder %s414, %s430
      %p432 = scmp.eq.s32.totalorder %s34, 0
      %p433 = por %p431, %p432
      %p434 = scmp.le.s32.totalorder 1, %s28
      %p435 = scmp.lt.s32.totalorder %s28, 3
      %p436 = pnand %p434, %p435
      %p437 = pneg %p436
      // Predicated region
      $region9: #{encoder_layer_forward.3} parent=5 // pred_check
        _
      $region10: #{encoder_layer_forward.3} parent=5 // pred_check_branch
        %439 = sbr.rel (%p436) target = $region12
      $region11: #{encoder_layer_forward.3} parent=5 // pred_region
        %s440 = ssub.s32 %s28, 1
        // Predicated region
        $region13: #{encoder_layer_forward.3} parent=11 // pred_check
          %p441 = pneg %p127
        $region14: #{encoder_layer_forward.3} parent=11 // pred_check_branch
          %443 = sbr.rel (%p441) target = $region16
        $region15: #{encoder_layer_forward.3} parent=11 // pred_region
          %s445 = ssub.s32 1024, 1024
          %446 = vsyncadd [#allocation4], %s445
          %s447 = sshll.u32 [#allocation3], 4
          %s448 = int_to_ptr.vmem [resolvable:$true] %s447
          %453 = dma.hbm_to_vmem [thread:$0]  %s3, 1024, %s448, [#allocation4], 64, 64, 4
        $region16: #{encoder_layer_forward.3} parent=11 // pred_fallthru
          _
        // Predicated region
        $region17: #{encoder_layer_forward.3} parent=11 // pred_check
          %p454 = pneg %p148
        $region18: #{encoder_layer_forward.3} parent=11 // pred_check_branch
          %456 = sbr.rel (%p454) target = $region20
        $region19: #{encoder_layer_forward.3} parent=11 // pred_region
          _
        $region20: #{encoder_layer_forward.3} parent=11 // pred_fallthru
          _
        // Predicated region
        $region21: #{encoder_layer_forward.3} parent=11 // pred_check
          %p457 = pneg %p169
        $region22: #{encoder_layer_forward.3} parent=11 // pred_check_branch
          %459 = sbr.rel (%p457) target = $region24
        $region23: #{encoder_layer_forward.3} parent=11 // pred_region
          _
        $region24: #{encoder_layer_forward.3} parent=11 // pred_fallthru
          _
        // Predicated region
        $region25: #{encoder_layer_forward.3} parent=11 // pred_check
          %p460 = pneg %p190
        $region26: #{encoder_layer_forward.3} parent=11 // pred_check_branch
          %462 = sbr.rel (%p460) target = $region28
        $region27: #{encoder_layer_forward.3} parent=11 // pred_region
          _
        $region28: #{encoder_layer_forward.3} parent=11 // pred_fallthru
          _
        // Predicated region
        $region29: #{encoder_layer_forward.3} parent=11 // pred_check
          %p463 = pneg %p211
        $region30: #{encoder_layer_forward.3} parent=11 // pred_check_branch
          %465 = sbr.rel (%p463) target = $region32
        $region31: #{encoder_layer_forward.3} parent=11 // pred_region
          %s467 = ssub.s32 1024, 1024
          %468 = vsyncadd [#allocation7], %s467
          %s469 = sshll.u32 [#allocation6], 4
          %s470 = int_to_ptr.vmem [resolvable:$true] %s469
          %475 = dma.hbm_to_vmem [thread:$0]  %s7, 1024, %s470, [#allocation7], 64, 64, 4
        $region32: #{encoder_layer_forward.3} parent=11 // pred_fallthru
          _
        // Predicated region
        $region33: #{encoder_layer_forward.3} parent=11 // pred_check
          %p476 = pneg %p232
        $region34: #{encoder_layer_forward.3} parent=11 // pred_check_branch
          %478 = sbr.rel (%p476) target = $region36
        $region35: #{encoder_layer_forward.3} parent=11 // pred_region
          _
        $region36: #{encoder_layer_forward.3} parent=11 // pred_fallthru
          _
        // Predicated region
        $region37: #{encoder_layer_forward.3} parent=11 // pred_check
          %p479 = pneg %p253
        $region38: #{encoder_layer_forward.3} parent=11 // pred_check_branch
          %481 = sbr.rel (%p479) target = $region40
        $region39: #{encoder_layer_forward.3} parent=11 // pred_region
          _
        $region40: #{encoder_layer_forward.3} parent=11 // pred_fallthru
          _
        // Predicated region
        $region41: #{encoder_layer_forward.3} parent=11 // pred_check
          %p482 = pneg %p274
        $region42: #{encoder_layer_forward.3} parent=11 // pred_check_branch
          %484 = sbr.rel (%p482) target = $region44
        $region43: #{encoder_layer_forward.3} parent=11 // pred_region
          _
        $region44: #{encoder_layer_forward.3} parent=11 // pred_fallthru
          _
        // Predicated region
        $region45: #{encoder_layer_forward.3} parent=11 // pred_check
          %p485 = pneg %p295
        $region46: #{encoder_layer_forward.3} parent=11 // pred_check_branch
          %487 = sbr.rel (%p485) target = $region48
        $region47: #{encoder_layer_forward.3} parent=11 // pred_region
          %s489 = ssub.s32 4096, 4096
          %490 = vsyncadd [#allocation7], %s489
          %s491 = sshll.u32 [#allocation8], 4
          %s492 = int_to_ptr.vmem [resolvable:$true] %s491
          %497 = dma.hbm_to_vmem [thread:$0]  %s11, 4096, %s492, [#allocation7], 256, 256, 16
        $region48: #{encoder_layer_forward.3} parent=11 // pred_fallthru
          _
        // Predicated region
        $region49: #{encoder_layer_forward.3} parent=11 // pred_check
          %p498 = pneg %p316
        $region50: #{encoder_layer_forward.3} parent=11 // pred_check_branch
          %500 = sbr.rel (%p498) target = $region52
        $region51: #{encoder_layer_forward.3} parent=11 // pred_region
          _
        $region52: #{encoder_layer_forward.3} parent=11 // pred_fallthru
          _
        // Predicated region
        $region53: #{encoder_layer_forward.3} parent=11 // pred_check
          %p501 = pneg %p337
        $region54: #{encoder_layer_forward.3} parent=11 // pred_check_branch
          %503 = sbr.rel (%p501) target = $region56
        $region55: #{encoder_layer_forward.3} parent=11 // pred_region
          _
        $region56: #{encoder_layer_forward.3} parent=11 // pred_fallthru
          _
        // Predicated region
        $region57: #{encoder_layer_forward.3} parent=11 // pred_check
          %p504 = pneg %p358
        $region58: #{encoder_layer_forward.3} parent=11 // pred_check_branch
          %506 = sbr.rel (%p504) target = $region60
        $region59: #{encoder_layer_forward.3} parent=11 // pred_region
          _
        $region60: #{encoder_layer_forward.3} parent=11 // pred_fallthru
          _
        // Predicated region
        $region61: #{encoder_layer_forward.3} parent=11 // pred_check
          %p507 = pneg %p379
        $region62: #{encoder_layer_forward.3} parent=11 // pred_check_branch
          %509 = sbr.rel (%p507) target = $region64
        $region63: #{encoder_layer_forward.3} parent=11 // pred_region
          _
        $region64: #{encoder_layer_forward.3} parent=11 // pred_fallthru
          _
        // Predicated region
        $region65: #{encoder_layer_forward.3} parent=11 // pred_check
          %p510 = pneg %p400
        $region66: #{encoder_layer_forward.3} parent=11 // pred_check_branch
          %512 = sbr.rel (%p510) target = $region68
        $region67: #{encoder_layer_forward.3} parent=11 // pred_region
          _
        $region68: #{encoder_layer_forward.3} parent=11 // pred_fallthru
          _
      $region12: #{encoder_layer_forward.3} parent=5 // pred_fallthru
        _
      %p513 = scmp.lt.s32.totalorder %s28, 2
      // Predicated region
      $region69: #{encoder_layer_forward.3} parent=5 // pred_check
        %p514 = pneg %p513
      $region70: #{encoder_layer_forward.3} parent=5 // pred_check_branch
        %516 = sbr.rel (%p514) target = $region72
      $region71: #{encoder_layer_forward.3} parent=5 // pred_region
        // Predicated region
        $region73: #{encoder_layer_forward.3} parent=71 // pred_check
          %p517 = pneg %p48
        $region74: #{encoder_layer_forward.3} parent=71 // pred_check_branch
          %519 = sbr.rel (%p517) target = $region76
        $region75: #{encoder_layer_forward.3} parent=71 // pred_region
          %p520 = scmp.lt.s32.totalorder %s28, 1
          %s521 = scalar_select %p520, %s28, 1
          %s522 = smul.addr %s521, 8
          %s523 = scalar_lea.vmem %s0, %s522
        $region76: #{encoder_layer_forward.3} parent=71 // pred_fallthru
          _
        // Predicated region
        $region77: #{encoder_layer_forward.3} parent=71 // pred_check
          %p524 = pneg %p74
        $region78: #{encoder_layer_forward.3} parent=71 // pred_check_branch
          %526 = sbr.rel (%p524) target = $region80
        $region79: #{encoder_layer_forward.3} parent=71 // pred_region
          %p527 = scmp.lt.s32.totalorder %s28, 1
          %s528 = scalar_select %p527, %s28, 1
          %s529 = scalar_lea.vmem %s1, %s528
        $region80: #{encoder_layer_forward.3} parent=71 // pred_fallthru
          _
        // Predicated region
        $region81: #{encoder_layer_forward.3} parent=71 // pred_check
          %p530 = pneg %p100
        $region82: #{encoder_layer_forward.3} parent=71 // pred_check_branch
          %532 = sbr.rel (%p530) target = $region84
        $region83: #{encoder_layer_forward.3} parent=71 // pred_region
          %p533 = scmp.lt.s32.totalorder %s28, 1
          %s534 = scalar_select %p533, %s28, 1
          %s535 = smul.addr %s534, 8
          %s536 = scalar_lea.vmem %s2, %s535
        $region84: #{encoder_layer_forward.3} parent=71 // pred_fallthru
          _
      $region72: #{encoder_layer_forward.3} parent=5 // pred_fallthru
        _
      %p537 = scmp.le.s32.totalorder 1, %s28
      %p538 = scmp.lt.s32.totalorder %s28, 3
      %p539 = pnand %p537, %p538
      %p540 = pneg %p539
      // Predicated region
      $region85: #{encoder_layer_forward.3} parent=5 // pred_check
        _
      $region86: #{encoder_layer_forward.3} parent=5 // pred_check_branch
        %542 = sbr.rel (%p539) target = $region88
      $region87: #{encoder_layer_forward.3} parent=5 // pred_region
        %s543 = ssub.s32 %s28, 1
        // Predicated region
        $region89: #{encoder_layer_forward.3} parent=87 // pred_check
          %p544 = pneg %p127
        $region90: #{encoder_layer_forward.3} parent=87 // pred_check_branch
          %546 = sbr.rel (%p544) target = $region92
        $region91: #{encoder_layer_forward.3} parent=87 // pred_region
          %547 = dma.done [#allocation4], 1024
        $region92: #{encoder_layer_forward.3} parent=87 // pred_fallthru
          _
        // Predicated region
        $region93: #{encoder_layer_forward.3} parent=87 // pred_check
          %p548 = pneg %p211
        $region94: #{encoder_layer_forward.3} parent=87 // pred_check_branch
          %550 = sbr.rel (%p548) target = $region96
        $region95: #{encoder_layer_forward.3} parent=87 // pred_region
          %551 = dma.done [#allocation7], 1024
        $region96: #{encoder_layer_forward.3} parent=87 // pred_fallthru
          _
        // Predicated region
        $region97: #{encoder_layer_forward.3} parent=87 // pred_check
          %p552 = pneg %p295
        $region98: #{encoder_layer_forward.3} parent=87 // pred_check_branch
          %554 = sbr.rel (%p552) target = $region100
        $region99: #{encoder_layer_forward.3} parent=87 // pred_region
          %555 = dma.done [#allocation7], 4096
        $region100: #{encoder_layer_forward.3} parent=87 // pred_fallthru
          _
        %p556 = scmp.lt.s32.totalorder %s33, 1
        %s557 = scalar_select %p556, %s33, 1
        %s558 = smul.addr %s557, 8
        %s559 = scalar_lea.vmem %s0, %s558
        %p560 = pneg %p54
        %p561 = pneg %p51
        %p562 = scmp.lt.s32.totalorder %s33, 1
        %s563 = scalar_select %p562, %s33, 1
        %s564 = scalar_lea.vmem %s1, %s563
        %p565 = pneg %p80
        %p566 = pneg %p77
        %p567 = scmp.lt.s32.totalorder %s33, 1
        %s568 = scalar_select %p567, %s33, 1
        %s569 = smul.addr %s568, 8
        %s570 = scalar_lea.vmem %s2, %s569
        %p571 = pneg %p106
        %p572 = pneg %p103
        %p573 = pneg %p127
        %p574 = pneg %p124
        %p575 = pneg %p148
        %p576 = pneg %p145
        %p577 = pneg %p169
        %p578 = pneg %p166
        %p579 = pneg %p190
        %p580 = pneg %p187
        %p581 = pneg %p211
        %p582 = pneg %p208
        %p583 = pneg %p232
        %p584 = pneg %p229
        %p585 = pneg %p253
        %p586 = pneg %p250
        %p587 = pneg %p274
        %p588 = pneg %p271
        %p589 = pneg %p295
        %p590 = pneg %p292
        %p591 = pneg %p316
        %p592 = pneg %p313
        %p593 = pneg %p337
        %p594 = pneg %p334
        %p595 = pneg %p358
        %p596 = pneg %p355
        %p597 = pneg %p379
        %p598 = pneg %p376
        %p599 = pneg %p400
        %p600 = pneg %p397
        %p601 = pneg %p426
        %p602 = pneg %p423
        %s603 = sand.u32 %s413, 1
        %s604 = scalar_lea.sflag [#allocation5], %s603
        %s605 = sand.u32 %s413, 1
        %s606 = smul.addr %s605, 8
        %s607 = scalar_lea.vmem [#allocation9], %s606
        %p608 = scmp.lt.s32.totalorder %s33, 1
        %s609 = scalar_select %p608, %s33, 1
        %s610 = smul.addr %s609, 8
        %s611 = scalar_lea.vmem %s0, %s610
        %p612 = scmp.lt.s32.totalorder %s33, 1
        %s613 = scalar_select %p612, %s33, 1
        %s614 = scalar_lea.vmem %s1, %s613
        %p615 = scmp.lt.s32.totalorder %s33, 1
        %s616 = scalar_select %p615, %s33, 1
        %s617 = smul.addr %s616, 8
        %s618 = scalar_lea.vmem %s2, %s617
        %v620 = vld [vmem:[%s614] sm:$0x1]
        %v621 = vpack.c.bf16 %v620, %v620
        %v622 = vld [vmem:[#allocation3] sm:$0xf]
        %v623 = vld [vmem:[#allocation3 + $0x4] sm:$0xf]
        %v624 = vld [vmem:[#allocation3 + $0x8] sm:$0xf]
        %v625 = vld [vmem:[#allocation3 + $0xc] sm:$0xf]
        %v626 = vld [vmem:[#allocation3 + $0x10] sm:$0xf]
        %v627 = vld [vmem:[#allocation3 + $0x14] sm:$0xf]
        %v628 = vld [vmem:[#allocation3 + $0x18] sm:$0xf]
        %v629 = vld [vmem:[#allocation3 + $0x1c] sm:$0xf]
        %v630 = vld [vmem:[#allocation3 + $0x20] sm:$0xf]
        %v631 = vld [vmem:[#allocation3 + $0x24] sm:$0xf]
        %v632 = vld [vmem:[#allocation3 + $0x28] sm:$0xf]
        %v633 = vld [vmem:[#allocation3 + $0x2c] sm:$0xf]
        %v634 = vld [vmem:[#allocation3 + $0x30] sm:$0xf]
        %v635 = vld [vmem:[#allocation3 + $0x34] sm:$0xf]
        %v636 = vld [vmem:[#allocation3 + $0x38] sm:$0xf]
        %v637 = vld [vmem:[#allocation3 + $0x3c] sm:$0xf]
        %v638 = vld [vmem:[%s4] sm:$0x1]
        %v655 = vunpack.c.l.b16 %v622
        %v656 = vunpack.c.l.b16 %v623
        %v657 = vunpack.c.l.b16 %v624
        %v658 = vunpack.c.l.b16 %v625
        %v659 = vunpack.c.l.b16 %v626
        %v660 = vunpack.c.l.b16 %v627
        %v661 = vunpack.c.l.b16 %v628
        %v662 = vunpack.c.l.b16 %v629
        %v663 = vunpack.c.l.b16 %v630
        %v664 = vunpack.c.l.b16 %v631
        %v665 = vunpack.c.l.b16 %v632
        %v666 = vunpack.c.l.b16 %v633
        %v667 = vunpack.c.l.b16 %v634
        %v668 = vunpack.c.l.b16 %v635
        %v669 = vunpack.c.l.b16 %v636
        %v670 = vunpack.c.l.b16 %v637
        %v671 = vpack.c.b16 %v656, %v655
        %v672 = vpack.c.b16 %v658, %v657
        %v673 = vpack.c.b16 %v660, %v659
        %v674 = vpack.c.b16 %v662, %v661
        %v675 = vpack.c.b16 %v664, %v663
        %v676 = vpack.c.b16 %v666, %v665
        %v677 = vpack.c.b16 %v668, %v667
        %v678 = vpack.c.b16 %v670, %v669
        %687 = vmatprep.subr.bf16.mxu0 0
        %688 = vmatpush1.bf16.msra.mxu0 %v678
        %689 = vmatprep.subr.bf16.mxu0 0
        %690 = vmatpush1.bf16.msra.mxu0 %v677
        %691 = vmatprep.subr.bf16.mxu0 0
        %692 = vmatpush1.bf16.msra.mxu0 %v676
        %693 = vmatprep.subr.bf16.mxu0 0
        %694 = vmatpush1.bf16.msra.mxu0 %v675
        %695 = vmatprep.subr.bf16.mxu0 0
        %696 = vmatpush1.bf16.msra.mxu0 %v674
        %697 = vmatprep.subr.bf16.mxu0 0
        %698 = vmatpush1.bf16.msra.mxu0 %v673
        %699 = vmatprep.subr.bf16.mxu0 0
        %700 = vmatpush1.bf16.msra.mxu0 %v672
        %701 = vmatprep.subr.bf16.mxu0 0
        %702 = vmatpush1.bf16.msra.mxu0 %v671
        %703 = vmatprep.subr.bf16.mxu0 0
        %704 = vmatpush2.bf16.msra.mxu0 0
        %705 = vmatprep.subr.bf16.mxu0 0
        %706 = vmatpush2.bf16.msra.mxu0 0
        %707 = vmatprep.subr.bf16.mxu0 0
        %708 = vmatpush2.bf16.msra.mxu0 0
        %709 = vmatprep.subr.bf16.mxu0 0
        %710 = vmatpush2.bf16.msra.mxu0 0
        %711 = vmatprep.subr.bf16.mxu0 0
        %712 = vmatpush2.bf16.msra.mxu0 0
        %713 = vmatprep.subr.bf16.mxu0 0
        %714 = vmatpush2.bf16.msra.mxu0 0
        %715 = vmatprep.subr.bf16.mxu0 0
        %716 = vmatpush2.bf16.msra.mxu0 0
        %717 = vmatprep.subr.bf16.mxu0 0
        %718 = vmatpush2.bf16.msra.mxu0 0
        %719 = vmatprep.mubr.bf16.mxu0 0
        %720 = vmatmul.mubr.bf16.gmra.mxu0 %v621
        %v721 = vpop.f32.mrf.mxu0
        %v722 = vadd.f32 %v638, %v721
        %v723 = vpop.f32.mrf.mxu0
        %v724 = vpop.f32.mrf.mxu0
        %v725 = vpop.f32.mrf.mxu0
        %726 = vdwg.mxu0
        %v727 = vld [vmem:[%s618] sm:$0xff]
        %v728 = vpack.c.bf16 %v727, %v727
        %v729 = vld [vmem:[%s5] sm:$0xff]
        %v730 = vld [vmem:[%s5 + $0x8] sm:$0xff]
        %v731 = vld [vmem:[%s5 + $0x10] sm:$0xff]
        %v732 = vld [vmem:[%s5 + $0x18] sm:$0xff]
        %v733 = vld [vmem:[%s5 + $0x20] sm:$0xff]
        %v734 = vld [vmem:[%s5 + $0x28] sm:$0xff]
        %v735 = vld [vmem:[%s5 + $0x30] sm:$0xff]
        %v736 = vld [vmem:[%s5 + $0x38] sm:$0xff]
        %v737 = vld [vmem:[%s5 + $0x40] sm:$0xff]
        %v738 = vld [vmem:[%s5 + $0x48] sm:$0xff]
        %v739 = vld [vmem:[%s5 + $0x50] sm:$0xff]
        %v740 = vld [vmem:[%s5 + $0x58] sm:$0xff]
        %v741 = vld [vmem:[%s5 + $0x60] sm:$0xff]
        %v742 = vld [vmem:[%s5 + $0x68] sm:$0xff]
        %v743 = vld [vmem:[%s5 + $0x70] sm:$0xff]
        %v744 = vld [vmem:[%s5 + $0x78] sm:$0xff]
        %v745 = vld [vmem:[%s6] sm:$0x3]
        %v747 = vlaneseq
        %v748 = vshrl.u32 %v747, 7
        %v749 = vsub.s32 0, %v748
        %v750 = vrot.slane %v745, %v749
        %v751 = vlaneseq
        %v752 = vshrl.u32 %v751, 7
        %v753 = vsub.s32 1, %v752
        %v754 = vrot.slane %v745, %v753
        %v773 = vunpack.c.l.b16 %v729
        %v774 = vunpack.c.h.b16 %v729
        %v775 = vunpack.c.l.b16 %v730
        %v776 = vunpack.c.h.b16 %v730
        %v777 = vunpack.c.l.b16 %v731
        %v778 = vunpack.c.h.b16 %v731
        %v779 = vunpack.c.l.b16 %v732
        %v780 = vunpack.c.h.b16 %v732
        %v781 = vunpack.c.l.b16 %v733
        %v782 = vunpack.c.h.b16 %v733
        %v783 = vunpack.c.l.b16 %v734
        %v784 = vunpack.c.h.b16 %v734
        %v785 = vunpack.c.l.b16 %v735
        %v786 = vunpack.c.h.b16 %v735
        %v787 = vunpack.c.l.b16 %v736
        %v788 = vunpack.c.h.b16 %v736
        %v789 = vunpack.c.l.b16 %v737
        %v790 = vunpack.c.h.b16 %v737
        %v791 = vunpack.c.l.b16 %v738
        %v792 = vunpack.c.h.b16 %v738
        %v793 = vunpack.c.l.b16 %v739
        %v794 = vunpack.c.h.b16 %v739
        %v795 = vunpack.c.l.b16 %v740
        %v796 = vunpack.c.h.b16 %v740
        %v797 = vunpack.c.l.b16 %v741
        %v798 = vunpack.c.h.b16 %v741
        %v799 = vunpack.c.l.b16 %v742
        %v800 = vunpack.c.h.b16 %v742
        %v801 = vunpack.c.l.b16 %v743
        %v802 = vunpack.c.h.b16 %v743
        %v803 = vunpack.c.l.b16 %v744
        %v804 = vunpack.c.h.b16 %v744
        %v805 = vpack.c.b16 %v775, %v773
        %v806 = vpack.c.b16 %v776, %v774
        %v807 = vpack.c.b16 %v779, %v777
        %v808 = vpack.c.b16 %v780, %v778
        %v809 = vpack.c.b16 %v783, %v781
        %v810 = vpack.c.b16 %v784, %v782
        %v811 = vpack.c.b16 %v787, %v785
        %v812 = vpack.c.b16 %v788, %v786
        %v813 = vpack.c.b16 %v791, %v789
        %v814 = vpack.c.b16 %v792, %v790
        %v815 = vpack.c.b16 %v795, %v793
        %v816 = vpack.c.b16 %v796, %v794
        %v817 = vpack.c.b16 %v799, %v797
        %v818 = vpack.c.b16 %v800, %v798
        %v819 = vpack.c.b16 %v803, %v801
        %v820 = vpack.c.b16 %v804, %v802
        %837 = vmatprep.subr.bf16.mxu0 %v820
        %838 = vmatpush1.bf16.msra.mxu0 %v819
        %839 = vmatprep.subr.bf16.mxu0 %v818
        %840 = vmatpush1.bf16.msra.mxu0 %v817
        %841 = vmatprep.subr.bf16.mxu0 %v816
        %842 = vmatpush1.bf16.msra.mxu0 %v815
        %843 = vmatprep.subr.bf16.mxu0 %v814
        %844 = vmatpush1.bf16.msra.mxu0 %v813
        %845 = vmatprep.subr.bf16.mxu0 %v812
        %846 = vmatpush1.bf16.msra.mxu0 %v811
        %847 = vmatprep.subr.bf16.mxu0 %v810
        %848 = vmatpush1.bf16.msra.mxu0 %v809
        %849 = vmatprep.subr.bf16.mxu0 %v808
        %850 = vmatpush1.bf16.msra.mxu0 %v807
        %851 = vmatprep.subr.bf16.mxu0 %v806
        %852 = vmatpush1.bf16.msra.mxu0 %v805
        %853 = vmatprep.subr.bf16.mxu0 0
        %854 = vmatpush2.bf16.msra.mxu0 0
        %855 = vmatprep.subr.bf16.mxu0 0
        %856 = vmatpush2.bf16.msra.mxu0 0
        %857 = vmatprep.subr.bf16.mxu0 0
        %858 = vmatpush2.bf16.msra.mxu0 0
        %859 = vmatprep.subr.bf16.mxu0 0
        %860 = vmatpush2.bf16.msra.mxu0 0
        %861 = vmatprep.subr.bf16.mxu0 0
        %862 = vmatpush2.bf16.msra.mxu0 0
        %863 = vmatprep.subr.bf16.mxu0 0
        %864 = vmatpush2.bf16.msra.mxu0 0
        %865 = vmatprep.subr.bf16.mxu0 0
        %866 = vmatpush2.bf16.msra.mxu0 0
        %867 = vmatprep.subr.bf16.mxu0 0
        %868 = vmatpush2.bf16.msra.mxu0 0
        %869 = vmatprep.mubr.bf16.mxu0 0
        %870 = vmatmul.mubr.bf16.gmra.mxu0 %v728
        %v871 = vpop.f32.mrf.mxu0
        %v872 = vadd.f32 %v750, %v871
        %v873 = vpop.f32.mrf.mxu0
        %v874 = vadd.f32 %v754, %v873
        %v875 = vpop.f32.mrf.mxu0
        %v876 = vpop.f32.mrf.mxu0
        %877 = vdwg.mxu0
        %v878 = vpack.c.bf16 %v722, %v722
        %v879 = vpack.c.bf16 %v872, %v872
        %880 = vmatprep.subr.bf16.mxu0 0
        %881 = vmatpush1.bf16.xpose.msra.mxu0 0
        %882 = vmatprep.subr.bf16.mxu0 0
        %883 = vmatpush1.bf16.xpose.msra.mxu0 0
        %884 = vmatprep.subr.bf16.mxu0 0
        %885 = vmatpush1.bf16.xpose.msra.mxu0 0
        %886 = vmatprep.subr.bf16.mxu0 0
        %887 = vmatpush1.bf16.xpose.msra.mxu0 0
        %888 = vmatprep.subr.bf16.mxu0 0
        %889 = vmatpush1.bf16.xpose.msra.mxu0 0
        %890 = vmatprep.subr.bf16.mxu0 0
        %891 = vmatpush1.bf16.xpose.msra.mxu0 0
        %892 = vmatprep.subr.bf16.mxu0 0
        %893 = vmatpush1.bf16.xpose.msra.mxu0 0
        %894 = vmatprep.subr.bf16.mxu0 0
        %895 = vmatpush1.bf16.xpose.msra.mxu0 %v879
        %896 = vmatprep.subr.bf16.mxu0 0
        %897 = vmatpush2.bf16.xpose.msra.mxu0 0
        %898 = vmatprep.subr.bf16.mxu0 0
        %899 = vmatpush2.bf16.xpose.msra.mxu0 0
        %900 = vmatprep.subr.bf16.mxu0 0
        %901 = vmatpush2.bf16.xpose.msra.mxu0 0
        %902 = vmatprep.subr.bf16.mxu0 0
        %903 = vmatpush2.bf16.xpose.msra.mxu0 0
        %904 = vmatprep.subr.bf16.mxu0 0
        %905 = vmatpush2.bf16.xpose.msra.mxu0 0
        %906 = vmatprep.subr.bf16.mxu0 0
        %907 = vmatpush2.bf16.xpose.msra.mxu0 0
        %908 = vmatprep.subr.bf16.mxu0 0
        %909 = vmatpush2.bf16.xpose.msra.mxu0 0
        %910 = vmatprep.subr.bf16.mxu0 0
        %911 = vmatpush2.bf16.xpose.msra.mxu0 0
        %912 = vmatprep.mubr.bf16.mxu0 0
        %913 = vmatmul.mubr.bf16.gmra.mxu0 %v878
        %v914 = vpop.f32.mrf.mxu0
        %v915 = vadd.f32 0.0, %v914
        %v916 = vpop.f32.mrf.mxu0
        %v917 = vpop.f32.mrf.mxu0
        %v918 = vpop.f32.mrf.mxu0
        %919 = vdwg.mxu0
        %v920 = vmul.f32 %v915, 0.088388346
        %vm921 = vcmask 57344
        %v922 = vsel %vm921, %v920, -inf
        %923 = vmax.xlane.f32.xlu0 %v922
        %v924 = vpop.xlane.xlu0 %923
        %v925 = vsub.f32 %v920, %v924
        %v926 = vmul.f32 %v925, 1.442695
        %v927 = vpow.pop %v926
        %v928 = vsel %vm921, %v927, 0.0
        %929 = vadd.xlane.f32.xlu0 %v928
        %v930 = vpop.xlane.xlu0 %929
        %v931 = vrcp.pop %v930
        %v932 = vmul.f32 %v927, %v931
        %v933 = vpack.c.bf16 %v932, %v932
        %v934 = vpack.c.bf16 %v874, %v874
        %vm935 = vcmask 64512
        %v937 = vsel %vm935, %v933, 0
        %vm939 = vcmask 1043456
        %v941 = vsel %vm939, %v934, 0
        %943 = vmatprep.subr.bf16.mxu0 0
        %944 = vmatpush1.bf16.msra.mxu0 0
        %945 = vmatprep.subr.bf16.mxu0 0
        %946 = vmatpush1.bf16.msra.mxu0 0
        %947 = vmatprep.subr.bf16.mxu0 0
        %948 = vmatpush1.bf16.msra.mxu0 0
        %949 = vmatprep.subr.bf16.mxu0 0
        %950 = vmatpush1.bf16.msra.mxu0 0
        %951 = vmatprep.subr.bf16.mxu0 0
        %952 = vmatpush1.bf16.msra.mxu0 0
        %953 = vmatprep.subr.bf16.mxu0 0
        %954 = vmatpush1.bf16.msra.mxu0 0
        %955 = vmatprep.subr.bf16.mxu0 0
        %956 = vmatpush1.bf16.msra.mxu0 0
        %957 = vmatprep.subr.bf16.mxu0 0
        %958 = vmatpush1.bf16.msra.mxu0 %v941
        %959 = vmatprep.subr.bf16.mxu0 0
        %960 = vmatpush2.bf16.msra.mxu0 0
        %961 = vmatprep.subr.bf16.mxu0 0
        %962 = vmatpush2.bf16.msra.mxu0 0
        %963 = vmatprep.subr.bf16.mxu0 0
        %964 = vmatpush2.bf16.msra.mxu0 0
        %965 = vmatprep.subr.bf16.mxu0 0
        %966 = vmatpush2.bf16.msra.mxu0 0
        %967 = vmatprep.subr.bf16.mxu0 0
        %968 = vmatpush2.bf16.msra.mxu0 0
        %969 = vmatprep.subr.bf16.mxu0 0
        %970 = vmatpush2.bf16.msra.mxu0 0
        %971 = vmatprep.subr.bf16.mxu0 0
        %972 = vmatpush2.bf16.msra.mxu0 0
        %973 = vmatprep.subr.bf16.mxu0 0
        %974 = vmatpush2.bf16.msra.mxu0 0
        %975 = vmatprep.mubr.bf16.mxu0 0
        %976 = vmatmul.mubr.bf16.gmra.mxu0 %v937
        %v977 = vpop.f32.mrf.mxu0
        %v978 = vadd.f32 0.0, %v977
        %v979 = vpop.f32.mrf.mxu0
        %v980 = vpop.f32.mrf.mxu0
        %v981 = vpop.f32.mrf.mxu0
        %982 = vdwg.mxu0
        %v983 = vpack.c.bf16 %v978, %v978
        %v984 = vld [vmem:[#allocation6] sm:$0xf]
        %v985 = vld [vmem:[#allocation6 + $0x4] sm:$0xf]
        %v986 = vld [vmem:[#allocation6 + $0x8] sm:$0xf]
        %v987 = vld [vmem:[#allocation6 + $0xc] sm:$0xf]
        %v988 = vld [vmem:[#allocation6 + $0x10] sm:$0xf]
        %v989 = vld [vmem:[#allocation6 + $0x14] sm:$0xf]
        %v990 = vld [vmem:[#allocation6 + $0x18] sm:$0xf]
        %v991 = vld [vmem:[#allocation6 + $0x1c] sm:$0xf]
        %v992 = vld [vmem:[#allocation6 + $0x20] sm:$0xf]
        %v993 = vld [vmem:[#allocation6 + $0x24] sm:$0xf]
        %v994 = vld [vmem:[#allocation6 + $0x28] sm:$0xf]
        %v995 = vld [vmem:[#allocation6 + $0x2c] sm:$0xf]
        %v996 = vld [vmem:[#allocation6 + $0x30] sm:$0xf]
        %v997 = vld [vmem:[#allocation6 + $0x34] sm:$0xf]
        %v998 = vld [vmem:[#allocation6 + $0x38] sm:$0xf]
        %v999 = vld [vmem:[#allocation6 + $0x3c] sm:$0xf]
        %v1000 = vld [vmem:[%s8] sm:$0x1]
        %v1017 = vunpack.c.l.b16 %v984
        %v1018 = vunpack.c.l.b16 %v985
        %v1019 = vunpack.c.l.b16 %v986
        %v1020 = vunpack.c.l.b16 %v987
        %v1021 = vunpack.c.l.b16 %v988
        %v1022 = vunpack.c.l.b16 %v989
        %v1023 = vunpack.c.l.b16 %v990
        %v1024 = vunpack.c.l.b16 %v991
        %v1025 = vunpack.c.l.b16 %v992
        %v1026 = vunpack.c.l.b16 %v993
        %v1027 = vunpack.c.l.b16 %v994
        %v1028 = vunpack.c.l.b16 %v995
        %v1029 = vunpack.c.l.b16 %v996
        %v1030 = vunpack.c.l.b16 %v997
        %v1031 = vunpack.c.l.b16 %v998
        %v1032 = vunpack.c.l.b16 %v999
        %v1033 = vpack.c.b16 %v1018, %v1017
        %v1034 = vpack.c.b16 %v1020, %v1019
        %v1035 = vpack.c.b16 %v1022, %v1021
        %v1036 = vpack.c.b16 %v1024, %v1023
        %v1037 = vpack.c.b16 %v1026, %v1025
        %v1038 = vpack.c.b16 %v1028, %v1027
        %v1039 = vpack.c.b16 %v1030, %v1029
        %v1040 = vpack.c.b16 %v1032, %v1031
        %1049 = vmatprep.subr.bf16.mxu0 0
        %1050 = vmatpush1.bf16.msra.mxu0 %v1040
        %1051 = vmatprep.subr.bf16.mxu0 0
        %1052 = vmatpush1.bf16.msra.mxu0 %v1039
        %1053 = vmatprep.subr.bf16.mxu0 0
        %1054 = vmatpush1.bf16.msra.mxu0 %v1038
        %1055 = vmatprep.subr.bf16.mxu0 0
        %1056 = vmatpush1.bf16.msra.mxu0 %v1037
        %1057 = vmatprep.subr.bf16.mxu0 0
        %1058 = vmatpush1.bf16.msra.mxu0 %v1036
        %1059 = vmatprep.subr.bf16.mxu0 0
        %1060 = vmatpush1.bf16.msra.mxu0 %v1035
        %1061 = vmatprep.subr.bf16.mxu0 0
        %1062 = vmatpush1.bf16.msra.mxu0 %v1034
        %1063 = vmatprep.subr.bf16.mxu0 0
        %1064 = vmatpush1.bf16.msra.mxu0 %v1033
        %1065 = vmatprep.subr.bf16.mxu0 0
        %1066 = vmatpush2.bf16.msra.mxu0 0
        %1067 = vmatprep.subr.bf16.mxu0 0
        %1068 = vmatpush2.bf16.msra.mxu0 0
        %1069 = vmatprep.subr.bf16.mxu0 0
        %1070 = vmatpush2.bf16.msra.mxu0 0
        %1071 = vmatprep.subr.bf16.mxu0 0
        %1072 = vmatpush2.bf16.msra.mxu0 0
        %1073 = vmatprep.subr.bf16.mxu0 0
        %1074 = vmatpush2.bf16.msra.mxu0 0
        %1075 = vmatprep.subr.bf16.mxu0 0
        %1076 = vmatpush2.bf16.msra.mxu0 0
        %1077 = vmatprep.subr.bf16.mxu0 0
        %1078 = vmatpush2.bf16.msra.mxu0 0
        %1079 = vmatprep.subr.bf16.mxu0 0
        %1080 = vmatpush2.bf16.msra.mxu0 0
        %1081 = vmatprep.mubr.bf16.mxu0 0
        %1082 = vmatmul.mubr.bf16.gmra.mxu0 %v983
        %v1083 = vpop.f32.mrf.mxu0
        %v1084 = vadd.f32 %v1000, %v1083
        %v1085 = vpop.f32.mrf.mxu0
        %v1086 = vpop.f32.mrf.mxu0
        %v1087 = vpop.f32.mrf.mxu0
        %1088 = vdwg.mxu0
        %v1089 = vadd.f32 %v620, %v1084
        %vm1090 = vcmask 1040384
        %v1091 = vsel %vm1090, %v1089, 0.0
        %1092 = vadd.xlane.f32.xlu0 %v1091
        %v1093 = vpop.xlane.xlu0 %1092
        %v1094 = vrcp.pop 128.0
        %v1095 = vmul.f32 %v1093, %v1094
        %v1096 = vsub.f32 %v1089, %v1095
        %v1097 = vmul.f32 %v1096, %v1096
        %v1098 = vsel %vm1090, %v1097, 0.0
        %1099 = vadd.xlane.f32.xlu0 %v1098
        %v1100 = vpop.xlane.xlu0 %1099
        %v1101 = vmul.f32 %v1100, %v1094
        %v1102 = vadd.f32 %v1101, 1e-05
        %v1103 = vrsqrt.pop %v1102
        %v1104 = vmul.f32 %v1096, %v1103
        %v1105 = vld [vmem:[%s9] sm:$0x1]
        %v1106 = vmul.f32 %v1104, %v1105
        %v1107 = vld [vmem:[%s10] sm:$0x1]
        %v1108 = vadd.f32 %v1106, %v1107
        %v1109 = vld [vmem:[%s611] sm:$0xff]
        %1110 = vst [vmem:[#allocation2] sm:$0xff] %v1109
        %1111 = vst [vmem:[#allocation2 + $0x7] sm:$0x1] %v1108
        %v1112 = vld [vmem:[#allocation2] sm:$0xff]
        %v1113 = vpack.c.bf16 %v1112, %v1112
        %v1114 = vld [vmem:[#allocation8] sm:$0xff]
        %v1115 = vld [vmem:[#allocation8 + $0x8] sm:$0xff]
        %v1116 = vld [vmem:[#allocation8 + $0x10] sm:$0xff]
        %v1117 = vld [vmem:[#allocation8 + $0x18] sm:$0xff]
        %v1118 = vld [vmem:[#allocation8 + $0x20] sm:$0xff]
        %v1119 = vld [vmem:[#allocation8 + $0x28] sm:$0xff]
        %v1120 = vld [vmem:[#allocation8 + $0x30] sm:$0xff]
        %v1121 = vld [vmem:[#allocation8 + $0x38] sm:$0xff]
        %v1122 = vld [vmem:[#allocation8 + $0x40] sm:$0xff]
        %v1123 = vld [vmem:[#allocation8 + $0x48] sm:$0xff]
        %v1124 = vld [vmem:[#allocation8 + $0x50] sm:$0xff]
        %v1125 = vld [vmem:[#allocation8 + $0x58] sm:$0xff]
        %v1126 = vld [vmem:[#allocation8 + $0x60] sm:$0xff]
        %v1127 = vld [vmem:[#allocation8 + $0x68] sm:$0xff]
        %v1128 = vld [vmem:[#allocation8 + $0x70] sm:$0xff]
        %v1129 = vld [vmem:[#allocation8 + $0x78] sm:$0xff]
        %v1130 = vld [vmem:[#allocation8 + $0x80] sm:$0xff]
        %v1131 = vld [vmem:[#allocation8 + $0x88] sm:$0xff]
        %v1132 = vld [vmem:[#allocation8 + $0x90] sm:$0xff]
        %v1133 = vld [vmem:[#allocation8 + $0x98] sm:$0xff]
        %v1134 = vld [vmem:[#allocation8 + $0xa0] sm:$0xff]
        %v1135 = vld [vmem:[#allocation8 + $0xa8] sm:$0xff]
        %v1136 = vld [vmem:[#allocation8 + $0xb0] sm:$0xff]
        %v1137 = vld [vmem:[#allocation8 + $0xb8] sm:$0xff]
        %v1138 = vld [vmem:[#allocation8 + $0xc0] sm:$0xff]
        %v1139 = vld [vmem:[#allocation8 + $0xc8] sm:$0xff]
        %v1140 = vld [vmem:[#allocation8 + $0xd0] sm:$0xff]
        %v1141 = vld [vmem:[#allocation8 + $0xd8] sm:$0xff]
        %v1142 = vld [vmem:[#allocation8 + $0xe0] sm:$0xff]
        %v1143 = vld [vmem:[#allocation8 + $0xe8] sm:$0xff]
        %v1144 = vld [vmem:[#allocation8 + $0xf0] sm:$0xff]
        %v1145 = vld [vmem:[#allocation8 + $0xf8] sm:$0xff]
        %v1146 = vld [vmem:[%s12] sm:$0xf]
        %v1148 = vlaneseq
        %v1149 = vshrl.u32 %v1148, 7
        %v1150 = vsub.s32 0, %v1149
        %v1151 = vrot.slane %v1146, %v1150
        %v1152 = vlaneseq
        %v1153 = vshrl.u32 %v1152, 7
        %v1154 = vsub.s32 1, %v1153
        %v1155 = vrot.slane %v1146, %v1154
        %v1156 = vlaneseq
        %v1157 = vshrl.u32 %v1156, 7
        %v1158 = vsub.s32 2, %v1157
        %v1159 = vrot.slane %v1146, %v1158
        %v1160 = vlaneseq
        %v1161 = vshrl.u32 %v1160, 7
        %v1162 = vsub.s32 3, %v1161
        %v1163 = vrot.slane %v1146, %v1162
        %v1200 = vunpack.c.l.b16 %v1114
        %v1201 = vunpack.c.h.b16 %v1114
        %v1202 = vunpack.c.l.b16 %v1115
        %v1203 = vunpack.c.h.b16 %v1115
        %v1204 = vunpack.c.l.b16 %v1116
        %v1205 = vunpack.c.h.b16 %v1116
        %v1206 = vunpack.c.l.b16 %v1117
        %v1207 = vunpack.c.h.b16 %v1117
        %v1208 = vunpack.c.l.b16 %v1118
        %v1209 = vunpack.c.h.b16 %v1118
        %v1210 = vunpack.c.l.b16 %v1119
        %v1211 = vunpack.c.h.b16 %v1119
        %v1212 = vunpack.c.l.b16 %v1120
        %v1213 = vunpack.c.h.b16 %v1120
        %v1214 = vunpack.c.l.b16 %v1121
        %v1215 = vunpack.c.h.b16 %v1121
        %v1216 = vunpack.c.l.b16 %v1122
        %v1217 = vunpack.c.h.b16 %v1122
        %v1218 = vunpack.c.l.b16 %v1123
        %v1219 = vunpack.c.h.b16 %v1123
        %v1220 = vunpack.c.l.b16 %v1124
        %v1221 = vunpack.c.h.b16 %v1124
        %v1222 = vunpack.c.l.b16 %v1125
        %v1223 = vunpack.c.h.b16 %v1125
        %v1224 = vunpack.c.l.b16 %v1126
        %v1225 = vunpack.c.h.b16 %v1126
        %v1226 = vunpack.c.l.b16 %v1127
        %v1227 = vunpack.c.h.b16 %v1127
        %v1228 = vunpack.c.l.b16 %v1128
        %v1229 = vunpack.c.h.b16 %v1128
        %v1230 = vunpack.c.l.b16 %v1129
        %v1231 = vunpack.c.h.b16 %v1129
        %v1232 = vunpack.c.l.b16 %v1130
        %v1233 = vunpack.c.h.b16 %v1130
        %v1234 = vunpack.c.l.b16 %v1131
        %v1235 = vunpack.c.h.b16 %v1131
        %v1236 = vunpack.c.l.b16 %v1132
        %v1237 = vunpack.c.h.b16 %v1132
        %v1238 = vunpack.c.l.b16 %v1133
        %v1239 = vunpack.c.h.b16 %v1133
        %v1240 = vunpack.c.l.b16 %v1134
        %v1241 = vunpack.c.h.b16 %v1134
        %v1242 = vunpack.c.l.b16 %v1135
        %v1243 = vunpack.c.h.b16 %v1135
        %v1244 = vunpack.c.l.b16 %v1136
        %v1245 = vunpack.c.h.b16 %v1136
        %v1246 = vunpack.c.l.b16 %v1137
        %v1247 = vunpack.c.h.b16 %v1137
        %v1248 = vunpack.c.l.b16 %v1138
        %v1249 = vunpack.c.h.b16 %v1138
        %v1250 = vunpack.c.l.b16 %v1139
        %v1251 = vunpack.c.h.b16 %v1139
        %v1252 = vunpack.c.l.b16 %v1140
        %v1253 = vunpack.c.h.b16 %v1140
        %v1254 = vunpack.c.l.b16 %v1141
        %v1255 = vunpack.c.h.b16 %v1141
        %v1256 = vunpack.c.l.b16 %v1142
        %v1257 = vunpack.c.h.b16 %v1142
        %v1258 = vunpack.c.l.b16 %v1143
        %v1259 = vunpack.c.h.b16 %v1143
        %v1260 = vunpack.c.l.b16 %v1144
        %v1261 = vunpack.c.h.b16 %v1144
        %v1262 = vunpack.c.l.b16 %v1145
        %v1263 = vunpack.c.h.b16 %v1145
        %v1264 = vpack.c.b16 %v1204, %v1200
        %v1265 = vpack.c.b16 %v1205, %v1201
        %v1266 = vpack.c.b16 %v1206, %v1202
        %v1267 = vpack.c.b16 %v1207, %v1203
        %v1268 = vpack.c.b16 %v1212, %v1208
        %v1269 = vpack.c.b16 %v1213, %v1209
        %v1270 = vpack.c.b16 %v1214, %v1210
        %v1271 = vpack.c.b16 %v1215, %v1211
        %v1272 = vpack.c.b16 %v1220, %v1216
        %v1273 = vpack.c.b16 %v1221, %v1217
        %v1274 = vpack.c.b16 %v1222, %v1218
        %v1275 = vpack.c.b16 %v1223, %v1219
        %v1276 = vpack.c.b16 %v1228, %v1224
        %v1277 = vpack.c.b16 %v1229, %v1225
        %v1278 = vpack.c.b16 %v1230, %v1226
        %v1279 = vpack.c.b16 %v1231, %v1227
        %v1280 = vpack.c.b16 %v1236, %v1232
        %v1281 = vpack.c.b16 %v1237, %v1233
        %v1282 = vpack.c.b16 %v1238, %v1234
        %v1283 = vpack.c.b16 %v1239, %v1235
        %v1284 = vpack.c.b16 %v1244, %v1240
        %v1285 = vpack.c.b16 %v1245, %v1241
        %v1286 = vpack.c.b16 %v1246, %v1242
        %v1287 = vpack.c.b16 %v1247, %v1243
        %v1288 = vpack.c.b16 %v1252, %v1248
        %v1289 = vpack.c.b16 %v1253, %v1249
        %v1290 = vpack.c.b16 %v1254, %v1250
        %v1291 = vpack.c.b16 %v1255, %v1251
        %v1292 = vpack.c.b16 %v1260, %v1256
        %v1293 = vpack.c.b16 %v1261, %v1257
        %v1294 = vpack.c.b16 %v1262, %v1258
        %v1295 = vpack.c.b16 %v1263, %v1259
        %1328 = vmatprep.subr.bf16.mxu0 %v1293
        %1329 = vmatpush1.bf16.msra.mxu0 %v1292
        %1330 = vmatprep.subr.bf16.mxu0 %v1289
        %1331 = vmatpush1.bf16.msra.mxu0 %v1288
        %1332 = vmatprep.subr.bf16.mxu0 %v1285
        %1333 = vmatpush1.bf16.msra.mxu0 %v1284
        %1334 = vmatprep.subr.bf16.mxu0 %v1281
        %1335 = vmatpush1.bf16.msra.mxu0 %v1280
        %1336 = vmatprep.subr.bf16.mxu0 %v1277
        %1337 = vmatpush1.bf16.msra.mxu0 %v1276
        %1338 = vmatprep.subr.bf16.mxu0 %v1273
        %1339 = vmatpush1.bf16.msra.mxu0 %v1272
        %1340 = vmatprep.subr.bf16.mxu0 %v1269
        %1341 = vmatpush1.bf16.msra.mxu0 %v1268
        %1342 = vmatprep.subr.bf16.mxu0 %v1265
        %1343 = vmatpush1.bf16.msra.mxu0 %v1264
        %1344 = vmatprep.subr.bf16.mxu0 0
        %1345 = vmatpush2.bf16.msra.mxu0 0
        %1346 = vmatprep.subr.bf16.mxu0 0
        %1347 = vmatpush2.bf16.msra.mxu0 0
        %1348 = vmatprep.subr.bf16.mxu0 0
        %1349 = vmatpush2.bf16.msra.mxu0 0
        %1350 = vmatprep.subr.bf16.mxu0 0
        %1351 = vmatpush2.bf16.msra.mxu0 0
        %1352 = vmatprep.subr.bf16.mxu0 0
        %1353 = vmatpush2.bf16.msra.mxu0 0
        %1354 = vmatprep.subr.bf16.mxu0 0
        %1355 = vmatpush2.bf16.msra.mxu0 0
        %1356 = vmatprep.subr.bf16.mxu0 0
        %1357 = vmatpush2.bf16.msra.mxu0 0
        %1358 = vmatprep.subr.bf16.mxu0 0
        %1359 = vmatpush2.bf16.msra.mxu0 0
        %1360 = vmatprep.mubr.bf16.mxu0 0
        %1361 = vmatmul.mubr.bf16.gmra.mxu0 %v1113
        %v1362 = vpop.f32.mrf.mxu0
        %v1363 = vadd.f32 %v1151, %v1362
        %v1364 = vpop.f32.mrf.mxu0
        %v1365 = vadd.f32 %v1155, %v1364
        %v1366 = vpop.f32.mrf.mxu0
        %v1367 = vpop.f32.mrf.mxu0
        %1368 = vdwg.mxu0
        %1369 = vmatprep.subr.bf16.mxu0 %v1295
        %1370 = vmatpush1.bf16.msra.mxu0 %v1294
        %1371 = vmatprep.subr.bf16.mxu0 %v1291
        %1372 = vmatpush1.bf16.msra.mxu0 %v1290
        %1373 = vmatprep.subr.bf16.mxu0 %v1287
        %1374 = vmatpush1.bf16.msra.mxu0 %v1286
        %1375 = vmatprep.subr.bf16.mxu0 %v1283
        %1376 = vmatpush1.bf16.msra.mxu0 %v1282
        %1377 = vmatprep.subr.bf16.mxu0 %v1279
        %1378 = vmatpush1.bf16.msra.mxu0 %v1278
        %1379 = vmatprep.subr.bf16.mxu0 %v1275
        %1380 = vmatpush1.bf16.msra.mxu0 %v1274
        %1381 = vmatprep.subr.bf16.mxu0 %v1271
        %1382 = vmatpush1.bf16.msra.mxu0 %v1270
        %1383 = vmatprep.subr.bf16.mxu0 %v1267
        %1384 = vmatpush1.bf16.msra.mxu0 %v1266
        %1385 = vmatprep.subr.bf16.mxu0 0
        %1386 = vmatpush2.bf16.msra.mxu0 0
        %1387 = vmatprep.subr.bf16.mxu0 0
        %1388 = vmatpush2.bf16.msra.mxu0 0
        %1389 = vmatprep.subr.bf16.mxu0 0
        %1390 = vmatpush2.bf16.msra.mxu0 0
        %1391 = vmatprep.subr.bf16.mxu0 0
        %1392 = vmatpush2.bf16.msra.mxu0 0
        %1393 = vmatprep.subr.bf16.mxu0 0
        %1394 = vmatpush2.bf16.msra.mxu0 0
        %1395 = vmatprep.subr.bf16.mxu0 0
        %1396 = vmatpush2.bf16.msra.mxu0 0
        %1397 = vmatprep.subr.bf16.mxu0 0
        %1398 = vmatpush2.bf16.msra.mxu0 0
        %1399 = vmatprep.subr.bf16.mxu0 0
        %1400 = vmatpush2.bf16.msra.mxu0 0
        %1401 = vmatprep.mubr.bf16.mxu0 0
        %1402 = vmatmul.mubr.bf16.gmra.mxu0 %v1113
        %v1403 = vpop.f32.mrf.mxu0
        %v1404 = vadd.f32 %v1159, %v1403
        %v1405 = vpop.f32.mrf.mxu0
        %v1406 = vadd.f32 %v1163, %v1405
        %v1407 = vpop.f32.mrf.mxu0
        %v1408 = vpop.f32.mrf.mxu0
        %1409 = vdwg.mxu0
        %v1410 = vmax.f32 %v1363, 0.0
        %v1411 = vmax.f32 %v1365, 0.0
        %v1412 = vmax.f32 %v1404, 0.0
        %v1413 = vmax.f32 %v1406, 0.0
        %v1414 = vpack.c.bf16 %v1410, %v1410
        %v1415 = vpack.c.bf16 %v1411, %v1411
        %v1416 = vpack.c.bf16 %v1412, %v1412
        %v1417 = vpack.c.bf16 %v1413, %v1413
        %v1418 = vld [vmem:[%s13] sm:$0xf]
        %v1419 = vld [vmem:[%s13 + $0x4] sm:$0xf]
        %v1420 = vld [vmem:[%s13 + $0x8] sm:$0xf]
        %v1421 = vld [vmem:[%s13 + $0xc] sm:$0xf]
        %v1422 = vld [vmem:[%s13 + $0x10] sm:$0xf]
        %v1423 = vld [vmem:[%s13 + $0x14] sm:$0xf]
        %v1424 = vld [vmem:[%s13 + $0x18] sm:$0xf]
        %v1425 = vld [vmem:[%s13 + $0x1c] sm:$0xf]
        %v1426 = vld [vmem:[%s13 + $0x20] sm:$0xf]
        %v1427 = vld [vmem:[%s13 + $0x24] sm:$0xf]
        %v1428 = vld [vmem:[%s13 + $0x28] sm:$0xf]
        %v1429 = vld [vmem:[%s13 + $0x2c] sm:$0xf]
        %v1430 = vld [vmem:[%s13 + $0x30] sm:$0xf]
        %v1431 = vld [vmem:[%s13 + $0x34] sm:$0xf]
        %v1432 = vld [vmem:[%s13 + $0x38] sm:$0xf]
        %v1433 = vld [vmem:[%s13 + $0x3c] sm:$0xf]
        %v1434 = vld [vmem:[%s13 + $0x40] sm:$0xf]
        %v1435 = vld [vmem:[%s13 + $0x44] sm:$0xf]
        %v1436 = vld [vmem:[%s13 + $0x48] sm:$0xf]
        %v1437 = vld [vmem:[%s13 + $0x4c] sm:$0xf]
        %v1438 = vld [vmem:[%s13 + $0x50] sm:$0xf]
        %v1439 = vld [vmem:[%s13 + $0x54] sm:$0xf]
        %v1440 = vld [vmem:[%s13 + $0x58] sm:$0xf]
        %v1441 = vld [vmem:[%s13 + $0x5c] sm:$0xf]
        %v1442 = vld [vmem:[%s13 + $0x60] sm:$0xf]
        %v1443 = vld [vmem:[%s13 + $0x64] sm:$0xf]
        %v1444 = vld [vmem:[%s13 + $0x68] sm:$0xf]
        %v1445 = vld [vmem:[%s13 + $0x6c] sm:$0xf]
        %v1446 = vld [vmem:[%s13 + $0x70] sm:$0xf]
        %v1447 = vld [vmem:[%s13 + $0x74] sm:$0xf]
        %v1448 = vld [vmem:[%s13 + $0x78] sm:$0xf]
        %v1449 = vld [vmem:[%s13 + $0x7c] sm:$0xf]
        %v1450 = vld [vmem:[%s13 + $0x80] sm:$0xf]
        %v1451 = vld [vmem:[%s13 + $0x84] sm:$0xf]
        %v1452 = vld [vmem:[%s13 + $0x88] sm:$0xf]
        %v1453 = vld [vmem:[%s13 + $0x8c] sm:$0xf]
        %v1454 = vld [vmem:[%s13 + $0x90] sm:$0xf]
        %v1455 = vld [vmem:[%s13 + $0x94] sm:$0xf]
        %v1456 = vld [vmem:[%s13 + $0x98] sm:$0xf]
        %v1457 = vld [vmem:[%s13 + $0x9c] sm:$0xf]
        %v1458 = vld [vmem:[%s13 + $0xa0] sm:$0xf]
        %v1459 = vld [vmem:[%s13 + $0xa4] sm:$0xf]
        %v1460 = vld [vmem:[%s13 + $0xa8] sm:$0xf]
        %v1461 = vld [vmem:[%s13 + $0xac] sm:$0xf]
        %v1462 = vld [vmem:[%s13 + $0xb0] sm:$0xf]
        %v1463 = vld [vmem:[%s13 + $0xb4] sm:$0xf]
        %v1464 = vld [vmem:[%s13 + $0xb8] sm:$0xf]
        %v1465 = vld [vmem:[%s13 + $0xbc] sm:$0xf]
        %v1466 = vld [vmem:[%s13 + $0xc0] sm:$0xf]
        %v1467 = vld [vmem:[%s13 + $0xc4] sm:$0xf]
        %v1468 = vld [vmem:[%s13 + $0xc8] sm:$0xf]
        %v1469 = vld [vmem:[%s13 + $0xcc] sm:$0xf]
        %v1470 = vld [vmem:[%s13 + $0xd0] sm:$0xf]
        %v1471 = vld [vmem:[%s13 + $0xd4] sm:$0xf]
        %v1472 = vld [vmem:[%s13 + $0xd8] sm:$0xf]
        %v1473 = vld [vmem:[%s13 + $0xdc] sm:$0xf]
        %v1474 = vld [vmem:[%s13 + $0xe0] sm:$0xf]
        %v1475 = vld [vmem:[%s13 + $0xe4] sm:$0xf]
        %v1476 = vld [vmem:[%s13 + $0xe8] sm:$0xf]
        %v1477 = vld [vmem:[%s13 + $0xec] sm:$0xf]
        %v1478 = vld [vmem:[%s13 + $0xf0] sm:$0xf]
        %v1479 = vld [vmem:[%s13 + $0xf4] sm:$0xf]
        %v1480 = vld [vmem:[%s13 + $0xf8] sm:$0xf]
        %v1481 = vld [vmem:[%s13 + $0xfc] sm:$0xf]
        %v1482 = vld [vmem:[%s14] sm:$0x1]
        %v1484 = vlaneseq
        %v1485 = vshrl.u32 %v1484, 7
        %v1486 = vsub.s32 0, %v1485
        %v1487 = vrot.slane %v1482, %v1486
        %v1553 = vunpack.c.l.b16 %v1418
        %v1554 = vunpack.c.l.b16 %v1419
        %v1555 = vunpack.c.l.b16 %v1420
        %v1556 = vunpack.c.l.b16 %v1421
        %v1557 = vunpack.c.l.b16 %v1422
        %v1558 = vunpack.c.l.b16 %v1423
        %v1559 = vunpack.c.l.b16 %v1424
        %v1560 = vunpack.c.l.b16 %v1425
        %v1561 = vunpack.c.l.b16 %v1426
        %v1562 = vunpack.c.l.b16 %v1427
        %v1563 = vunpack.c.l.b16 %v1428
        %v1564 = vunpack.c.l.b16 %v1429
        %v1565 = vunpack.c.l.b16 %v1430
        %v1566 = vunpack.c.l.b16 %v1431
        %v1567 = vunpack.c.l.b16 %v1432
        %v1568 = vunpack.c.l.b16 %v1433
        %v1569 = vunpack.c.l.b16 %v1434
        %v1570 = vunpack.c.l.b16 %v1435
        %v1571 = vunpack.c.l.b16 %v1436
        %v1572 = vunpack.c.l.b16 %v1437
        %v1573 = vunpack.c.l.b16 %v1438
        %v1574 = vunpack.c.l.b16 %v1439
        %v1575 = vunpack.c.l.b16 %v1440
        %v1576 = vunpack.c.l.b16 %v1441
        %v1577 = vunpack.c.l.b16 %v1442
        %v1578 = vunpack.c.l.b16 %v1443
        %v1579 = vunpack.c.l.b16 %v1444
        %v1580 = vunpack.c.l.b16 %v1445
        %v1581 = vunpack.c.l.b16 %v1446
        %v1582 = vunpack.c.l.b16 %v1447
        %v1583 = vunpack.c.l.b16 %v1448
        %v1584 = vunpack.c.l.b16 %v1449
        %v1585 = vunpack.c.l.b16 %v1450
        %v1586 = vunpack.c.l.b16 %v1451
        %v1587 = vunpack.c.l.b16 %v1452
        %v1588 = vunpack.c.l.b16 %v1453
        %v1589 = vunpack.c.l.b16 %v1454
        %v1590 = vunpack.c.l.b16 %v1455
        %v1591 = vunpack.c.l.b16 %v1456
        %v1592 = vunpack.c.l.b16 %v1457
        %v1593 = vunpack.c.l.b16 %v1458
        %v1594 = vunpack.c.l.b16 %v1459
        %v1595 = vunpack.c.l.b16 %v1460
        %v1596 = vunpack.c.l.b16 %v1461
        %v1597 = vunpack.c.l.b16 %v1462
        %v1598 = vunpack.c.l.b16 %v1463
        %v1599 = vunpack.c.l.b16 %v1464
        %v1600 = vunpack.c.l.b16 %v1465
        %v1601 = vunpack.c.l.b16 %v1466
        %v1602 = vunpack.c.l.b16 %v1467
        %v1603 = vunpack.c.l.b16 %v1468
        %v1604 = vunpack.c.l.b16 %v1469
        %v1605 = vunpack.c.l.b16 %v1470
        %v1606 = vunpack.c.l.b16 %v1471
        %v1607 = vunpack.c.l.b16 %v1472
        %v1608 = vunpack.c.l.b16 %v1473
        %v1609 = vunpack.c.l.b16 %v1474
        %v1610 = vunpack.c.l.b16 %v1475
        %v1611 = vunpack.c.l.b16 %v1476
        %v1612 = vunpack.c.l.b16 %v1477
        %v1613 = vunpack.c.l.b16 %v1478
        %v1614 = vunpack.c.l.b16 %v1479
        %v1615 = vunpack.c.l.b16 %v1480
        %v1616 = vunpack.c.l.b16 %v1481
        %v1617 = vpack.c.b16 %v1554, %v1553
        %v1618 = vpack.c.b16 %v1556, %v1555
        %v1619 = vpack.c.b16 %v1558, %v1557
        %v1620 = vpack.c.b16 %v1560, %v1559
        %v1621 = vpack.c.b16 %v1562, %v1561
        %v1622 = vpack.c.b16 %v1564, %v1563
        %v1623 = vpack.c.b16 %v1566, %v1565
        %v1624 = vpack.c.b16 %v1568, %v1567
        %v1625 = vpack.c.b16 %v1570, %v1569
        %v1626 = vpack.c.b16 %v1572, %v1571
        %v1627 = vpack.c.b16 %v1574, %v1573
        %v1628 = vpack.c.b16 %v1576, %v1575
        %v1629 = vpack.c.b16 %v1578, %v1577
        %v1630 = vpack.c.b16 %v1580, %v1579
        %v1631 = vpack.c.b16 %v1582, %v1581
        %v1632 = vpack.c.b16 %v1584, %v1583
        %v1633 = vpack.c.b16 %v1586, %v1585
        %v1634 = vpack.c.b16 %v1588, %v1587
        %v1635 = vpack.c.b16 %v1590, %v1589
        %v1636 = vpack.c.b16 %v1592, %v1591
        %v1637 = vpack.c.b16 %v1594, %v1593
        %v1638 = vpack.c.b16 %v1596, %v1595
        %v1639 = vpack.c.b16 %v1598, %v1597
        %v1640 = vpack.c.b16 %v1600, %v1599
        %v1641 = vpack.c.b16 %v1602, %v1601
        %v1642 = vpack.c.b16 %v1604, %v1603
        %v1643 = vpack.c.b16 %v1606, %v1605
        %v1644 = vpack.c.b16 %v1608, %v1607
        %v1645 = vpack.c.b16 %v1610, %v1609
        %v1646 = vpack.c.b16 %v1612, %v1611
        %v1647 = vpack.c.b16 %v1614, %v1613
        %v1648 = vpack.c.b16 %v1616, %v1615
        %1681 = vmatprep.subr.bf16.mxu0 0
        %1682 = vmatpush1.bf16.msra.mxu0 %v1624
        %1683 = vmatprep.subr.bf16.mxu0 0
        %1684 = vmatpush1.bf16.msra.mxu0 %v1623
        %1685 = vmatprep.subr.bf16.mxu0 0
        %1686 = vmatpush1.bf16.msra.mxu0 %v1622
        %1687 = vmatprep.subr.bf16.mxu0 0
        %1688 = vmatpush1.bf16.msra.mxu0 %v1621
        %1689 = vmatprep.subr.bf16.mxu0 0
        %1690 = vmatpush1.bf16.msra.mxu0 %v1620
        %1691 = vmatprep.subr.bf16.mxu0 0
        %1692 = vmatpush1.bf16.msra.mxu0 %v1619
        %1693 = vmatprep.subr.bf16.mxu0 0
        %1694 = vmatpush1.bf16.msra.mxu0 %v1618
        %1695 = vmatprep.subr.bf16.mxu0 0
        %1696 = vmatpush1.bf16.msra.mxu0 %v1617
        %1697 = vmatprep.subr.bf16.mxu0 0
        %1698 = vmatpush2.bf16.msra.mxu0 %v1632
        %1699 = vmatprep.subr.bf16.mxu0 0
        %1700 = vmatpush2.bf16.msra.mxu0 %v1631
        %1701 = vmatprep.subr.bf16.mxu0 0
        %1702 = vmatpush2.bf16.msra.mxu0 %v1630
        %1703 = vmatprep.subr.bf16.mxu0 0
        %1704 = vmatpush2.bf16.msra.mxu0 %v1629
        %1705 = vmatprep.subr.bf16.mxu0 0
        %1706 = vmatpush2.bf16.msra.mxu0 %v1628
        %1707 = vmatprep.subr.bf16.mxu0 0
        %1708 = vmatpush2.bf16.msra.mxu0 %v1627
        %1709 = vmatprep.subr.bf16.mxu0 0
        %1710 = vmatpush2.bf16.msra.mxu0 %v1626
        %1711 = vmatprep.subr.bf16.mxu0 0
        %1712 = vmatpush2.bf16.msra.mxu0 %v1625
        %1713 = vmatprep.mubr.bf16.mxu0 %v1415
        %1714 = vmatmul.mubr.bf16.gmra.mxu0 %v1414
        %v1715 = vpop.f32.mrf.mxu0
        %v1716 = vadd.f32 %v1487, %v1715
        %v1717 = vpop.f32.mrf.mxu0
        %v1718 = vpop.f32.mrf.mxu0
        %v1719 = vpop.f32.mrf.mxu0
        %1720 = vdwg.mxu0
        %1721 = vmatprep.subr.bf16.mxu0 0
        %1722 = vmatpush1.bf16.msra.mxu0 %v1640
        %1723 = vmatprep.subr.bf16.mxu0 0
        %1724 = vmatpush1.bf16.msra.mxu0 %v1639
        %1725 = vmatprep.subr.bf16.mxu0 0
        %1726 = vmatpush1.bf16.msra.mxu0 %v1638
        %1727 = vmatprep.subr.bf16.mxu0 0
        %1728 = vmatpush1.bf16.msra.mxu0 %v1637
        %1729 = vmatprep.subr.bf16.mxu0 0
        %1730 = vmatpush1.bf16.msra.mxu0 %v1636
        %1731 = vmatprep.subr.bf16.mxu0 0
        %1732 = vmatpush1.bf16.msra.mxu0 %v1635
        %1733 = vmatprep.subr.bf16.mxu0 0
        %1734 = vmatpush1.bf16.msra.mxu0 %v1634
        %1735 = vmatprep.subr.bf16.mxu0 0
        %1736 = vmatpush1.bf16.msra.mxu0 %v1633
        %1737 = vmatprep.subr.bf16.mxu0 0
        %1738 = vmatpush2.bf16.msra.mxu0 %v1648
        %1739 = vmatprep.subr.bf16.mxu0 0
        %1740 = vmatpush2.bf16.msra.mxu0 %v1647
        %1741 = vmatprep.subr.bf16.mxu0 0
        %1742 = vmatpush2.bf16.msra.mxu0 %v1646
        %1743 = vmatprep.subr.bf16.mxu0 0
        %1744 = vmatpush2.bf16.msra.mxu0 %v1645
        %1745 = vmatprep.subr.bf16.mxu0 0
        %1746 = vmatpush2.bf16.msra.mxu0 %v1644
        %1747 = vmatprep.subr.bf16.mxu0 0
        %1748 = vmatpush2.bf16.msra.mxu0 %v1643
        %1749 = vmatprep.subr.bf16.mxu0 0
        %1750 = vmatpush2.bf16.msra.mxu0 %v1642
        %1751 = vmatprep.subr.bf16.mxu0 0
        %1752 = vmatpush2.bf16.msra.mxu0 %v1641
        %1753 = vmatprep.mubr.bf16.mxu0 %v1417
        %1754 = vmatmul.mubr.bf16.gmra.mxu0 %v1416
        %v1755 = vpop.f32.mrf.mxu0
        %v1756 = vadd.f32 %v1716, %v1755
        %v1757 = vpop.f32.mrf.mxu0
        %v1758 = vpop.f32.mrf.mxu0
        %v1759 = vpop.f32.mrf.mxu0
        %1760 = vdwg.mxu0
        %v1761 = vadd.f32 %v1112, %v1756
        %1762 = vadd.xlane.f32.xlu0 %v1761
        %v1763 = vpop.xlane.xlu0 %1762
        %v1764 = vmul.f32 %v1763, %v1094
        %v1765 = vsub.f32 %v1761, %v1764
        %v1766 = vmul.f32 %v1765, %v1765
        %1767 = vadd.xlane.f32.xlu0 %v1766
        %v1768 = vpop.xlane.xlu0 %1767
        %v1769 = vmul.f32 %v1768, %v1094
        %v1770 = vadd.f32 %v1769, 1e-05
        %v1771 = vrsqrt.pop %v1770
        %v1772 = vmul.f32 %v1765, %v1771
        %v1773 = vld [vmem:[%s15] sm:$0x1]
        %v1775 = vlaneseq
        %v1776 = vshrl.u32 %v1775, 7
        %v1777 = vsub.s32 0, %v1776
        %v1778 = vrot.slane %v1773, %v1777
        %v1780 = vmul.f32 %v1772, %v1778
        %v1781 = vld [vmem:[%s16] sm:$0x1]
        %v1783 = vlaneseq
        %v1784 = vshrl.u32 %v1783, 7
        %v1785 = vsub.s32 0, %v1784
        %v1786 = vrot.slane %v1781, %v1785
        %v1788 = vadd.f32 %v1780, %v1786
        %1789 = vst [vmem:[%s607] sm:$0xff] %v1788
        %s1790 = sand.u32 %s413, 1
        %s1791 = scalar_lea.sflag [#allocation5], %s1790
        %s1792 = sand.u32 %s413, 1
        %s1793 = smul.addr %s1792, 8
        %s1794 = scalar_lea.vmem [#allocation9], %s1793
        // Predicated region
        $region101: #{encoder_layer_forward.3} parent=87 // pred_check
          %p1795 = pneg %p423
        $region102: #{encoder_layer_forward.3} parent=87 // pred_check_branch
          %1797 = sbr.rel (%p1795) target = $region104
        $region103: #{encoder_layer_forward.3} parent=87 // pred_region
          %s1799 = ssub.s32 128, 128
          %1800 = vsyncadd %s1791, %s1799
          %s1801 = smul.addr %s33, 128
          %s1802 = scalar_lea.hbm %s17, %s1801
          %s1804 = sshll.u32 %s1794, 4
          %s1805 = int_to_ptr.vmem [resolvable:$true] %s1804
          %1807 = dma.vmem_to_hbm [thread:$0]  %s1805, 128, %s1802, %s1791
        $region104: #{encoder_layer_forward.3} parent=87 // pred_fallthru
          _
      $region88: #{encoder_layer_forward.3} parent=5 // pred_fallthru
        _
      %p1808 = scmp.le.s32.totalorder 2, %s28
      // Predicated region
      $region105: #{encoder_layer_forward.3} parent=5 // pred_check
        %p1809 = pneg %p1808
      $region106: #{encoder_layer_forward.3} parent=5 // pred_check_branch
        %1811 = sbr.rel (%p1809) target = $region108
      $region107: #{encoder_layer_forward.3} parent=5 // pred_region
        %s1812 = ssub.s32 %s28, 2
        // Predicated region
        $region109: #{encoder_layer_forward.3} parent=107 // pred_check
          %p1813 = pneg %p429
        $region110: #{encoder_layer_forward.3} parent=107 // pred_check_branch
          %1815 = sbr.rel (%p1813) target = $region112
        $region111: #{encoder_layer_forward.3} parent=107 // pred_region
          %s1816 = sand.u32 %s414, 1
          %s1817 = scalar_lea.sflag [#allocation5], %s1816
          %s1818 = sand.u32 %s414, 1
          %s1819 = smul.addr %s1818, 8
          %s1820 = scalar_lea.vmem [#allocation9], %s1819
          %1821 = dma.done %s1817, 128
        $region112: #{encoder_layer_forward.3} parent=107 // pred_fallthru
          _
      $region108: #{encoder_layer_forward.3} parent=5 // pred_fallthru
        _
    $region6: #{encoder_layer_forward.3} parent=1 // loop_footer
      %s32 = sadd.s32 1, %s28
    $region7: #{encoder_layer_forward.3} parent=1 // loop_footer_branch
      %27 = sbr.rel target = $region3
    $region8: #{encoder_layer_forward.3} parent=1 // loop_exit
      _
    %1822 = vsyncpa [#allocation4], 1
    %s1823 = scalar_lea.sflag [#allocation4], 1
    %1824 = vsyncpa %s1823, 1
    %1825 = vsyncpa [#allocation7], 1
    %1826 = vsyncpa [#allocation5], 1
    %s1827 = scalar_lea.sflag [#allocation5], 1
    %1828 = vsyncpa %s1827, 1

</llo_original>
